<compile_context>
chip_gen: v6e
topology: v6e:2x2x1
jax: 0.10.0
libtpu: 0.0.40
codegen_flags: <defaults>
</compile_context>

<pallas_src>
import functools

import jax
import jax.numpy as jnp
from jax import lax
from jax.experimental import pallas as pl
from jax.experimental.pallas import tpu as pltpu

_LANE = 128       # TPU lane width
_MID_LPAD = 8     # left padding columns of the mid scratch (sublane aligned)


def _double_conv_kernel(x_ref, w1_ref, t1_ref, w2_ref, t2_ref, o_ref, mid_ref,
                        *, th, stem_im2col):
    """One grid step processes one image.

    stem_im2col=True:
      x_ref : (H, W, K1p)  bf16, all 9 conv1 taps pre-folded into channels
      w1_ref: (K1p, Cmid_p) bf16, conv1 weights (BN1 scale folded), im2col order
    stem_im2col=False:
      x_ref : (H+2, W+2, Cin_p) bf16 zero-padded input
      w1_ref: (3, 3*Cin_p, Cmid_p) bf16, kx folded into K
    t1_ref  : (1, Cmid_p)  f32 conv1-bias + BN1 shift
    w2_ref  : (3, 3*Cmid_p, Cout_p) bf16, conv2 weights (BN2 scale folded), kx folded
    t2_ref  : (1, Cout_p)  f32
    o_ref   : (H, W, Cout_p) bf16 output (lane-dense, channel-padded)
    mid_ref : (H+2, _MID_LPAD+W+8, Cmid_p) bf16 scratch; interior at rows
              [1,H], cols [_MID_LPAD, _MID_LPAD+W).  1-px halo re-zeroed per step.
    """
    H, W, Cout_p = o_ref.shape
    Hp = H + 2
    Wm = mid_ref.shape[1]
    Cmid_p = mid_ref.shape[-1]
    n_chunks = H // th
    unroll = n_chunks <= 8   # don't blow up live ranges / compile time for big H

    # ---- zero only the 1-pixel halo of the intermediate (tiny stores) ----
    zrow = jnp.zeros((1, Wm, Cmid_p), mid_ref.dtype)
    zcol = jnp.zeros((Hp, 1, Cmid_p), mid_ref.dtype)
    mid_ref[pl.ds(0, 1), :, :] = zrow
    mid_ref[pl.ds(H + 1, 1), :, :] = zrow
    mid_ref[:, pl.ds(_MID_LPAD - 1, 1), :] = zcol
    mid_ref[:, pl.ds(_MID_LPAD + W, 1), :] = zcol

    # ---- conv1 (3x3, pad=1) : taps folded into the contraction dim ----
    def conv1_chunk(r, carry):
        y0 = pl.multiple_of(r * th, th)
        if stem_im2col:
            # all 9 taps already folded into channels by the wrapper: one dot
            K1p = x_ref.shape[-1]
            patch = x_ref[pl.ds(y0, th), :, :].reshape(th * W, K1p)
            acc = jnp.dot(patch, w1_ref[...],
                          preferred_element_type=jnp.float32)
        else:
            Cin_p = x_ref.shape[-1]
            acc = None
            for ky in range(3):
                # fold the 3 kx taps into K = 3*Cin_p (lane-concat of exact
                # 128-multiples => vreg placement, no XLU)
                op = jnp.concatenate(
                    [x_ref[pl.ds(y0 + ky, th), pl.ds(kx, W), :]
                         .reshape(th * W, Cin_p) for kx in range(3)],
                    axis=-1)
                d = jnp.dot(op, w1_ref[ky],
                            preferred_element_type=jnp.float32)
                acc = d if acc is None else acc + d
        h = jnp.maximum(acc + t1_ref[...], 0.0)           # shift + ReLU in f32
        mid_ref[pl.ds(y0 + 1, th), pl.ds(_MID_LPAD, W), :] = (
            h.reshape(th, W, Cmid_p).astype(mid_ref.dtype))
        return carry

    lax.fori_loop(0, n_chunks, conv1_chunk, 0, unroll=unroll)

    # ---- conv2 (3x3, pad=1) : 3 dots of K = 3*Cmid_p per chunk ----
    def conv2_chunk(r, carry):
        y0 = pl.multiple_of(r * th, th)
        acc = None
        for ky in range(3):
            op = jnp.concatenate(
                [mid_ref[pl.ds(y0 + ky, th), pl.ds(_MID_LPAD - 1 + kx, W), :]
                     .reshape(th * W, Cmid_p) for kx in range(3)],
                axis=-1)
            d = jnp.dot(op, w2_ref[ky], preferred_element_type=jnp.float32)
            acc = d if acc is None else acc + d
        y = jnp.maximum(acc + t2_ref[...], 0.0)
        o_ref[pl.ds(y0, th), :, :] = (
            y.reshape(th, W, Cout_p).astype(o_ref.dtype))
        return carry

    lax.fori_loop(0, n_chunks, conv2_chunk, 0, unroll=unroll)


def _round_up(v, m):
    return (v + m - 1) // m * m


def _vmem_capacity_bytes():
    """Generation-aware VMEM capacity; conservative fallback if query fails."""
    try:
        info = pltpu.get_tpu_info()
        cap = getattr(info, "vmem_capacity_bytes", None)
        if cap:
            return int(cap)
    except Exception:
        pass
    return 64 * 1024 * 1024   # safe everywhere (v7x physical size)


def double_conv_pallas(x_nchw, params, *, m_cap=256):
    """x_nchw: (N, Cin, H, W) float32.  Returns (N, Cout, H, W) float32."""
    w1, b1, g1, be1, rm1, rv1, w2, b2, g2, be2, rm2, rv2 = params
    eps = 1e-5

    # Inference BatchNorm folded to per-channel scale/shift:
    #   y = conv(x, w*s) + t,  s = gamma/sqrt(var+eps), t = (b - mean)*s + beta
    s1 = g1 / jnp.sqrt(rv1 + eps)
    t1 = (b1 - rm1) * s1 + be1
    s2 = g2 / jnp.sqrt(rv2 + eps)
    t2 = (b2 - rm2) * s2 + be2

    N, Cin, H, W = x_nchw.shape
    Cmid = w1.shape[0]
    Cout = w2.shape[0]
    Cmid_p = _round_up(Cmid, _LANE)
    Cout_p = _round_up(Cout, _LANE)
    stem_im2col = (9 * Cin) <= _LANE

    # row chunk: largest divisor of H such that M = th*W <= m_cap (~256),
    # keeping the f32 accumulator <= 32 vregs.
    max_rows = max(1, m_cap // max(W, 1))
    th = max(d for d in range(1, min(max_rows, H) + 1) if H % d == 0)

    # ---- weights: fold BN scale, OIHW -> HWIO, fold taps into K, pad, bf16 ----
    w1s = w1 * s1[:, None, None, None]
    w2s = w2 * s2[:, None, None, None]
    w1h = jnp.transpose(w1s, (2, 3, 1, 0))               # (3,3,Cin,Cmid)
    w2h = jnp.transpose(w2s, (2, 3, 1, 0))               # (3,3,Cmid,Cout)

    x = jnp.transpose(x_nchw, (0, 2, 3, 1))              # NHWC

    if stem_im2col:
        # small-Cin stem: im2col all 9 taps into the channel axis host-side
        K1 = 9 * Cin
        K1p = _round_up(K1, _LANE)
        xp = jnp.pad(x, ((0, 0), (1, 1), (1, 1), (0, 0)))
        taps = [xp[:, ky:ky + H, kx:kx + W, :]
                for ky in range(3) for kx in range(3)]
        x_in = jnp.concatenate(taps, axis=-1)             # (N,H,W,9*Cin)
        x_in = jnp.pad(x_in, ((0, 0), (0, 0), (0, 0),
                              (0, K1p - K1))).astype(jnp.bfloat16)
        w1k = jnp.pad(w1h, ((0, 0), (0, 0), (0, 0), (0, Cmid_p - Cmid)))
        w1k = w1k.reshape(9 * Cin, Cmid_p)                # (ky,kx,c) row-major
        w1k = jnp.pad(w1k, ((0, K1p - K1), (0, 0))).astype(jnp.bfloat16)
        x_spec = pl.BlockSpec((None, H, W, K1p), lambda n: (n, 0, 0, 0))
        w1_spec = pl.BlockSpec((K1p, Cmid_p), lambda n: (0, 0))
        in_block_elems = H * W * K1p
        conv1_flops = 2 * N * H * W * K1p * Cmid_p
    else:
        Cin_p = _round_up(Cin, _LANE)
        x_in = jnp.pad(x, ((0, 0), (1, 1), (1, 1),
                           (0, Cin_p - Cin))).astype(jnp.bfloat16)
        w1k = jnp.pad(w1h, ((0, 0), (0, 0), (0, Cin_p - Cin),
                            (0, Cmid_p - Cmid)))
        w1k = w1k.reshape(3, 3 * Cin_p, Cmid_p).astype(jnp.bfloat16)  # kx in K
        x_spec = pl.BlockSpec((None, H + 2, W + 2, Cin_p),
                              lambda n: (n, 0, 0, 0))
        w1_spec = pl.BlockSpec((3, 3 * Cin_p, Cmid_p), lambda n: (0, 0, 0))
        in_block_elems = (H + 2) * (W + 2) * Cin_p
        conv1_flops = 2 * N * H * W * 9 * Cin_p * Cmid_p

    w2k = jnp.pad(w2h, ((0, 0), (0, 0), (0, Cmid_p - Cmid),
                        (0, Cout_p - Cout)))
    w2k = w2k.reshape(3, 3 * Cmid_p, Cout_p).astype(jnp.bfloat16)     # kx in K
    t1p = jnp.pad(t1, (0, Cmid_p - Cmid)).reshape(1, Cmid_p).astype(jnp.float32)
    t2p = jnp.pad(t2, (0, Cout_p - Cout)).reshape(1, Cout_p).astype(jnp.float32)

    Wm = _MID_LPAD + W + 8                                # mid scratch width

    # VMEM budget (double-buffer factors included exactly once)
    vmem_need = (
        2 * in_block_elems * 2                            # input block (bf16)
        + 2 * H * W * Cout_p * 2                          # output block (bf16)
        + 2 * (w1k.size + w2k.size) * 2                   # weights (bf16)
        + 2 * (Cmid_p + Cout_p) * 4                       # shifts (f32)
        + (H + 2) * Wm * Cmid_p * 2)                      # mid scratch (bf16)
    cap = _vmem_capacity_bytes()
    vmem_limit = int(min(0.8 * cap,
                         max(32 * 1024 * 1024, 1.25 * vmem_need)))

    cost = pl.CostEstimate(
        flops=int(conv1_flops + 2 * N * H * W * 9 * Cmid_p * Cout_p),
        transcendentals=0,
        bytes_accessed=int(x_in.size * 2 + w1k.size * 2 + w2k.size * 2
                           + t1p.size * 4 + t2p.size * 4
                           + N * H * W * Cout_p * 2))

    kernel = functools.partial(_double_conv_kernel, th=th,
                               stem_im2col=stem_im2col)

    out_nhwc = pl.pallas_call(
        kernel,
        out_shape=jax.ShapeDtypeStruct((N, H, W, Cout_p), jnp.bfloat16),
        grid_spec=pltpu.PrefetchScalarGridSpec(
            num_scalar_prefetch=0,
            grid=(N,),
            in_specs=[
                x_spec,
                w1_spec,
                pl.BlockSpec((1, Cmid_p), lambda n: (0, 0)),
                pl.BlockSpec((3, 3 * Cmid_p, Cout_p), lambda n: (0, 0, 0)),
                pl.BlockSpec((1, Cout_p), lambda n: (0, 0)),
            ],
            out_specs=pl.BlockSpec((None, H, W, Cout_p),
                                   lambda n: (n, 0, 0, 0)),
            scratch_shapes=[pltpu.VMEM((H + 2, Wm, Cmid_p), jnp.bfloat16)],
        ),
        compiler_params=pltpu.CompilerParams(
            dimension_semantics=("parallel",),
            vmem_limit_bytes=vmem_limit),
        cost_estimate=cost,
    )(x_in, w1k, t1p, w2k, t2p)

    # strip channel padding, NHWC -> NCHW, cast back to f32 to match PyTorch.
    # (In a full UNet, downstream layers would consume the bf16 NHWC block.)
    return jnp.transpose(out_nhwc[..., :Cout], (0, 3, 1, 2)).astype(jnp.float32)


def double_conv_reference(x_nchw, params):
    """Plain-JAX f32 reference (PyTorch semantics) for correctness checking."""
    w1, b1, g1, be1, rm1, rv1, w2, b2, g2, be2, rm2, rv2 = params
    eps = 1e-5

    def conv_bn_relu(x, w, b, g, be, rm, rv):
        y = lax.conv_general_dilated(
            x, w, window_strides=(1, 1), padding=((1, 1), (1, 1)),
            dimension_numbers=("NCHW", "OIHW", "NCHW"))
        y = y + b[None, :, None, None]
        y = (y - rm[None, :, None, None]) / jnp.sqrt(rv + eps)[None, :, None, None]
        y = y * g[None, :, None, None] + be[None, :, None, None]
        return jnp.maximum(y, 0.0)

    h = conv_bn_relu(x_nchw, w1, b1, g1, be1, rm1, rv1)
    return conv_bn_relu(h, w2, b2, g2, be2, rm2, rv2)


def make_params(key, in_channel, out_channel, mid_channel=None):
    if not mid_channel:
        mid_channel = out_channel
    ks = jax.random.split(key, 12)
    w1 = jax.random.normal(ks[0], (mid_channel, in_channel, 3, 3), jnp.float32) * 0.2
    b1 = jax.random.normal(ks[1], (mid_channel,), jnp.float32) * 0.1
    g1 = 1.0 + 0.1 * jax.random.normal(ks[2], (mid_channel,), jnp.float32)
    be1 = 0.1 * jax.random.normal(ks[3], (mid_channel,), jnp.float32)
    rm1 = 0.1 * jax.random.normal(ks[4], (mid_channel,), jnp.float32)
    rv1 = 1.0 + 0.1 * jax.random.uniform(ks[5], (mid_channel,), jnp.float32)
    w2 = jax.random.normal(ks[6], (out_channel, mid_channel, 3, 3), jnp.float32) * 0.2
    b2 = jax.random.normal(ks[7], (out_channel,), jnp.float32) * 0.1
    g2 = 1.0 + 0.1 * jax.random.normal(ks[8], (out_channel,), jnp.float32)
    be2 = 0.1 * jax.random.normal(ks[9], (out_channel,), jnp.float32)
    rm2 = 0.1 * jax.random.normal(ks[10], (out_channel,), jnp.float32)
    rv2 = 1.0 + 0.1 * jax.random.uniform(ks[11], (out_channel,), jnp.float32)
    return (w1, b1, g1, be1, rm1, rv1, w2, b2, g2, be2, rm2, rv2)


if __name__ == "__main__":
    key = jax.random.PRNGKey(0)
    k_x, k_p = jax.random.split(key)

    N, Cin, H, W = 2, 4, 16, 16
    Cout = 8
    x = jax.random.normal(k_x, (N, Cin, H, W), jnp.float32)
    params = make_params(k_p, Cin, Cout)

    out = jax.jit(double_conv_pallas)(x, params)
    out = jax.block_until_ready(out)

    ref = double_conv_reference(x, params)
    assert out.shape == (N, Cout, H, W)
    # bf16 MXU inputs + bf16 output => bf16-appropriate tolerance.
    err = float(jnp.max(jnp.abs(out - ref)))
    scale = float(jnp.max(jnp.abs(ref))) + 1.0
    assert err <= 2.5e-2 * scale, f"max abs err {err} (scale {scale})"

    print("KERNEL_OK")
</pallas_src>

<mosaic_0001>
module attributes {stable_mosaic.version = 11 : i64} {
  func.func @_double_conv_kernel(%arg0: i32, %arg1: memref<1x16x16x128xbf16, #tpu.memory_space<vmem>>, %arg2: memref<128x128xbf16, #tpu.memory_space<vmem>>, %arg3: memref<1x128xf32, #tpu.memory_space<vmem>>, %arg4: memref<3x384x128xbf16, #tpu.memory_space<vmem>>, %arg5: memref<1x128xf32, #tpu.memory_space<vmem>>, %arg6: memref<1x16x16x128xbf16, #tpu.memory_space<vmem>>, %arg7: memref<18x32x128xbf16, #tpu.memory_space<vmem>>) attributes {dimension_semantics = [#tpu.dimension_semantics<parallel>], iteration_bounds = array<i64: 2>, scalar_prefetch = 0 : i64, scratch_operands = 1 : i64, tpu.core_type = #tpu.core_type<tc>, window_params = [{transform_indices = @transform_0, window_bounds = array<i64: 1, 16, 16, 128>}, {pipeline_mode = #tpu.pipeline_mode<synchronous>, transform_indices = @transform_1, window_bounds = array<i64: 128, 128>}, {pipeline_mode = #tpu.pipeline_mode<synchronous>, transform_indices = @transform_2, window_bounds = array<i64: 1, 128>}, {pipeline_mode = #tpu.pipeline_mode<synchronous>, transform_indices = @transform_3, window_bounds = array<i64: 3, 384, 128>}, {pipeline_mode = #tpu.pipeline_mode<synchronous>, transform_indices = @transform_4, window_bounds = array<i64: 1, 128>}, {transform_indices = @transform_5, window_bounds = array<i64: 1, 16, 16, 128>}]} {
    %cst = arith.constant 0.000000e+00 : bf16
    %0 = vector.broadcast %cst : bf16 to vector<1x32x128xbf16>
    %cst_0 = arith.constant 0.000000e+00 : bf16
    %1 = vector.broadcast %cst_0 : bf16 to vector<18x1x128xbf16>
    %c0 = arith.constant 0 : index
    %c0_1 = arith.constant 0 : index
    %c0_2 = arith.constant 0 : index
    %2 = vector.load %arg7[%c0, %c0_1, %c0_2] : memref<18x32x128xbf16, #tpu.memory_space<vmem>>, vector<1x32x128xbf16>
    tpu.vector_store %arg7[%c0, %c0_1, %c0_2], %0 {strides = array<i32>} : memref<18x32x128xbf16, #tpu.memory_space<vmem>>, vector<1x32x128xbf16>,
    %c17 = arith.constant 17 : index
    %c0_3 = arith.constant 0 : index
    %c0_4 = arith.constant 0 : index
    %3 = vector.load %arg7[%c17, %c0_3, %c0_4] : memref<18x32x128xbf16, #tpu.memory_space<vmem>>, vector<1x32x128xbf16>
    tpu.vector_store %arg7[%c17, %c0_3, %c0_4], %0 {strides = array<i32>} : memref<18x32x128xbf16, #tpu.memory_space<vmem>>, vector<1x32x128xbf16>,
    %c0_5 = arith.constant 0 : index
    %c7 = arith.constant 7 : index
    %c0_6 = arith.constant 0 : index
    %4 = vector.load %arg7[%c0_5, %c7, %c0_6] : memref<18x32x128xbf16, #tpu.memory_space<vmem>>, vector<18x1x128xbf16>
    tpu.vector_store %arg7[%c0_5, %c7, %c0_6], %1 {strides = array<i32>} : memref<18x32x128xbf16, #tpu.memory_space<vmem>>, vector<18x1x128xbf16>,
    %c0_7 = arith.constant 0 : index
    %c24 = arith.constant 24 : index
    %c0_8 = arith.constant 0 : index
    %5 = vector.load %arg7[%c0_7, %c24, %c0_8] : memref<18x32x128xbf16, #tpu.memory_space<vmem>>, vector<18x1x128xbf16>
    tpu.vector_store %arg7[%c0_7, %c24, %c0_8], %1 {strides = array<i32>} : memref<18x32x128xbf16, #tpu.memory_space<vmem>>, vector<18x1x128xbf16>,
    %c0_i32 = arith.constant 0 : i32
    %c16_i32 = arith.constant 16 : i32
    %6 = arith.muli %c0_i32, %c16_i32 : i32
    %7 = tpu.assume_multiple %6, 16 : i32
    %c0_9 = arith.constant 0 : index
    %8 = arith.index_cast %7 : i32 to index
    %c0_10 = arith.constant 0 : index
    %c0_11 = arith.constant 0 : index
    %9 = vector.load %arg1[%c0_9, %8, %c0_10, %c0_11] : memref<1x16x16x128xbf16, #tpu.memory_space<vmem>>, vector<1x16x16x128xbf16>
    %10 = vector.shape_cast %9 : vector<1x16x16x128xbf16> to vector<16x16x128xbf16>
    %11 = vector.shape_cast %10 : vector<16x16x128xbf16> to vector<256x128xbf16>
    %c0_12 = arith.constant 0 : index
    %c0_13 = arith.constant 0 : index
    %12 = vector.load %arg2[%c0_12, %c0_13] : memref<128x128xbf16, #tpu.memory_space<vmem>>, vector<128x128xbf16>
    %cst_14 = arith.constant dense<0.000000e+00> : vector<256x128xf32>
    %13 = tpu.matmul %11, %12, %cst_14 {dimension_numbers = #tpu.dot_dimension_numbers<[1], [0], [0], [1], [0, 0, 1, 1], [], []>} : vector<256x128xbf16>, vector<128x128xbf16>, vector<256x128xf32> -> vector<256x128xf32>
    %c0_15 = arith.constant 0 : index
    %c0_16 = arith.constant 0 : index
    %14 = vector.load %arg3[%c0_15, %c0_16] : memref<1x128xf32, #tpu.memory_space<vmem>>, vector<1x128xf32>
    %15 = vector.broadcast %14 : vector<1x128xf32> to vector<256x128xf32>
    %16 = arith.addf %13, %15 : vector<256x128xf32>
    %cst_17 = arith.constant 0.000000e+00 : f32
    %17 = vector.broadcast %cst_17 : f32 to vector<256x128xf32>
    %18 = arith.maximumf %16, %17 : vector<256x128xf32>
    %19 = vector.shape_cast %18 : vector<256x128xf32> to vector<16x16x128xf32>
    %20 = arith.truncf %19 : vector<16x16x128xf32> to vector<16x16x128xbf16>
    %c1_i32 = arith.constant 1 : i32
    %21 = arith.addi %7, %c1_i32 : i32
    %22 = arith.index_cast %21 : i32 to index
    %c8 = arith.constant 8 : index
    %c0_18 = arith.constant 0 : index
    %23 = vector.load %arg7[%22, %c8, %c0_18] : memref<18x32x128xbf16, #tpu.memory_space<vmem>>, vector<16x16x128xbf16>
    tpu.vector_store %arg7[%22, %c8, %c0_18], %20 {strides = array<i32>} : memref<18x32x128xbf16, #tpu.memory_space<vmem>>, vector<16x16x128xbf16>,
    %c1_i32_19 = arith.constant 1 : i32
    %c0_i32_20 = arith.constant 0 : i32
    %c16_i32_21 = arith.constant 16 : i32
    %24 = arith.muli %c0_i32_20, %c16_i32_21 : i32
    %25 = tpu.assume_multiple %24, 16 : i32
    %c0_i32_22 = arith.constant 0 : i32
    %26 = arith.addi %25, %c0_i32_22 : i32
    %27 = arith.index_cast %26 : i32 to index
    %c7_23 = arith.constant 7 : index
    %c0_24 = arith.constant 0 : index
    %28 = vector.load %arg7[%27, %c7_23, %c0_24] : memref<18x32x128xbf16, #tpu.memory_space<vmem>>, vector<16x16x128xbf16>
    %29 = vector.shape_cast %28 : vector<16x16x128xbf16> to vector<256x128xbf16>
    %c0_i32_25 = arith.constant 0 : i32
    %30 = arith.addi %25, %c0_i32_25 : i32
    %31 = arith.index_cast %30 : i32 to index
    %c8_26 = arith.constant 8 : index
    %c0_27 = arith.constant 0 : index
    %32 = vector.load %arg7[%31, %c8_26, %c0_27] : memref<18x32x128xbf16, #tpu.memory_space<vmem>>, vector<16x16x128xbf16>
    %33 = vector.shape_cast %32 : vector<16x16x128xbf16> to vector<256x128xbf16>
    %c0_i32_28 = arith.constant 0 : i32
    %34 = arith.addi %25, %c0_i32_28 : i32
    %35 = arith.index_cast %34 : i32 to index
    %c9 = arith.constant 9 : index
    %c0_29 = arith.constant 0 : index
    %36 = vector.load %arg7[%35, %c9, %c0_29] : memref<18x32x128xbf16, #tpu.memory_space<vmem>>, vector<16x16x128xbf16>
    %37 = vector.shape_cast %36 : vector<16x16x128xbf16> to vector<256x128xbf16>
    %38 = tpu.concatenate %29, %33, %37 in 1 : vector<256x128xbf16>, vector<256x128xbf16>, vector<256x128xbf16> -> vector<256x384xbf16>
    %c0_30 = arith.constant 0 : index
    %c0_31 = arith.constant 0 : index
    %c0_32 = arith.constant 0 : index
    %39 = vector.load %arg4[%c0_30, %c0_31, %c0_32] : memref<3x384x128xbf16, #tpu.memory_space<vmem>>, vector<1x384x128xbf16>
    %40 = vector.shape_cast %39 : vector<1x384x128xbf16> to vector<384x128xbf16>
    %cst_33 = arith.constant dense<0.000000e+00> : vector<256x128xf32>
    %41 = tpu.matmul %38, %40, %cst_33 {dimension_numbers = #tpu.dot_dimension_numbers<[1], [0], [0], [1], [0, 0, 1, 1], [], []>} : vector<256x384xbf16>, vector<384x128xbf16>, vector<256x128xf32> -> vector<256x128xf32>
    %c1_i32_34 = arith.constant 1 : i32
    %42 = arith.addi %25, %c1_i32_34 : i32
    %43 = arith.index_cast %42 : i32 to index
    %c7_35 = arith.constant 7 : index
    %c0_36 = arith.constant 0 : index
    %44 = vector.load %arg7[%43, %c7_35, %c0_36] : memref<18x32x128xbf16, #tpu.memory_space<vmem>>, vector<16x16x128xbf16>
    %45 = vector.shape_cast %44 : vector<16x16x128xbf16> to vector<256x128xbf16>
    %c1_i32_37 = arith.constant 1 : i32
    %46 = arith.addi %25, %c1_i32_37 : i32
    %47 = arith.index_cast %46 : i32 to index
    %c8_38 = arith.constant 8 : index
    %c0_39 = arith.constant 0 : index
    %48 = vector.load %arg7[%47, %c8_38, %c0_39] : memref<18x32x128xbf16, #tpu.memory_space<vmem>>, vector<16x16x128xbf16>
    %49 = vector.shape_cast %48 : vector<16x16x128xbf16> to vector<256x128xbf16>
    %c1_i32_40 = arith.constant 1 : i32
    %50 = arith.addi %25, %c1_i32_40 : i32
    %51 = arith.index_cast %50 : i32 to index
    %c9_41 = arith.constant 9 : index
    %c0_42 = arith.constant 0 : index
    %52 = vector.load %arg7[%51, %c9_41, %c0_42] : memref<18x32x128xbf16, #tpu.memory_space<vmem>>, vector<16x16x128xbf16>
    %53 = vector.shape_cast %52 : vector<16x16x128xbf16> to vector<256x128xbf16>
    %54 = tpu.concatenate %45, %49, %53 in 1 : vector<256x128xbf16>, vector<256x128xbf16>, vector<256x128xbf16> -> vector<256x384xbf16>
    %c1 = arith.constant 1 : index
    %c0_43 = arith.constant 0 : index
    %c0_44 = arith.constant 0 : index
    %55 = vector.load %arg4[%c1, %c0_43, %c0_44] : memref<3x384x128xbf16, #tpu.memory_space<vmem>>, vector<1x384x128xbf16>
    %56 = vector.shape_cast %55 : vector<1x384x128xbf16> to vector<384x128xbf16>
    %cst_45 = arith.constant dense<0.000000e+00> : vector<256x128xf32>
    %57 = tpu.matmul %54, %56, %cst_45 {dimension_numbers = #tpu.dot_dimension_numbers<[1], [0], [0], [1], [0, 0, 1, 1], [], []>} : vector<256x384xbf16>, vector<384x128xbf16>, vector<256x128xf32> -> vector<256x128xf32>
    %58 = arith.addf %41, %57 : vector<256x128xf32>
    %c2_i32 = arith.constant 2 : i32
    %59 = arith.addi %25, %c2_i32 : i32
    %60 = arith.index_cast %59 : i32 to index
    %c7_46 = arith.constant 7 : index
    %c0_47 = arith.constant 0 : index
    %61 = vector.load %arg7[%60, %c7_46, %c0_47] : memref<18x32x128xbf16, #tpu.memory_space<vmem>>, vector<16x16x128xbf16>
    %62 = vector.shape_cast %61 : vector<16x16x128xbf16> to vector<256x128xbf16>
    %c2_i32_48 = arith.constant 2 : i32
    %63 = arith.addi %25, %c2_i32_48 : i32
    %64 = arith.index_cast %63 : i32 to index
    %c8_49 = arith.constant 8 : index
    %c0_50 = arith.constant 0 : index
    %65 = vector.load %arg7[%64, %c8_49, %c0_50] : memref<18x32x128xbf16, #tpu.memory_space<vmem>>, vector<16x16x128xbf16>
    %66 = vector.shape_cast %65 : vector<16x16x128xbf16> to vector<256x128xbf16>
    %c2_i32_51 = arith.constant 2 : i32
    %67 = arith.addi %25, %c2_i32_51 : i32
    %68 = arith.index_cast %67 : i32 to index
    %c9_52 = arith.constant 9 : index
    %c0_53 = arith.constant 0 : index
    %69 = vector.load %arg7[%68, %c9_52, %c0_53] : memref<18x32x128xbf16, #tpu.memory_space<vmem>>, vector<16x16x128xbf16>
    %70 = vector.shape_cast %69 : vector<16x16x128xbf16> to vector<256x128xbf16>
    %71 = tpu.concatenate %62, %66, %70 in 1 : vector<256x128xbf16>, vector<256x128xbf16>, vector<256x128xbf16> -> vector<256x384xbf16>
    %c2 = arith.constant 2 : index
    %c0_54 = arith.constant 0 : index
    %c0_55 = arith.constant 0 : index
    %72 = vector.load %arg4[%c2, %c0_54, %c0_55] : memref<3x384x128xbf16, #tpu.memory_space<vmem>>, vector<1x384x128xbf16>
    %73 = vector.shape_cast %72 : vector<1x384x128xbf16> to vector<384x128xbf16>
    %cst_56 = arith.constant dense<0.000000e+00> : vector<256x128xf32>
    %74 = tpu.matmul %71, %73, %cst_56 {dimension_numbers = #tpu.dot_dimension_numbers<[1], [0], [0], [1], [0, 0, 1, 1], [], []>} : vector<256x384xbf16>, vector<384x128xbf16>, vector<256x128xf32> -> vector<256x128xf32>
    %75 = arith.addf %58, %74 : vector<256x128xf32>
    %c0_57 = arith.constant 0 : index
    %c0_58 = arith.constant 0 : index
    %76 = vector.load %arg5[%c0_57, %c0_58] : memref<1x128xf32, #tpu.memory_space<vmem>>, vector<1x128xf32>
    %77 = vector.broadcast %76 : vector<1x128xf32> to vector<256x128xf32>
    %78 = arith.addf %75, %77 : vector<256x128xf32>
    %cst_59 = arith.constant 0.000000e+00 : f32
    %79 = vector.broadcast %cst_59 : f32 to vector<256x128xf32>
    %80 = arith.maximumf %78, %79 : vector<256x128xf32>
    %81 = vector.shape_cast %80 : vector<256x128xf32> to vector<16x16x128xf32>
    %82 = arith.truncf %81 : vector<16x16x128xf32> to vector<16x16x128xbf16>
    %c0_60 = arith.constant 0 : index
    %83 = arith.index_cast %25 : i32 to index
    %c0_61 = arith.constant 0 : index
    %c0_62 = arith.constant 0 : index
    %84 = vector.load %arg6[%c0_60, %83, %c0_61, %c0_62] : memref<1x16x16x128xbf16, #tpu.memory_space<vmem>>, vector<1x16x16x128xbf16>
    %85 = vector.shape_cast %84 : vector<1x16x16x128xbf16> to vector<16x16x128xbf16>
    %86 = vector.shape_cast %82 : vector<16x16x128xbf16> to vector<1x16x16x128xbf16>
    tpu.vector_store %arg6[%c0_60, %83, %c0_61, %c0_62], %86 {strides = array<i32>} : memref<1x16x16x128xbf16, #tpu.memory_space<vmem>>, vector<1x16x16x128xbf16>,
    %c1_i32_63 = arith.constant 1 : i32
    return
  }
  func.func @transform_0(%arg0: i32) -> (i32, i32, i32, i32) {
    %c0_i32 = arith.constant 0 : i32
    %c0_i32_0 = arith.constant 0 : i32
    %c0_i32_1 = arith.constant 0 : i32
    %c0_i32_2 = arith.constant 0 : i32
    return %arg0, %c0_i32, %c0_i32_0, %c0_i32_1 : i32, i32, i32, i32
  }
  func.func @transform_1(%arg0: i32) -> (i32, i32) {
    %c0_i32 = arith.constant 0 : i32
    %c0_i32_0 = arith.constant 0 : i32
    %c0_i32_1 = arith.constant 0 : i32
    return %c0_i32, %c0_i32_0 : i32, i32
  }
  func.func @transform_2(%arg0: i32) -> (i32, i32) {
    %c0_i32 = arith.constant 0 : i32
    %c0_i32_0 = arith.constant 0 : i32
    %c0_i32_1 = arith.constant 0 : i32
    return %c0_i32, %c0_i32_0 : i32, i32
  }
  func.func @transform_3(%arg0: i32) -> (i32, i32, i32) {
    %c0_i32 = arith.constant 0 : i32
    %c0_i32_0 = arith.constant 0 : i32
    %c0_i32_1 = arith.constant 0 : i32
    %c0_i32_2 = arith.constant 0 : i32
    return %c0_i32, %c0_i32_0, %c0_i32_1 : i32, i32, i32
  }
  func.func @transform_4(%arg0: i32) -> (i32, i32) {
    %c0_i32 = arith.constant 0 : i32
    %c0_i32_0 = arith.constant 0 : i32
    %c0_i32_1 = arith.constant 0 : i32
    return %c0_i32, %c0_i32_0 : i32, i32
  }
  func.func @transform_5(%arg0: i32) -> (i32, i32, i32, i32) {
    %c0_i32 = arith.constant 0 : i32
    %c0_i32_0 = arith.constant 0 : i32
    %c0_i32_1 = arith.constant 0 : i32
    %c0_i32_2 = arith.constant 0 : i32
    return %arg0, %c0_i32, %c0_i32_0, %c0_i32_1 : i32, i32, i32, i32
  }
}

</mosaic_0001>

<llo_original>
// kernel: double_conv_pallas.1
$region0: #{double_conv_pallas.1}
  #allocation0 [shape = 'u32[]', space=smem, size = 0x4, offset = 0x4, fixed_abs, tag = 'smem constant byte address 0x4 - core index']
  #allocation1 [shape = 'u32[144,128]{1,0:T(1,128)}', space=vmem, size = 0x12000, scoped, tag = 'internal scratch']
  #allocation2 [shape = 'bf16[18,32,128]{2,1,0:T(8,128)(2,1)}', space=vmem, size = 0x24000, scoped, tag = 'scratch operand']
  %s0 = inlined_call_operand.vmem [shape: bf16[2,16,16,128], index: 0, kind: input, shape index: {}]
  %s1 = inlined_call_operand.vmem [shape: bf16[128,128], index: 1, kind: input, shape index: {}]
  %s2 = inlined_call_operand.vmem [shape: f32[1,128], index: 2, kind: input, shape index: {}]
  %s3 = inlined_call_operand.vmem [shape: bf16[3,384,128], index: 3, kind: input, shape index: {}]
  %s4 = inlined_call_operand.vmem [shape: f32[1,128], index: 4, kind: input, shape index: {}]
  %s5 = inlined_call_operand.vmem [shape: bf16[2,16,16,128], index: 5, kind: output, shape index: {}]
  %s6 = sld [smem:[#allocation0]]
  $region53: #{double_conv_pallas.1} parent=0
    _
  %s8 = ssub.s32 1, %s6
  %s9 = scalar_select 0, %s8, %s6
  loop: start=0, step=1, limit=4
  $region2: #{double_conv_pallas.1} parent=0 // loop_pre_header
    _
  $region3: #{double_conv_pallas.1} parent=0 // loop_header
    %s11 = sphi 0, %s15
    %p12 = scmp.ge.s32.totalorder %s11, 4
    %s21 = sphi 0, %s23
    %s24 = sphi 0, %s21
    %s25 = sphi 0, %s24
    %s41 = sphi 0, %s25
    %s45 = sphi 0, %s45
    %s47 = sphi 0, %s45
    %s48 = sphi 0, %s47
    %s62 = sphi 0, %s48
    %s66 = sphi 0, %s66
    %s68 = sphi 0, %s66
    %s69 = sphi 0, %s68
    %s83 = sphi 0, %s69
    %s87 = sphi 0, %s87
    %s89 = sphi 0, %s87
    %s90 = sphi 0, %s89
    %s104 = sphi 0, %s90
    %s108 = sphi 0, %s108
    %s110 = sphi 0, %s108
    %s111 = sphi 0, %s110
    %s125 = sphi 0, %s111
    %s131 = sphi 0, %s133
    %s134 = sphi 0, %s131
    %s135 = sphi 0, %s134
    %s151 = sphi 0, %s135
  $region4: #{double_conv_pallas.1} parent=0 // loop_header_branch
    %14 = sbr.rel (%p12) target = $region8
  $region5: #{double_conv_pallas.1} parent=0 // loop_body
    %s16 = ssub.s32 %s11, 1
    %s17 = ssub.s32 %s11, 2
    %s18 = sadd.s32 %s11, 1
    %s19 = ssub.s32 %s11, %s18
    %p20 = scmp.eq.s32.totalorder %s19, 0
    %s22 = sadd.s32 %s21, 1
    %s23 = scalar_select %p20, %s21, %s22
    %p26 = pneg %p20
    %p27 = scmp.eq.s32.totalorder %s11, 1
    %p28 = por %p26, %p27
    %p29 = scmp.ne.s32.totalorder %s21, %s24
    %p30 = scmp.eq.s32.totalorder %s11, 0
    %p31 = por %p29, %p30
    %p32 = scmp.ne.s32.totalorder %s21, %s24
    %p33 = scmp.eq.s32.totalorder %s16, 1
    %p34 = por %p32, %p33
    %p35 = scmp.ne.s32.totalorder %s24, %s25
    %p36 = scmp.eq.s32.totalorder %s16, 0
    %p37 = por %p35, %p36
    %p38 = scmp.ne.s32.totalorder %s24, %s25
    %p39 = scmp.eq.s32.totalorder %s17, 1
    %p40 = por %p38, %p39
    %p42 = scmp.ne.s32.totalorder %s25, %s41
    %p43 = scmp.eq.s32.totalorder %s17, 0
    %p44 = por %p42, %p43
    %s46 = sadd.s32 %s45, 1
    %p49 = scmp.eq.s32.totalorder %s11, 1
    %p50 = scmp.ne.s32.totalorder %s45, %s47
    %p51 = scmp.eq.s32.totalorder %s11, 0
    %p52 = por %p50, %p51
    %p53 = scmp.ne.s32.totalorder %s45, %s47
    %p54 = scmp.eq.s32.totalorder %s16, 1
    %p55 = por %p53, %p54
    %p56 = scmp.ne.s32.totalorder %s47, %s48
    %p57 = scmp.eq.s32.totalorder %s16, 0
    %p58 = por %p56, %p57
    %p59 = scmp.ne.s32.totalorder %s47, %s48
    %p60 = scmp.eq.s32.totalorder %s17, 1
    %p61 = por %p59, %p60
    %p63 = scmp.ne.s32.totalorder %s48, %s62
    %p64 = scmp.eq.s32.totalorder %s17, 0
    %p65 = por %p63, %p64
    %s67 = sadd.s32 %s66, 1
    %p70 = scmp.eq.s32.totalorder %s11, 1
    %p71 = scmp.ne.s32.totalorder %s66, %s68
    %p72 = scmp.eq.s32.totalorder %s11, 0
    %p73 = por %p71, %p72
    %p74 = scmp.ne.s32.totalorder %s66, %s68
    %p75 = scmp.eq.s32.totalorder %s16, 1
    %p76 = por %p74, %p75
    %p77 = scmp.ne.s32.totalorder %s68, %s69
    %p78 = scmp.eq.s32.totalorder %s16, 0
    %p79 = por %p77, %p78
    %p80 = scmp.ne.s32.totalorder %s68, %s69
    %p81 = scmp.eq.s32.totalorder %s17, 1
    %p82 = por %p80, %p81
    %p84 = scmp.ne.s32.totalorder %s69, %s83
    %p85 = scmp.eq.s32.totalorder %s17, 0
    %p86 = por %p84, %p85
    %s88 = sadd.s32 %s87, 1
    %p91 = scmp.eq.s32.totalorder %s11, 1
    %p92 = scmp.ne.s32.totalorder %s87, %s89
    %p93 = scmp.eq.s32.totalorder %s11, 0
    %p94 = por %p92, %p93
    %p95 = scmp.ne.s32.totalorder %s87, %s89
    %p96 = scmp.eq.s32.totalorder %s16, 1
    %p97 = por %p95, %p96
    %p98 = scmp.ne.s32.totalorder %s89, %s90
    %p99 = scmp.eq.s32.totalorder %s16, 0
    %p100 = por %p98, %p99
    %p101 = scmp.ne.s32.totalorder %s89, %s90
    %p102 = scmp.eq.s32.totalorder %s17, 1
    %p103 = por %p101, %p102
    %p105 = scmp.ne.s32.totalorder %s90, %s104
    %p106 = scmp.eq.s32.totalorder %s17, 0
    %p107 = por %p105, %p106
    %s109 = sadd.s32 %s108, 1
    %p112 = scmp.eq.s32.totalorder %s11, 1
    %p113 = scmp.ne.s32.totalorder %s108, %s110
    %p114 = scmp.eq.s32.totalorder %s11, 0
    %p115 = por %p113, %p114
    %p116 = scmp.ne.s32.totalorder %s108, %s110
    %p117 = scmp.eq.s32.totalorder %s16, 1
    %p118 = por %p116, %p117
    %p119 = scmp.ne.s32.totalorder %s110, %s111
    %p120 = scmp.eq.s32.totalorder %s16, 0
    %p121 = por %p119, %p120
    %p122 = scmp.ne.s32.totalorder %s110, %s111
    %p123 = scmp.eq.s32.totalorder %s17, 1
    %p124 = por %p122, %p123
    %p126 = scmp.ne.s32.totalorder %s111, %s125
    %p127 = scmp.eq.s32.totalorder %s17, 0
    %p128 = por %p126, %p127
    %s129 = ssub.s32 %s11, %s18
    %p130 = scmp.eq.s32.totalorder %s129, 0
    %s132 = sadd.s32 %s131, 1
    %s133 = scalar_select %p130, %s131, %s132
    %p136 = pneg %p130
    %p137 = scmp.eq.s32.totalorder %s11, 1
    %p138 = por %p136, %p137
    %p139 = scmp.ne.s32.totalorder %s131, %s134
    %p140 = scmp.eq.s32.totalorder %s11, 0
    %p141 = por %p139, %p140
    %p142 = scmp.ne.s32.totalorder %s131, %s134
    %p143 = scmp.eq.s32.totalorder %s16, 1
    %p144 = por %p142, %p143
    %p145 = scmp.ne.s32.totalorder %s134, %s135
    %p146 = scmp.eq.s32.totalorder %s16, 0
    %p147 = por %p145, %p146
    %p148 = scmp.ne.s32.totalorder %s134, %s135
    %p149 = scmp.eq.s32.totalorder %s17, 1
    %p150 = por %p148, %p149
    %p152 = scmp.ne.s32.totalorder %s135, %s151
    %p153 = scmp.eq.s32.totalorder %s17, 0
    %p154 = por %p152, %p153
    %p155 = scmp.le.s32.totalorder 1, %s11
    %p156 = scmp.lt.s32.totalorder %s11, 3
    %p157 = pnand %p155, %p156
    %p158 = pneg %p157
    // Predicated region
    $region9: #{double_conv_pallas.1} parent=5 // pred_check
      _
    $region10: #{double_conv_pallas.1} parent=5 // pred_check_branch
      %160 = sbr.rel (%p157) target = $region12
    $region11: #{double_conv_pallas.1} parent=5 // pred_region
      %s161 = ssub.s32 %s11, 1
      // Predicated region
      $region13: #{double_conv_pallas.1} parent=11 // pred_check
        %p162 = pneg %p58
      $region14: #{double_conv_pallas.1} parent=11 // pred_check_branch
        %164 = sbr.rel (%p162) target = $region16
      $region15: #{double_conv_pallas.1} parent=11 // pred_region
        _
      $region16: #{double_conv_pallas.1} parent=11 // pred_fallthru
        _
      // Predicated region
      $region17: #{double_conv_pallas.1} parent=11 // pred_check
        %p165 = pneg %p79
      $region18: #{double_conv_pallas.1} parent=11 // pred_check_branch
        %167 = sbr.rel (%p165) target = $region20
      $region19: #{double_conv_pallas.1} parent=11 // pred_region
        _
      $region20: #{double_conv_pallas.1} parent=11 // pred_fallthru
        _
      // Predicated region
      $region21: #{double_conv_pallas.1} parent=11 // pred_check
        %p168 = pneg %p100
      $region22: #{double_conv_pallas.1} parent=11 // pred_check_branch
        %170 = sbr.rel (%p168) target = $region24
      $region23: #{double_conv_pallas.1} parent=11 // pred_region
        _
      $region24: #{double_conv_pallas.1} parent=11 // pred_fallthru
        _
      // Predicated region
      $region25: #{double_conv_pallas.1} parent=11 // pred_check
        %p171 = pneg %p121
      $region26: #{double_conv_pallas.1} parent=11 // pred_check_branch
        %173 = sbr.rel (%p171) target = $region28
      $region27: #{double_conv_pallas.1} parent=11 // pred_region
        _
      $region28: #{double_conv_pallas.1} parent=11 // pred_fallthru
        _
    $region12: #{double_conv_pallas.1} parent=5 // pred_fallthru
      _
    %p174 = scmp.lt.s32.totalorder %s11, 2
    // Predicated region
    $region29: #{double_conv_pallas.1} parent=5 // pred_check
      %p175 = pneg %p174
    $region30: #{double_conv_pallas.1} parent=5 // pred_check_branch
      %177 = sbr.rel (%p175) target = $region32
    $region31: #{double_conv_pallas.1} parent=5 // pred_region
      // Predicated region
      $region33: #{double_conv_pallas.1} parent=31 // pred_check
        %p178 = pneg %p31
      $region34: #{double_conv_pallas.1} parent=31 // pred_check_branch
        %180 = sbr.rel (%p178) target = $region36
      $region35: #{double_conv_pallas.1} parent=31 // pred_region
        %p181 = scmp.lt.s32.totalorder %s11, 1
        %s182 = scalar_select %p181, %s11, 1
        %s183 = smul.addr %s182, 32
        %s184 = smul.addr %s183, 4
        %s185 = scalar_lea.vmem %s0, %s184
      $region36: #{double_conv_pallas.1} parent=31 // pred_fallthru
        _
    $region32: #{double_conv_pallas.1} parent=5 // pred_fallthru
      _
    %p186 = scmp.le.s32.totalorder 1, %s11
    %p187 = scmp.lt.s32.totalorder %s11, 3
    %p188 = pnand %p186, %p187
    %p189 = pneg %p188
    // Predicated region
    $region37: #{double_conv_pallas.1} parent=5 // pred_check
      _
    $region38: #{double_conv_pallas.1} parent=5 // pred_check_branch
      %191 = sbr.rel (%p188) target = $region40
    $region39: #{double_conv_pallas.1} parent=5 // pred_region
      %s192 = ssub.s32 %s11, 1
      %p193 = scmp.lt.s32.totalorder %s16, 1
      %s194 = scalar_select %p193, %s16, 1
      %s195 = smul.addr %s194, 32
      %s196 = smul.addr %s195, 4
      %s197 = scalar_lea.vmem %s0, %s196
      %p198 = pneg %p37
      %p199 = pneg %p34
      %p200 = pneg %p58
      %p201 = pneg %p55
      %p202 = pneg %p79
      %p203 = pneg %p76
      %p204 = pneg %p100
      %p205 = pneg %p97
      %p206 = pneg %p121
      %p207 = pneg %p118
      %p208 = pneg %p147
      %p209 = pneg %p144
      %p210 = scmp.lt.s32.totalorder %s16, 1
      %s211 = scalar_select %p210, %s16, 1
      %s212 = smul.addr %s211, 32
      %s213 = smul.addr %s212, 4
      %s214 = scalar_lea.vmem %s5, %s213
      %p215 = scmp.lt.s32.totalorder %s16, 1
      %s216 = scalar_select %p215, %s16, 1
      %s217 = smul.addr %s216, 32
      %s218 = smul.addr %s217, 4
      %s219 = scalar_lea.vmem %s0, %s218
      %p220 = scmp.lt.s32.totalorder %s16, 1
      %s221 = scalar_select %p220, %s16, 1
      %s222 = smul.addr %s221, 32
      %s223 = smul.addr %s222, 4
      %s224 = scalar_lea.vmem %s5, %s223
      %226 = vst [vmem:[#allocation2] sm:$0xf] 0
      %227 = vst [vmem:[#allocation2 + $0x4] sm:$0xf] 0
      %228 = vst [vmem:[#allocation2 + $0x8] sm:$0xf] 0
      %229 = vst [vmem:[#allocation2 + $0xc] sm:$0xf] 0
      %s230 = scalar_lea.vmem [#allocation2], 272
      %231 = vst [vmem:[%s230] sm:$0xf] 0
      %232 = vst [vmem:[%s230 + $0x4] sm:$0xf] 0
      %233 = vst [vmem:[%s230 + $0x8] sm:$0xf] 0
      %234 = vst [vmem:[%s230 + $0xc] sm:$0xf] 0
      %vm235 = vcmask 1043459
      %vm236 = vsmask.f32 7950
      %vm237 = vmand %vm235, %vm236
      %v238 = vld [vmem:[#allocation2] sm:$0x8]
      %v239 = vsel %vm237, 0, %v238
      %240 = vst [vmem:[#allocation2] sm:$0x8] %v239
      %v241 = vld [vmem:[#allocation2 + $0x10] sm:$0x8]
      %v242 = vsel %vm237, 0, %v241
      %243 = vst [vmem:[#allocation2 + $0x10] sm:$0x8] %v242
      %v244 = vld [vmem:[#allocation2 + $0x20] sm:$0x8]
      %v245 = vsel %vm237, 0, %v244
      %246 = vst [vmem:[#allocation2 + $0x20] sm:$0x8] %v245
      %v247 = vld [vmem:[#allocation2 + $0x30] sm:$0x8]
      %v248 = vsel %vm237, 0, %v247
      %249 = vst [vmem:[#allocation2 + $0x30] sm:$0x8] %v248
      %v250 = vld [vmem:[#allocation2 + $0x40] sm:$0x8]
      %v251 = vsel %vm237, 0, %v250
      %252 = vst [vmem:[#allocation2 + $0x40] sm:$0x8] %v251
      %v253 = vld [vmem:[#allocation2 + $0x50] sm:$0x8]
      %v254 = vsel %vm237, 0, %v253
      %255 = vst [vmem:[#allocation2 + $0x50] sm:$0x8] %v254
      %v256 = vld [vmem:[#allocation2 + $0x60] sm:$0x8]
      %v257 = vsel %vm237, 0, %v256
      %258 = vst [vmem:[#allocation2 + $0x60] sm:$0x8] %v257
      %v259 = vld [vmem:[#allocation2 + $0x70] sm:$0x8]
      %v260 = vsel %vm237, 0, %v259
      %261 = vst [vmem:[#allocation2 + $0x70] sm:$0x8] %v260
      %v262 = vld [vmem:[#allocation2 + $0x80] sm:$0x8]
      %v263 = vsel %vm237, 0, %v262
      %264 = vst [vmem:[#allocation2 + $0x80] sm:$0x8] %v263
      %v265 = vld [vmem:[#allocation2 + $0x90] sm:$0x8]
      %v266 = vsel %vm237, 0, %v265
      %267 = vst [vmem:[#allocation2 + $0x90] sm:$0x8] %v266
      %v268 = vld [vmem:[#allocation2 + $0xa0] sm:$0x8]
      %v269 = vsel %vm237, 0, %v268
      %270 = vst [vmem:[#allocation2 + $0xa0] sm:$0x8] %v269
      %v271 = vld [vmem:[#allocation2 + $0xb0] sm:$0x8]
      %v272 = vsel %vm237, 0, %v271
      %273 = vst [vmem:[#allocation2 + $0xb0] sm:$0x8] %v272
      %v274 = vld [vmem:[#allocation2 + $0xc0] sm:$0x8]
      %v275 = vsel %vm237, 0, %v274
      %276 = vst [vmem:[#allocation2 + $0xc0] sm:$0x8] %v275
      %v277 = vld [vmem:[#allocation2 + $0xd0] sm:$0x8]
      %v278 = vsel %vm237, 0, %v277
      %279 = vst [vmem:[#allocation2 + $0xd0] sm:$0x8] %v278
      %v280 = vld [vmem:[#allocation2 + $0xe0] sm:$0x8]
      %v281 = vsel %vm237, 0, %v280
      %282 = vst [vmem:[#allocation2 + $0xe0] sm:$0x8] %v281
      %v283 = vld [vmem:[#allocation2 + $0xf0] sm:$0x8]
      %v284 = vsel %vm237, 0, %v283
      %285 = vst [vmem:[#allocation2 + $0xf0] sm:$0x8] %v284
      %v286 = vld [vmem:[#allocation2 + $0x100] sm:$0x8]
      %v287 = vsel %vm237, 0, %v286
      %288 = vst [vmem:[#allocation2 + $0x100] sm:$0x8] %v287
      %v289 = vld [vmem:[#allocation2 + $0x110] sm:$0x8]
      %v290 = vsel %vm237, 0, %v289
      %291 = vst [vmem:[#allocation2 + $0x110] sm:$0x8] %v290
      %vm292 = vcmask 1040384
      %vm293 = vsmask.f32 256
      %vm294 = vmand %vm292, %vm293
      %v295 = vld [vmem:[#allocation2 + $0xc] sm:$0x1]
      %v296 = vsel %vm294, 0, %v295
      %297 = vst [vmem:[#allocation2 + $0xc] sm:$0x1] %v296
      %v298 = vld [vmem:[#allocation2 + $0x1c] sm:$0x1]
      %v299 = vsel %vm294, 0, %v298
      %300 = vst [vmem:[#allocation2 + $0x1c] sm:$0x1] %v299
      %v301 = vld [vmem:[#allocation2 + $0x2c] sm:$0x1]
      %v302 = vsel %vm294, 0, %v301
      %303 = vst [vmem:[#allocation2 + $0x2c] sm:$0x1] %v302
      %v304 = vld [vmem:[#allocation2 + $0x3c] sm:$0x1]
      %v305 = vsel %vm294, 0, %v304
      %306 = vst [vmem:[#allocation2 + $0x3c] sm:$0x1] %v305
      %v307 = vld [vmem:[#allocation2 + $0x4c] sm:$0x1]
      %v308 = vsel %vm294, 0, %v307
      %309 = vst [vmem:[#allocation2 + $0x4c] sm:$0x1] %v308
      %v310 = vld [vmem:[#allocation2 + $0x5c] sm:$0x1]
      %v311 = vsel %vm294, 0, %v310
      %312 = vst [vmem:[#allocation2 + $0x5c] sm:$0x1] %v311
      %v313 = vld [vmem:[#allocation2 + $0x6c] sm:$0x1]
      %v314 = vsel %vm294, 0, %v313
      %315 = vst [vmem:[#allocation2 + $0x6c] sm:$0x1] %v314
      %v316 = vld [vmem:[#allocation2 + $0x7c] sm:$0x1]
      %v317 = vsel %vm294, 0, %v316
      %318 = vst [vmem:[#allocation2 + $0x7c] sm:$0x1] %v317
      %v319 = vld [vmem:[#allocation2 + $0x8c] sm:$0x1]
      %v320 = vsel %vm294, 0, %v319
      %321 = vst [vmem:[#allocation2 + $0x8c] sm:$0x1] %v320
      %v322 = vld [vmem:[#allocation2 + $0x9c] sm:$0x1]
      %v323 = vsel %vm294, 0, %v322
      %324 = vst [vmem:[#allocation2 + $0x9c] sm:$0x1] %v323
      %v325 = vld [vmem:[#allocation2 + $0xac] sm:$0x1]
      %v326 = vsel %vm294, 0, %v325
      %327 = vst [vmem:[#allocation2 + $0xac] sm:$0x1] %v326
      %v328 = vld [vmem:[#allocation2 + $0xbc] sm:$0x1]
      %v329 = vsel %vm294, 0, %v328
      %330 = vst [vmem:[#allocation2 + $0xbc] sm:$0x1] %v329
      %v331 = vld [vmem:[#allocation2 + $0xcc] sm:$0x1]
      %v332 = vsel %vm294, 0, %v331
      %333 = vst [vmem:[#allocation2 + $0xcc] sm:$0x1] %v332
      %v334 = vld [vmem:[#allocation2 + $0xdc] sm:$0x1]
      %v335 = vsel %vm294, 0, %v334
      %336 = vst [vmem:[#allocation2 + $0xdc] sm:$0x1] %v335
      %v337 = vld [vmem:[#allocation2 + $0xec] sm:$0x1]
      %v338 = vsel %vm294, 0, %v337
      %339 = vst [vmem:[#allocation2 + $0xec] sm:$0x1] %v338
      %v340 = vld [vmem:[#allocation2 + $0xfc] sm:$0x1]
      %v341 = vsel %vm294, 0, %v340
      %342 = vst [vmem:[#allocation2 + $0xfc] sm:$0x1] %v341
      %v343 = vld [vmem:[#allocation2 + $0x10c] sm:$0x1]
      %v344 = vsel %vm294, 0, %v343
      %345 = vst [vmem:[#allocation2 + $0x10c] sm:$0x1] %v344
      %v346 = vld [vmem:[#allocation2 + $0x11c] sm:$0x1]
      %v347 = vsel %vm294, 0, %v346
      %348 = vst [vmem:[#allocation2 + $0x11c] sm:$0x1] %v347
      %s349 = smul.u32 0, 2
      %s350 = smul.addr %s349, 4
      %s351 = scalar_lea.vmem %s219, %s350
      %v352 = vld [vmem:[%s351] sm:$0xf]
      %v353 = vld [vmem:[%s351 + $0x4] sm:$0xf]
      %v354 = vld [vmem:[%s351 + $0x8] sm:$0xf]
      %v355 = vld [vmem:[%s351 + $0xc] sm:$0xf]
      %v356 = vld [vmem:[%s351 + $0x10] sm:$0xf]
      %v357 = vld [vmem:[%s351 + $0x14] sm:$0xf]
      %v358 = vld [vmem:[%s351 + $0x18] sm:$0xf]
      %v359 = vld [vmem:[%s351 + $0x1c] sm:$0xf]
      %v360 = vld [vmem:[%s351 + $0x20] sm:$0xf]
      %v361 = vld [vmem:[%s351 + $0x24] sm:$0xf]
      %v362 = vld [vmem:[%s351 + $0x28] sm:$0xf]
      %v363 = vld [vmem:[%s351 + $0x2c] sm:$0xf]
      %v364 = vld [vmem:[%s351 + $0x30] sm:$0xf]
      %v365 = vld [vmem:[%s351 + $0x34] sm:$0xf]
      %v366 = vld [vmem:[%s351 + $0x38] sm:$0xf]
      %v367 = vld [vmem:[%s351 + $0x3c] sm:$0xf]
      %v368 = vld [vmem:[%s351 + $0x40] sm:$0xf]
      %v369 = vld [vmem:[%s351 + $0x44] sm:$0xf]
      %v370 = vld [vmem:[%s351 + $0x48] sm:$0xf]
      %v371 = vld [vmem:[%s351 + $0x4c] sm:$0xf]
      %v372 = vld [vmem:[%s351 + $0x50] sm:$0xf]
      %v373 = vld [vmem:[%s351 + $0x54] sm:$0xf]
      %v374 = vld [vmem:[%s351 + $0x58] sm:$0xf]
      %v375 = vld [vmem:[%s351 + $0x5c] sm:$0xf]
      %v376 = vld [vmem:[%s351 + $0x60] sm:$0xf]
      %v377 = vld [vmem:[%s351 + $0x64] sm:$0xf]
      %v378 = vld [vmem:[%s351 + $0x68] sm:$0xf]
      %v379 = vld [vmem:[%s351 + $0x6c] sm:$0xf]
      %v380 = vld [vmem:[%s351 + $0x70] sm:$0xf]
      %v381 = vld [vmem:[%s351 + $0x74] sm:$0xf]
      %v382 = vld [vmem:[%s351 + $0x78] sm:$0xf]
      %v383 = vld [vmem:[%s351 + $0x7c] sm:$0xf]
      %v384 = vld [vmem:[%s1] sm:$0xf]
      %v385 = vld [vmem:[%s1 + $0x4] sm:$0xf]
      %v386 = vld [vmem:[%s1 + $0x8] sm:$0xf]
      %v387 = vld [vmem:[%s1 + $0xc] sm:$0xf]
      %v388 = vld [vmem:[%s1 + $0x10] sm:$0xf]
      %v389 = vld [vmem:[%s1 + $0x14] sm:$0xf]
      %v390 = vld [vmem:[%s1 + $0x18] sm:$0xf]
      %v391 = vld [vmem:[%s1 + $0x1c] sm:$0xf]
      %v392 = vld [vmem:[%s1 + $0x20] sm:$0xf]
      %v393 = vld [vmem:[%s1 + $0x24] sm:$0xf]
      %v394 = vld [vmem:[%s1 + $0x28] sm:$0xf]
      %v395 = vld [vmem:[%s1 + $0x2c] sm:$0xf]
      %v396 = vld [vmem:[%s1 + $0x30] sm:$0xf]
      %v397 = vld [vmem:[%s1 + $0x34] sm:$0xf]
      %v398 = vld [vmem:[%s1 + $0x38] sm:$0xf]
      %v399 = vld [vmem:[%s1 + $0x3c] sm:$0xf]
      %v400 = vld [vmem:[%s2] sm:$0x1]
      %v402 = vlaneseq
      %v403 = vshrl.u32 %v402, 7
      %v404 = vsub.s32 0, %v403
      %v405 = vrot.slane %v400, %v404
      %v439 = vunpack.c.l.b16 %v352
      %v440 = vunpack.c.l.b16 %v353
      %v441 = vunpack.c.l.b16 %v354
      %v442 = vunpack.c.l.b16 %v355
      %v443 = vunpack.c.l.b16 %v356
      %v444 = vunpack.c.l.b16 %v357
      %v445 = vunpack.c.l.b16 %v358
      %v446 = vunpack.c.l.b16 %v359
      %v447 = vunpack.c.l.b16 %v360
      %v448 = vunpack.c.l.b16 %v361
      %v449 = vunpack.c.l.b16 %v362
      %v450 = vunpack.c.l.b16 %v363
      %v451 = vunpack.c.l.b16 %v364
      %v452 = vunpack.c.l.b16 %v365
      %v453 = vunpack.c.l.b16 %v366
      %v454 = vunpack.c.l.b16 %v367
      %v455 = vunpack.c.l.b16 %v368
      %v456 = vunpack.c.l.b16 %v369
      %v457 = vunpack.c.l.b16 %v370
      %v458 = vunpack.c.l.b16 %v371
      %v459 = vunpack.c.l.b16 %v372
      %v460 = vunpack.c.l.b16 %v373
      %v461 = vunpack.c.l.b16 %v374
      %v462 = vunpack.c.l.b16 %v375
      %v463 = vunpack.c.l.b16 %v376
      %v464 = vunpack.c.l.b16 %v377
      %v465 = vunpack.c.l.b16 %v378
      %v466 = vunpack.c.l.b16 %v379
      %v467 = vunpack.c.l.b16 %v380
      %v468 = vunpack.c.l.b16 %v381
      %v469 = vunpack.c.l.b16 %v382
      %v470 = vunpack.c.l.b16 %v383
      %v471 = vpack.c.b16 %v440, %v439
      %v472 = vpack.c.b16 %v442, %v441
      %v473 = vpack.c.b16 %v444, %v443
      %v474 = vpack.c.b16 %v446, %v445
      %v475 = vpack.c.b16 %v448, %v447
      %v476 = vpack.c.b16 %v450, %v449
      %v477 = vpack.c.b16 %v452, %v451
      %v478 = vpack.c.b16 %v454, %v453
      %v479 = vpack.c.b16 %v456, %v455
      %v480 = vpack.c.b16 %v458, %v457
      %v481 = vpack.c.b16 %v460, %v459
      %v482 = vpack.c.b16 %v462, %v461
      %v483 = vpack.c.b16 %v464, %v463
      %v484 = vpack.c.b16 %v466, %v465
      %v485 = vpack.c.b16 %v468, %v467
      %v486 = vpack.c.b16 %v470, %v469
      %v519 = vunpack.c.l.b16 %v384
      %v520 = vunpack.c.l.b16 %v385
      %v521 = vunpack.c.l.b16 %v386
      %v522 = vunpack.c.l.b16 %v387
      %v523 = vunpack.c.l.b16 %v388
      %v524 = vunpack.c.l.b16 %v389
      %v525 = vunpack.c.l.b16 %v390
      %v526 = vunpack.c.l.b16 %v391
      %v527 = vunpack.c.l.b16 %v392
      %v528 = vunpack.c.l.b16 %v393
      %v529 = vunpack.c.l.b16 %v394
      %v530 = vunpack.c.l.b16 %v395
      %v531 = vunpack.c.l.b16 %v396
      %v532 = vunpack.c.l.b16 %v397
      %v533 = vunpack.c.l.b16 %v398
      %v534 = vunpack.c.l.b16 %v399
      %v535 = vpack.c.b16 %v520, %v519
      %v536 = vpack.c.b16 %v522, %v521
      %v537 = vpack.c.b16 %v524, %v523
      %v538 = vpack.c.b16 %v526, %v525
      %v539 = vpack.c.b16 %v528, %v527
      %v540 = vpack.c.b16 %v530, %v529
      %v541 = vpack.c.b16 %v532, %v531
      %v542 = vpack.c.b16 %v534, %v533
      %551 = vmatprep.subr.bf16.mxu0 0
      %552 = vmatpush1.bf16.msra.mxu0 %v542
      %553 = vmatprep.subr.bf16.mxu0 0
      %554 = vmatpush1.bf16.msra.mxu0 %v541
      %555 = vmatprep.subr.bf16.mxu0 0
      %556 = vmatpush1.bf16.msra.mxu0 %v540
      %557 = vmatprep.subr.bf16.mxu0 0
      %558 = vmatpush1.bf16.msra.mxu0 %v539
      %559 = vmatprep.subr.bf16.mxu0 0
      %560 = vmatpush1.bf16.msra.mxu0 %v538
      %561 = vmatprep.subr.bf16.mxu0 0
      %562 = vmatpush1.bf16.msra.mxu0 %v537
      %563 = vmatprep.subr.bf16.mxu0 0
      %564 = vmatpush1.bf16.msra.mxu0 %v536
      %565 = vmatprep.subr.bf16.mxu0 0
      %566 = vmatpush1.bf16.msra.mxu0 %v535
      %567 = vmatprep.subr.bf16.mxu0 0
      %568 = vmatpush2.bf16.msra.mxu0 0
      %569 = vmatprep.subr.bf16.mxu0 0
      %570 = vmatpush2.bf16.msra.mxu0 0
      %571 = vmatprep.subr.bf16.mxu0 0
      %572 = vmatpush2.bf16.msra.mxu0 0
      %573 = vmatprep.subr.bf16.mxu0 0
      %574 = vmatpush2.bf16.msra.mxu0 0
      %575 = vmatprep.subr.bf16.mxu0 0
      %576 = vmatpush2.bf16.msra.mxu0 0
      %577 = vmatprep.subr.bf16.mxu0 0
      %578 = vmatpush2.bf16.msra.mxu0 0
      %579 = vmatprep.subr.bf16.mxu0 0
      %580 = vmatpush2.bf16.msra.mxu0 0
      %581 = vmatprep.subr.bf16.mxu0 0
      %582 = vmatpush2.bf16.msra.mxu0 0
      %583 = vmatprep.mubr.bf16.mxu0 0
      %584 = vmatmul.mubr.bf16.gmra.mxu0 %v471
      %v585 = vpop.f32.mrf.mxu0
      %v586 = vadd.f32 %v405, %v585
      %v587 = vpop.f32.mrf.mxu0
      %v588 = vpop.f32.mrf.mxu0
      %v589 = vadd.f32 %v405, %v588
      %v590 = vpop.f32.mrf.mxu0
      %591 = vmatprep.mubr.bf16.mxu0 0
      %592 = vmatmul.mubr.bf16.gmra.mxu0 %v472
      %v593 = vpop.f32.mrf.mxu0
      %v594 = vadd.f32 %v405, %v593
      %v595 = vpop.f32.mrf.mxu0
      %v596 = vpop.f32.mrf.mxu0
      %v597 = vadd.f32 %v405, %v596
      %v598 = vpop.f32.mrf.mxu0
      %599 = vmatprep.mubr.bf16.mxu0 0
      %600 = vmatmul.mubr.bf16.gmra.mxu0 %v473
      %v601 = vpop.f32.mrf.mxu0
      %v602 = vadd.f32 %v405, %v601
      %v603 = vpop.f32.mrf.mxu0
      %v604 = vpop.f32.mrf.mxu0
      %v605 = vadd.f32 %v405, %v604
      %v606 = vpop.f32.mrf.mxu0
      %607 = vmatprep.mubr.bf16.mxu0 0
      %608 = vmatmul.mubr.bf16.gmra.mxu0 %v474
      %v609 = vpop.f32.mrf.mxu0
      %v610 = vadd.f32 %v405, %v609
      %v611 = vpop.f32.mrf.mxu0
      %v612 = vpop.f32.mrf.mxu0
      %v613 = vadd.f32 %v405, %v612
      %v614 = vpop.f32.mrf.mxu0
      %615 = vmatprep.mubr.bf16.mxu0 0
      %616 = vmatmul.mubr.bf16.gmra.mxu0 %v475
      %v617 = vpop.f32.mrf.mxu0
      %v618 = vadd.f32 %v405, %v617
      %v619 = vpop.f32.mrf.mxu0
      %v620 = vpop.f32.mrf.mxu0
      %v621 = vadd.f32 %v405, %v620
      %v622 = vpop.f32.mrf.mxu0
      %623 = vmatprep.mubr.bf16.mxu0 0
      %624 = vmatmul.mubr.bf16.gmra.mxu0 %v476
      %v625 = vpop.f32.mrf.mxu0
      %v626 = vadd.f32 %v405, %v625
      %v627 = vpop.f32.mrf.mxu0
      %v628 = vpop.f32.mrf.mxu0
      %v629 = vadd.f32 %v405, %v628
      %v630 = vpop.f32.mrf.mxu0
      %631 = vmatprep.mubr.bf16.mxu0 0
      %632 = vmatmul.mubr.bf16.gmra.mxu0 %v477
      %v633 = vpop.f32.mrf.mxu0
      %v634 = vadd.f32 %v405, %v633
      %v635 = vpop.f32.mrf.mxu0
      %v636 = vpop.f32.mrf.mxu0
      %v637 = vadd.f32 %v405, %v636
      %v638 = vpop.f32.mrf.mxu0
      %639 = vmatprep.mubr.bf16.mxu0 0
      %640 = vmatmul.mubr.bf16.gmra.mxu0 %v478
      %v641 = vpop.f32.mrf.mxu0
      %v642 = vadd.f32 %v405, %v641
      %v643 = vpop.f32.mrf.mxu0
      %v644 = vpop.f32.mrf.mxu0
      %v645 = vadd.f32 %v405, %v644
      %v646 = vpop.f32.mrf.mxu0
      %647 = vmatprep.mubr.bf16.mxu0 0
      %648 = vmatmul.mubr.bf16.gmra.mxu0 %v479
      %v649 = vpop.f32.mrf.mxu0
      %v650 = vadd.f32 %v405, %v649
      %v651 = vpop.f32.mrf.mxu0
      %v652 = vpop.f32.mrf.mxu0
      %v653 = vadd.f32 %v405, %v652
      %v654 = vpop.f32.mrf.mxu0
      %655 = vmatprep.mubr.bf16.mxu0 0
      %656 = vmatmul.mubr.bf16.gmra.mxu0 %v480
      %v657 = vpop.f32.mrf.mxu0
      %v658 = vadd.f32 %v405, %v657
      %v659 = vpop.f32.mrf.mxu0
      %v660 = vpop.f32.mrf.mxu0
      %v661 = vadd.f32 %v405, %v660
      %v662 = vpop.f32.mrf.mxu0
      %663 = vmatprep.mubr.bf16.mxu0 0
      %664 = vmatmul.mubr.bf16.gmra.mxu0 %v481
      %v665 = vpop.f32.mrf.mxu0
      %v666 = vadd.f32 %v405, %v665
      %v667 = vpop.f32.mrf.mxu0
      %v668 = vpop.f32.mrf.mxu0
      %v669 = vadd.f32 %v405, %v668
      %v670 = vpop.f32.mrf.mxu0
      %671 = vmatprep.mubr.bf16.mxu0 0
      %672 = vmatmul.mubr.bf16.gmra.mxu0 %v482
      %v673 = vpop.f32.mrf.mxu0
      %v674 = vadd.f32 %v405, %v673
      %v675 = vpop.f32.mrf.mxu0
      %v676 = vpop.f32.mrf.mxu0
      %v677 = vadd.f32 %v405, %v676
      %v678 = vpop.f32.mrf.mxu0
      %679 = vmatprep.mubr.bf16.mxu0 0
      %680 = vmatmul.mubr.bf16.gmra.mxu0 %v483
      %v681 = vpop.f32.mrf.mxu0
      %v682 = vadd.f32 %v405, %v681
      %v683 = vpop.f32.mrf.mxu0
      %v684 = vpop.f32.mrf.mxu0
      %v685 = vadd.f32 %v405, %v684
      %v686 = vpop.f32.mrf.mxu0
      %687 = vmatprep.mubr.bf16.mxu0 0
      %688 = vmatmul.mubr.bf16.gmra.mxu0 %v484
      %v689 = vpop.f32.mrf.mxu0
      %v690 = vadd.f32 %v405, %v689
      %v691 = vpop.f32.mrf.mxu0
      %v692 = vpop.f32.mrf.mxu0
      %v693 = vadd.f32 %v405, %v692
      %v694 = vpop.f32.mrf.mxu0
      %695 = vmatprep.mubr.bf16.mxu0 0
      %696 = vmatmul.mubr.bf16.gmra.mxu0 %v485
      %v697 = vpop.f32.mrf.mxu0
      %v698 = vadd.f32 %v405, %v697
      %v699 = vpop.f32.mrf.mxu0
      %v700 = vpop.f32.mrf.mxu0
      %v701 = vadd.f32 %v405, %v700
      %v702 = vpop.f32.mrf.mxu0
      %703 = vmatprep.mubr.bf16.mxu0 0
      %704 = vmatmul.mubr.bf16.gmra.mxu0 %v486
      %v705 = vpop.f32.mrf.mxu0
      %v706 = vadd.f32 %v405, %v705
      %v707 = vpop.f32.mrf.mxu0
      %v708 = vpop.f32.mrf.mxu0
      %v709 = vadd.f32 %v405, %v708
      %v710 = vpop.f32.mrf.mxu0
      %711 = vdwg.mxu0
      %v712 = vmax.f32 %v586, 0.0
      %v713 = vmax.f32 %v589, 0.0
      %v714 = vmax.f32 %v594, 0.0
      %v715 = vmax.f32 %v597, 0.0
      %v716 = vmax.f32 %v602, 0.0
      %v717 = vmax.f32 %v605, 0.0
      %v718 = vmax.f32 %v610, 0.0
      %v719 = vmax.f32 %v613, 0.0
      %v720 = vmax.f32 %v618, 0.0
      %v721 = vmax.f32 %v621, 0.0
      %v722 = vmax.f32 %v626, 0.0
      %v723 = vmax.f32 %v629, 0.0
      %v724 = vmax.f32 %v634, 0.0
      %v725 = vmax.f32 %v637, 0.0
      %v726 = vmax.f32 %v642, 0.0
      %v727 = vmax.f32 %v645, 0.0
      %v728 = vmax.f32 %v650, 0.0
      %v729 = vmax.f32 %v653, 0.0
      %v730 = vmax.f32 %v658, 0.0
      %v731 = vmax.f32 %v661, 0.0
      %v732 = vmax.f32 %v666, 0.0
      %v733 = vmax.f32 %v669, 0.0
      %v734 = vmax.f32 %v674, 0.0
      %v735 = vmax.f32 %v677, 0.0
      %v736 = vmax.f32 %v682, 0.0
      %v737 = vmax.f32 %v685, 0.0
      %v738 = vmax.f32 %v690, 0.0
      %v739 = vmax.f32 %v693, 0.0
      %v740 = vmax.f32 %v698, 0.0
      %v741 = vmax.f32 %v701, 0.0
      %v742 = vmax.f32 %v706, 0.0
      %v743 = vmax.f32 %v709, 0.0
      %v744 = vpack.c.bf16 %v713, %v712
      %v745 = vpack.c.bf16 %v715, %v714
      %v746 = vpack.c.bf16 %v717, %v716
      %v747 = vpack.c.bf16 %v719, %v718
      %v748 = vpack.c.bf16 %v721, %v720
      %v749 = vpack.c.bf16 %v723, %v722
      %v750 = vpack.c.bf16 %v725, %v724
      %v751 = vpack.c.bf16 %v727, %v726
      %v752 = vpack.c.bf16 %v729, %v728
      %v753 = vpack.c.bf16 %v731, %v730
      %v754 = vpack.c.bf16 %v733, %v732
      %v755 = vpack.c.bf16 %v735, %v734
      %v756 = vpack.c.bf16 %v737, %v736
      %v757 = vpack.c.bf16 %v739, %v738
      %v758 = vpack.c.bf16 %v741, %v740
      %v759 = vpack.c.bf16 %v743, %v742
      %s760 = sadd.s32 0, 1
      %v777 = vunpack.c.l.b16 %v744
      %v778 = vunpack.c.h.b16 %v744
      %v779 = vunpack.c.l.b16 %v745
      %v780 = vunpack.c.h.b16 %v745
      %v781 = vunpack.c.l.b16 %v746
      %v782 = vunpack.c.h.b16 %v746
      %v783 = vunpack.c.l.b16 %v747
      %v784 = vunpack.c.h.b16 %v747
      %v785 = vunpack.c.l.b16 %v748
      %v786 = vunpack.c.h.b16 %v748
      %v787 = vunpack.c.l.b16 %v749
      %v788 = vunpack.c.h.b16 %v749
      %v789 = vunpack.c.l.b16 %v750
      %v790 = vunpack.c.h.b16 %v750
      %v791 = vunpack.c.l.b16 %v751
      %v792 = vunpack.c.h.b16 %v751
      %v793 = vunpack.c.l.b16 %v752
      %v794 = vunpack.c.h.b16 %v752
      %v795 = vunpack.c.l.b16 %v753
      %v796 = vunpack.c.h.b16 %v753
      %v797 = vunpack.c.l.b16 %v754
      %v798 = vunpack.c.h.b16 %v754
      %v799 = vunpack.c.l.b16 %v755
      %v800 = vunpack.c.h.b16 %v755
      %v801 = vunpack.c.l.b16 %v756
      %v802 = vunpack.c.h.b16 %v756
      %v803 = vunpack.c.l.b16 %v757
      %v804 = vunpack.c.h.b16 %v757
      %v805 = vunpack.c.l.b16 %v758
      %v806 = vunpack.c.h.b16 %v758
      %v807 = vunpack.c.l.b16 %v759
      %v808 = vunpack.c.h.b16 %v759
      %v809 = vpack.c.b16 %v777, %v777
      %v810 = vpack.c.b16 %v778, %v778
      %v811 = vpack.c.b16 %v779, %v779
      %v812 = vpack.c.b16 %v780, %v780
      %v813 = vpack.c.b16 %v781, %v781
      %v814 = vpack.c.b16 %v782, %v782
      %v815 = vpack.c.b16 %v783, %v783
      %v816 = vpack.c.b16 %v784, %v784
      %v817 = vpack.c.b16 %v785, %v785
      %v818 = vpack.c.b16 %v786, %v786
      %v819 = vpack.c.b16 %v787, %v787
      %v820 = vpack.c.b16 %v788, %v788
      %v821 = vpack.c.b16 %v789, %v789
      %v822 = vpack.c.b16 %v790, %v790
      %v823 = vpack.c.b16 %v791, %v791
      %v824 = vpack.c.b16 %v792, %v792
      %v825 = vpack.c.b16 %v793, %v793
      %v826 = vpack.c.b16 %v794, %v794
      %v827 = vpack.c.b16 %v795, %v795
      %v828 = vpack.c.b16 %v796, %v796
      %v829 = vpack.c.b16 %v797, %v797
      %v830 = vpack.c.b16 %v798, %v798
      %v831 = vpack.c.b16 %v799, %v799
      %v832 = vpack.c.b16 %v800, %v800
      %v833 = vpack.c.b16 %v801, %v801
      %v834 = vpack.c.b16 %v802, %v802
      %v835 = vpack.c.b16 %v803, %v803
      %v836 = vpack.c.b16 %v804, %v804
      %v837 = vpack.c.b16 %v805, %v805
      %v838 = vpack.c.b16 %v806, %v806
      %v839 = vpack.c.b16 %v807, %v807
      %v840 = vpack.c.b16 %v808, %v808
      %s873 = smul.u32 %s760, 4
      %s874 = smul.addr %s873, 4
      %s875 = scalar_lea.vmem [#allocation2], %s874
      %876 = vst [vmem:[%s875 + $0x4] sm:$0xf] %v809
      %877 = vst [vmem:[%s875 + $0x8] sm:$0xf] %v810
      %878 = vst [vmem:[%s875 + $0x14] sm:$0xf] %v811
      %879 = vst [vmem:[%s875 + $0x18] sm:$0xf] %v812
      %880 = vst [vmem:[%s875 + $0x24] sm:$0xf] %v813
      %881 = vst [vmem:[%s875 + $0x28] sm:$0xf] %v814
      %882 = vst [vmem:[%s875 + $0x34] sm:$0xf] %v815
      %883 = vst [vmem:[%s875 + $0x38] sm:$0xf] %v816
      %884 = vst [vmem:[%s875 + $0x44] sm:$0xf] %v817
      %885 = vst [vmem:[%s875 + $0x48] sm:$0xf] %v818
      %886 = vst [vmem:[%s875 + $0x54] sm:$0xf] %v819
      %887 = vst [vmem:[%s875 + $0x58] sm:$0xf] %v820
      %888 = vst [vmem:[%s875 + $0x64] sm:$0xf] %v821
      %889 = vst [vmem:[%s875 + $0x68] sm:$0xf] %v822
      %890 = vst [vmem:[%s875 + $0x74] sm:$0xf] %v823
      %891 = vst [vmem:[%s875 + $0x78] sm:$0xf] %v824
      %892 = vst [vmem:[%s875 + $0x84] sm:$0xf] %v825
      %893 = vst [vmem:[%s875 + $0x88] sm:$0xf] %v826
      %894 = vst [vmem:[%s875 + $0x94] sm:$0xf] %v827
      %895 = vst [vmem:[%s875 + $0x98] sm:$0xf] %v828
      %896 = vst [vmem:[%s875 + $0xa4] sm:$0xf] %v829
      %897 = vst [vmem:[%s875 + $0xa8] sm:$0xf] %v830
      %898 = vst [vmem:[%s875 + $0xb4] sm:$0xf] %v831
      %899 = vst [vmem:[%s875 + $0xb8] sm:$0xf] %v832
      %900 = vst [vmem:[%s875 + $0xc4] sm:$0xf] %v833
      %901 = vst [vmem:[%s875 + $0xc8] sm:$0xf] %v834
      %902 = vst [vmem:[%s875 + $0xd4] sm:$0xf] %v835
      %903 = vst [vmem:[%s875 + $0xd8] sm:$0xf] %v836
      %904 = vst [vmem:[%s875 + $0xe4] sm:$0xf] %v837
      %905 = vst [vmem:[%s875 + $0xe8] sm:$0xf] %v838
      %906 = vst [vmem:[%s875 + $0xf4] sm:$0xf] %v839
      %907 = vst [vmem:[%s875 + $0xf8] sm:$0xf] %v840
      %s908 = smul.u32 0, 4
      %s909 = smul.addr %s908, 4
      %s910 = scalar_lea.vmem [#allocation2], %s909
      %v911 = vld [vmem:[%s910] sm:$0x8]
      %v912 = vld [vmem:[%s910 + $0x4] sm:$0xf]
      %v913 = vld [vmem:[%s910 + $0x8] sm:$0xf]
      %v914 = vld [vmem:[%s910 + $0x10] sm:$0x8]
      %v915 = vld [vmem:[%s910 + $0x14] sm:$0xf]
      %v916 = vld [vmem:[%s910 + $0x18] sm:$0xf]
      %v917 = vld [vmem:[%s910 + $0x20] sm:$0x8]
      %v918 = vld [vmem:[%s910 + $0x24] sm:$0xf]
      %v919 = vld [vmem:[%s910 + $0x28] sm:$0xf]
      %v920 = vld [vmem:[%s910 + $0x30] sm:$0x8]
      %v921 = vld [vmem:[%s910 + $0x34] sm:$0xf]
      %v922 = vld [vmem:[%s910 + $0x38] sm:$0xf]
      %v923 = vld [vmem:[%s910 + $0x40] sm:$0x8]
      %v924 = vld [vmem:[%s910 + $0x44] sm:$0xf]
      %v925 = vld [vmem:[%s910 + $0x48] sm:$0xf]
      %v926 = vld [vmem:[%s910 + $0x50] sm:$0x8]
      %v927 = vld [vmem:[%s910 + $0x54] sm:$0xf]
      %v928 = vld [vmem:[%s910 + $0x58] sm:$0xf]
      %v929 = vld [vmem:[%s910 + $0x60] sm:$0x8]
      %v930 = vld [vmem:[%s910 + $0x64] sm:$0xf]
      %v931 = vld [vmem:[%s910 + $0x68] sm:$0xf]
      %v932 = vld [vmem:[%s910 + $0x70] sm:$0x8]
      %v933 = vld [vmem:[%s910 + $0x74] sm:$0xf]
      %v934 = vld [vmem:[%s910 + $0x78] sm:$0xf]
      %v935 = vld [vmem:[%s910 + $0x80] sm:$0x8]
      %v936 = vld [vmem:[%s910 + $0x84] sm:$0xf]
      %v937 = vld [vmem:[%s910 + $0x88] sm:$0xf]
      %v938 = vld [vmem:[%s910 + $0x90] sm:$0x8]
      %v939 = vld [vmem:[%s910 + $0x94] sm:$0xf]
      %v940 = vld [vmem:[%s910 + $0x98] sm:$0xf]
      %v941 = vld [vmem:[%s910 + $0xa0] sm:$0x8]
      %v942 = vld [vmem:[%s910 + $0xa4] sm:$0xf]
      %v943 = vld [vmem:[%s910 + $0xa8] sm:$0xf]
      %v944 = vld [vmem:[%s910 + $0xb0] sm:$0x8]
      %v945 = vld [vmem:[%s910 + $0xb4] sm:$0xf]
      %v946 = vld [vmem:[%s910 + $0xb8] sm:$0xf]
      %v947 = vld [vmem:[%s910 + $0xc0] sm:$0x8]
      %v948 = vld [vmem:[%s910 + $0xc4] sm:$0xf]
      %v949 = vld [vmem:[%s910 + $0xc8] sm:$0xf]
      %v950 = vld [vmem:[%s910 + $0xd0] sm:$0x8]
      %v951 = vld [vmem:[%s910 + $0xd4] sm:$0xf]
      %v952 = vld [vmem:[%s910 + $0xd8] sm:$0xf]
      %v953 = vld [vmem:[%s910 + $0xe0] sm:$0x8]
      %v954 = vld [vmem:[%s910 + $0xe4] sm:$0xf]
      %v955 = vld [vmem:[%s910 + $0xe8] sm:$0xf]
      %v956 = vld [vmem:[%s910 + $0xf0] sm:$0x8]
      %v957 = vld [vmem:[%s910 + $0xf4] sm:$0xf]
      %v958 = vld [vmem:[%s910 + $0xf8] sm:$0xf]
      %vm959 = vsmask.f32 4368
      %vm960 = vmor %vm293, %vm959
      %v962 = vshrl.u32 %v911, 16
      %v964 = vrot.slane %v962, 7
      %v965 = vrot.slane %v964, 4
      %v967 = vshrl.u32 %v912, 16
      %v969 = vrot.slane %v967, 7
      %v970 = vshll.u32 %v912, 16
      %v972 = vor.u32 %v969, %v970
      %v973 = vsel %vm960, %v965, %v972
      %v974 = vrot.slane %v969, 4
      %v976 = vshrl.u32 %v913, 16
      %v978 = vrot.slane %v976, 7
      %v979 = vshll.u32 %v913, 16
      %v981 = vor.u32 %v978, %v979
      %v982 = vsel %vm960, %v974, %v981
      %v984 = vshrl.u32 %v914, 16
      %v986 = vrot.slane %v984, 7
      %v987 = vrot.slane %v986, 4
      %v989 = vshrl.u32 %v915, 16
      %v991 = vrot.slane %v989, 7
      %v992 = vshll.u32 %v915, 16
      %v994 = vor.u32 %v991, %v992
      %v995 = vsel %vm960, %v987, %v994
      %v996 = vrot.slane %v991, 4
      %v998 = vshrl.u32 %v916, 16
      %v1000 = vrot.slane %v998, 7
      %v1001 = vshll.u32 %v916, 16
      %v1003 = vor.u32 %v1000, %v1001
      %v1004 = vsel %vm960, %v996, %v1003
      %v1006 = vshrl.u32 %v917, 16
      %v1008 = vrot.slane %v1006, 7
      %v1009 = vrot.slane %v1008, 4
      %v1011 = vshrl.u32 %v918, 16
      %v1013 = vrot.slane %v1011, 7
      %v1014 = vshll.u32 %v918, 16
      %v1016 = vor.u32 %v1013, %v1014
      %v1017 = vsel %vm960, %v1009, %v1016
      %v1018 = vrot.slane %v1013, 4
      %v1020 = vshrl.u32 %v919, 16
      %v1022 = vrot.slane %v1020, 7
      %v1023 = vshll.u32 %v919, 16
      %v1025 = vor.u32 %v1022, %v1023
      %v1026 = vsel %vm960, %v1018, %v1025
      %v1028 = vshrl.u32 %v920, 16
      %v1030 = vrot.slane %v1028, 7
      %v1031 = vrot.slane %v1030, 4
      %v1033 = vshrl.u32 %v921, 16
      %v1035 = vrot.slane %v1033, 7
      %v1036 = vshll.u32 %v921, 16
      %v1038 = vor.u32 %v1035, %v1036
      %v1039 = vsel %vm960, %v1031, %v1038
      %v1040 = vrot.slane %v1035, 4
      %v1042 = vshrl.u32 %v922, 16
      %v1044 = vrot.slane %v1042, 7
      %v1045 = vshll.u32 %v922, 16
      %v1047 = vor.u32 %v1044, %v1045
      %v1048 = vsel %vm960, %v1040, %v1047
      %v1050 = vshrl.u32 %v923, 16
      %v1052 = vrot.slane %v1050, 7
      %v1053 = vrot.slane %v1052, 4
      %v1055 = vshrl.u32 %v924, 16
      %v1057 = vrot.slane %v1055, 7
      %v1058 = vshll.u32 %v924, 16
      %v1060 = vor.u32 %v1057, %v1058
      %v1061 = vsel %vm960, %v1053, %v1060
      %v1062 = vrot.slane %v1057, 4
      %v1064 = vshrl.u32 %v925, 16
      %v1066 = vrot.slane %v1064, 7
      %v1067 = vshll.u32 %v925, 16
      %v1069 = vor.u32 %v1066, %v1067
      %v1070 = vsel %vm960, %v1062, %v1069
      %v1072 = vshrl.u32 %v926, 16
      %v1074 = vrot.slane %v1072, 7
      %v1075 = vrot.slane %v1074, 4
      %v1077 = vshrl.u32 %v927, 16
      %v1079 = vrot.slane %v1077, 7
      %v1080 = vshll.u32 %v927, 16
      %v1082 = vor.u32 %v1079, %v1080
      %v1083 = vsel %vm960, %v1075, %v1082
      %v1084 = vrot.slane %v1079, 4
      %v1086 = vshrl.u32 %v928, 16
      %v1088 = vrot.slane %v1086, 7
      %v1089 = vshll.u32 %v928, 16
      %v1091 = vor.u32 %v1088, %v1089
      %v1092 = vsel %vm960, %v1084, %v1091
      %v1094 = vshrl.u32 %v929, 16
      %v1096 = vrot.slane %v1094, 7
      %v1097 = vrot.slane %v1096, 4
      %v1099 = vshrl.u32 %v930, 16
      %v1101 = vrot.slane %v1099, 7
      %v1102 = vshll.u32 %v930, 16
      %v1104 = vor.u32 %v1101, %v1102
      %v1105 = vsel %vm960, %v1097, %v1104
      %v1106 = vrot.slane %v1101, 4
      %v1108 = vshrl.u32 %v931, 16
      %v1110 = vrot.slane %v1108, 7
      %v1111 = vshll.u32 %v931, 16
      %v1113 = vor.u32 %v1110, %v1111
      %v1114 = vsel %vm960, %v1106, %v1113
      %v1116 = vshrl.u32 %v932, 16
      %v1118 = vrot.slane %v1116, 7
      %v1119 = vrot.slane %v1118, 4
      %v1121 = vshrl.u32 %v933, 16
      %v1123 = vrot.slane %v1121, 7
      %v1124 = vshll.u32 %v933, 16
      %v1126 = vor.u32 %v1123, %v1124
      %v1127 = vsel %vm960, %v1119, %v1126
      %v1128 = vrot.slane %v1123, 4
      %v1130 = vshrl.u32 %v934, 16
      %v1132 = vrot.slane %v1130, 7
      %v1133 = vshll.u32 %v934, 16
      %v1135 = vor.u32 %v1132, %v1133
      %v1136 = vsel %vm960, %v1128, %v1135
      %v1138 = vshrl.u32 %v935, 16
      %v1140 = vrot.slane %v1138, 7
      %v1141 = vrot.slane %v1140, 4
      %v1143 = vshrl.u32 %v936, 16
      %v1145 = vrot.slane %v1143, 7
      %v1146 = vshll.u32 %v936, 16
      %v1148 = vor.u32 %v1145, %v1146
      %v1149 = vsel %vm960, %v1141, %v1148
      %v1150 = vrot.slane %v1145, 4
      %v1152 = vshrl.u32 %v937, 16
      %v1154 = vrot.slane %v1152, 7
      %v1155 = vshll.u32 %v937, 16
      %v1157 = vor.u32 %v1154, %v1155
      %v1158 = vsel %vm960, %v1150, %v1157
      %v1160 = vshrl.u32 %v938, 16
      %v1162 = vrot.slane %v1160, 7
      %v1163 = vrot.slane %v1162, 4
      %v1165 = vshrl.u32 %v939, 16
      %v1167 = vrot.slane %v1165, 7
      %v1168 = vshll.u32 %v939, 16
      %v1170 = vor.u32 %v1167, %v1168
      %v1171 = vsel %vm960, %v1163, %v1170
      %v1172 = vrot.slane %v1167, 4
      %v1174 = vshrl.u32 %v940, 16
      %v1176 = vrot.slane %v1174, 7
      %v1177 = vshll.u32 %v940, 16
      %v1179 = vor.u32 %v1176, %v1177
      %v1180 = vsel %vm960, %v1172, %v1179
      %v1182 = vshrl.u32 %v941, 16
      %v1184 = vrot.slane %v1182, 7
      %v1185 = vrot.slane %v1184, 4
      %v1187 = vshrl.u32 %v942, 16
      %v1189 = vrot.slane %v1187, 7
      %v1190 = vshll.u32 %v942, 16
      %v1192 = vor.u32 %v1189, %v1190
      %v1193 = vsel %vm960, %v1185, %v1192
      %v1194 = vrot.slane %v1189, 4
      %v1196 = vshrl.u32 %v943, 16
      %v1198 = vrot.slane %v1196, 7
      %v1199 = vshll.u32 %v943, 16
      %v1201 = vor.u32 %v1198, %v1199
      %v1202 = vsel %vm960, %v1194, %v1201
      %v1204 = vshrl.u32 %v944, 16
      %v1206 = vrot.slane %v1204, 7
      %v1207 = vrot.slane %v1206, 4
      %v1209 = vshrl.u32 %v945, 16
      %v1211 = vrot.slane %v1209, 7
      %v1212 = vshll.u32 %v945, 16
      %v1214 = vor.u32 %v1211, %v1212
      %v1215 = vsel %vm960, %v1207, %v1214
      %v1216 = vrot.slane %v1211, 4
      %v1218 = vshrl.u32 %v946, 16
      %v1220 = vrot.slane %v1218, 7
      %v1221 = vshll.u32 %v946, 16
      %v1223 = vor.u32 %v1220, %v1221
      %v1224 = vsel %vm960, %v1216, %v1223
      %v1226 = vshrl.u32 %v947, 16
      %v1228 = vrot.slane %v1226, 7
      %v1229 = vrot.slane %v1228, 4
      %v1231 = vshrl.u32 %v948, 16
      %v1233 = vrot.slane %v1231, 7
      %v1234 = vshll.u32 %v948, 16
      %v1236 = vor.u32 %v1233, %v1234
      %v1237 = vsel %vm960, %v1229, %v1236
      %v1238 = vrot.slane %v1233, 4
      %v1240 = vshrl.u32 %v949, 16
      %v1242 = vrot.slane %v1240, 7
      %v1243 = vshll.u32 %v949, 16
      %v1245 = vor.u32 %v1242, %v1243
      %v1246 = vsel %vm960, %v1238, %v1245
      %v1248 = vshrl.u32 %v950, 16
      %v1250 = vrot.slane %v1248, 7
      %v1251 = vrot.slane %v1250, 4
      %v1253 = vshrl.u32 %v951, 16
      %v1255 = vrot.slane %v1253, 7
      %v1256 = vshll.u32 %v951, 16
      %v1258 = vor.u32 %v1255, %v1256
      %v1259 = vsel %vm960, %v1251, %v1258
      %v1260 = vrot.slane %v1255, 4
      %v1262 = vshrl.u32 %v952, 16
      %v1264 = vrot.slane %v1262, 7
      %v1265 = vshll.u32 %v952, 16
      %v1267 = vor.u32 %v1264, %v1265
      %v1268 = vsel %vm960, %v1260, %v1267
      %v1270 = vshrl.u32 %v953, 16
      %v1272 = vrot.slane %v1270, 7
      %v1273 = vrot.slane %v1272, 4
      %v1275 = vshrl.u32 %v954, 16
      %v1277 = vrot.slane %v1275, 7
      %v1278 = vshll.u32 %v954, 16
      %v1280 = vor.u32 %v1277, %v1278
      %v1281 = vsel %vm960, %v1273, %v1280
      %v1282 = vrot.slane %v1277, 4
      %v1284 = vshrl.u32 %v955, 16
      %v1286 = vrot.slane %v1284, 7
      %v1287 = vshll.u32 %v955, 16
      %v1289 = vor.u32 %v1286, %v1287
      %v1290 = vsel %vm960, %v1282, %v1289
      %v1292 = vshrl.u32 %v956, 16
      %v1294 = vrot.slane %v1292, 7
      %v1295 = vrot.slane %v1294, 4
      %v1297 = vshrl.u32 %v957, 16
      %v1299 = vrot.slane %v1297, 7
      %v1300 = vshll.u32 %v957, 16
      %v1302 = vor.u32 %v1299, %v1300
      %v1303 = vsel %vm960, %v1295, %v1302
      %v1304 = vrot.slane %v1299, 4
      %v1306 = vshrl.u32 %v958, 16
      %v1308 = vrot.slane %v1306, 7
      %v1309 = vshll.u32 %v958, 16
      %v1311 = vor.u32 %v1308, %v1309
      %v1312 = vsel %vm960, %v1304, %v1311
      %v1313 = vld [vmem:[%s910 + $0xc] sm:$0x1]
      %v1314 = vld [vmem:[%s910 + $0x1c] sm:$0x1]
      %v1315 = vld [vmem:[%s910 + $0x2c] sm:$0x1]
      %v1316 = vld [vmem:[%s910 + $0x3c] sm:$0x1]
      %v1317 = vld [vmem:[%s910 + $0x4c] sm:$0x1]
      %v1318 = vld [vmem:[%s910 + $0x5c] sm:$0x1]
      %v1319 = vld [vmem:[%s910 + $0x6c] sm:$0x1]
      %v1320 = vld [vmem:[%s910 + $0x7c] sm:$0x1]
      %v1321 = vld [vmem:[%s910 + $0x8c] sm:$0x1]
      %v1322 = vld [vmem:[%s910 + $0x9c] sm:$0x1]
      %v1323 = vld [vmem:[%s910 + $0xac] sm:$0x1]
      %v1324 = vld [vmem:[%s910 + $0xbc] sm:$0x1]
      %v1325 = vld [vmem:[%s910 + $0xcc] sm:$0x1]
      %v1326 = vld [vmem:[%s910 + $0xdc] sm:$0x1]
      %v1327 = vld [vmem:[%s910 + $0xec] sm:$0x1]
      %v1328 = vld [vmem:[%s910 + $0xfc] sm:$0x1]
      %vm1329 = vsmask.f32 3328
      %vm1330 = vsmask.f32 7440
      %vm1331 = vmor %vm1329, %vm1330
      %v1332 = vrot.slane %v967, 4
      %v1333 = vrot.slane %v970, 5
      %v1334 = vor.u32 %v1332, %v1333
      %v1335 = vrot.slane %v1334, 4
      %v1336 = vrot.slane %v979, 5
      %v1337 = vsel %vm1331, %v1335, %v1336
      %v1338 = vrot.slane %v976, 4
      %v1339 = vor.u32 %v1338, %v1336
      %v1340 = vrot.slane %v1339, 4
      %v1342 = vshll.u32 %v1313, 16
      %v1344 = vrot.slane %v1342, 5
      %v1345 = vsel %vm1331, %v1340, %v1344
      %v1346 = vrot.slane %v989, 4
      %v1347 = vrot.slane %v992, 5
      %v1348 = vor.u32 %v1346, %v1347
      %v1349 = vrot.slane %v1348, 4
      %v1350 = vrot.slane %v1001, 5
      %v1351 = vsel %vm1331, %v1349, %v1350
      %v1352 = vrot.slane %v998, 4
      %v1353 = vor.u32 %v1352, %v1350
      %v1354 = vrot.slane %v1353, 4
      %v1356 = vshll.u32 %v1314, 16
      %v1358 = vrot.slane %v1356, 5
      %v1359 = vsel %vm1331, %v1354, %v1358
      %v1360 = vrot.slane %v1011, 4
      %v1361 = vrot.slane %v1014, 5
      %v1362 = vor.u32 %v1360, %v1361
      %v1363 = vrot.slane %v1362, 4
      %v1364 = vrot.slane %v1023, 5
      %v1365 = vsel %vm1331, %v1363, %v1364
      %v1366 = vrot.slane %v1020, 4
      %v1367 = vor.u32 %v1366, %v1364
      %v1368 = vrot.slane %v1367, 4
      %v1370 = vshll.u32 %v1315, 16
      %v1372 = vrot.slane %v1370, 5
      %v1373 = vsel %vm1331, %v1368, %v1372
      %v1374 = vrot.slane %v1033, 4
      %v1375 = vrot.slane %v1036, 5
      %v1376 = vor.u32 %v1374, %v1375
      %v1377 = vrot.slane %v1376, 4
      %v1378 = vrot.slane %v1045, 5
      %v1379 = vsel %vm1331, %v1377, %v1378
      %v1380 = vrot.slane %v1042, 4
      %v1381 = vor.u32 %v1380, %v1378
      %v1382 = vrot.slane %v1381, 4
      %v1384 = vshll.u32 %v1316, 16
      %v1386 = vrot.slane %v1384, 5
      %v1387 = vsel %vm1331, %v1382, %v1386
      %v1388 = vrot.slane %v1055, 4
      %v1389 = vrot.slane %v1058, 5
      %v1390 = vor.u32 %v1388, %v1389
      %v1391 = vrot.slane %v1390, 4
      %v1392 = vrot.slane %v1067, 5
      %v1393 = vsel %vm1331, %v1391, %v1392
      %v1394 = vrot.slane %v1064, 4
      %v1395 = vor.u32 %v1394, %v1392
      %v1396 = vrot.slane %v1395, 4
      %v1398 = vshll.u32 %v1317, 16
      %v1400 = vrot.slane %v1398, 5
      %v1401 = vsel %vm1331, %v1396, %v1400
      %v1402 = vrot.slane %v1077, 4
      %v1403 = vrot.slane %v1080, 5
      %v1404 = vor.u32 %v1402, %v1403
      %v1405 = vrot.slane %v1404, 4
      %v1406 = vrot.slane %v1089, 5
      %v1407 = vsel %vm1331, %v1405, %v1406
      %v1408 = vrot.slane %v1086, 4
      %v1409 = vor.u32 %v1408, %v1406
      %v1410 = vrot.slane %v1409, 4
      %v1412 = vshll.u32 %v1318, 16
      %v1414 = vrot.slane %v1412, 5
      %v1415 = vsel %vm1331, %v1410, %v1414
      %v1416 = vrot.slane %v1099, 4
      %v1417 = vrot.slane %v1102, 5
      %v1418 = vor.u32 %v1416, %v1417
      %v1419 = vrot.slane %v1418, 4
      %v1420 = vrot.slane %v1111, 5
      %v1421 = vsel %vm1331, %v1419, %v1420
      %v1422 = vrot.slane %v1108, 4
      %v1423 = vor.u32 %v1422, %v1420
      %v1424 = vrot.slane %v1423, 4
      %v1426 = vshll.u32 %v1319, 16
      %v1428 = vrot.slane %v1426, 5
      %v1429 = vsel %vm1331, %v1424, %v1428
      %v1430 = vrot.slane %v1121, 4
      %v1431 = vrot.slane %v1124, 5
      %v1432 = vor.u32 %v1430, %v1431
      %v1433 = vrot.slane %v1432, 4
      %v1434 = vrot.slane %v1133, 5
      %v1435 = vsel %vm1331, %v1433, %v1434
      %v1436 = vrot.slane %v1130, 4
      %v1437 = vor.u32 %v1436, %v1434
      %v1438 = vrot.slane %v1437, 4
      %v1440 = vshll.u32 %v1320, 16
      %v1442 = vrot.slane %v1440, 5
      %v1443 = vsel %vm1331, %v1438, %v1442
      %v1444 = vrot.slane %v1143, 4
      %v1445 = vrot.slane %v1146, 5
      %v1446 = vor.u32 %v1444, %v1445
      %v1447 = vrot.slane %v1446, 4
      %v1448 = vrot.slane %v1155, 5
      %v1449 = vsel %vm1331, %v1447, %v1448
      %v1450 = vrot.slane %v1152, 4
      %v1451 = vor.u32 %v1450, %v1448
      %v1452 = vrot.slane %v1451, 4
      %v1454 = vshll.u32 %v1321, 16
      %v1456 = vrot.slane %v1454, 5
      %v1457 = vsel %vm1331, %v1452, %v1456
      %v1458 = vrot.slane %v1165, 4
      %v1459 = vrot.slane %v1168, 5
      %v1460 = vor.u32 %v1458, %v1459
      %v1461 = vrot.slane %v1460, 4
      %v1462 = vrot.slane %v1177, 5
      %v1463 = vsel %vm1331, %v1461, %v1462
      %v1464 = vrot.slane %v1174, 4
      %v1465 = vor.u32 %v1464, %v1462
      %v1466 = vrot.slane %v1465, 4
      %v1468 = vshll.u32 %v1322, 16
      %v1470 = vrot.slane %v1468, 5
      %v1471 = vsel %vm1331, %v1466, %v1470
      %v1472 = vrot.slane %v1187, 4
      %v1473 = vrot.slane %v1190, 5
      %v1474 = vor.u32 %v1472, %v1473
      %v1475 = vrot.slane %v1474, 4
      %v1476 = vrot.slane %v1199, 5
      %v1477 = vsel %vm1331, %v1475, %v1476
      %v1478 = vrot.slane %v1196, 4
      %v1479 = vor.u32 %v1478, %v1476
      %v1480 = vrot.slane %v1479, 4
      %v1482 = vshll.u32 %v1323, 16
      %v1484 = vrot.slane %v1482, 5
      %v1485 = vsel %vm1331, %v1480, %v1484
      %v1486 = vrot.slane %v1209, 4
      %v1487 = vrot.slane %v1212, 5
      %v1488 = vor.u32 %v1486, %v1487
      %v1489 = vrot.slane %v1488, 4
      %v1490 = vrot.slane %v1221, 5
      %v1491 = vsel %vm1331, %v1489, %v1490
      %v1492 = vrot.slane %v1218, 4
      %v1493 = vor.u32 %v1492, %v1490
      %v1494 = vrot.slane %v1493, 4
      %v1496 = vshll.u32 %v1324, 16
      %v1498 = vrot.slane %v1496, 5
      %v1499 = vsel %vm1331, %v1494, %v1498
      %v1500 = vrot.slane %v1231, 4
      %v1501 = vrot.slane %v1234, 5
      %v1502 = vor.u32 %v1500, %v1501
      %v1503 = vrot.slane %v1502, 4
      %v1504 = vrot.slane %v1243, 5
      %v1505 = vsel %vm1331, %v1503, %v1504
      %v1506 = vrot.slane %v1240, 4
      %v1507 = vor.u32 %v1506, %v1504
      %v1508 = vrot.slane %v1507, 4
      %v1510 = vshll.u32 %v1325, 16
      %v1512 = vrot.slane %v1510, 5
      %v1513 = vsel %vm1331, %v1508, %v1512
      %v1514 = vrot.slane %v1253, 4
      %v1515 = vrot.slane %v1256, 5
      %v1516 = vor.u32 %v1514, %v1515
      %v1517 = vrot.slane %v1516, 4
      %v1518 = vrot.slane %v1265, 5
      %v1519 = vsel %vm1331, %v1517, %v1518
      %v1520 = vrot.slane %v1262, 4
      %v1521 = vor.u32 %v1520, %v1518
      %v1522 = vrot.slane %v1521, 4
      %v1524 = vshll.u32 %v1326, 16
      %v1526 = vrot.slane %v1524, 5
      %v1527 = vsel %vm1331, %v1522, %v1526
      %v1528 = vrot.slane %v1275, 4
      %v1529 = vrot.slane %v1278, 5
      %v1530 = vor.u32 %v1528, %v1529
      %v1531 = vrot.slane %v1530, 4
      %v1532 = vrot.slane %v1287, 5
      %v1533 = vsel %vm1331, %v1531, %v1532
      %v1534 = vrot.slane %v1284, 4
      %v1535 = vor.u32 %v1534, %v1532
      %v1536 = vrot.slane %v1535, 4
      %v1538 = vshll.u32 %v1327, 16
      %v1540 = vrot.slane %v1538, 5
      %v1541 = vsel %vm1331, %v1536, %v1540
      %v1542 = vrot.slane %v1297, 4
      %v1543 = vrot.slane %v1300, 5
      %v1544 = vor.u32 %v1542, %v1543
      %v1545 = vrot.slane %v1544, 4
      %v1546 = vrot.slane %v1309, 5
      %v1547 = vsel %vm1331, %v1545, %v1546
      %v1548 = vrot.slane %v1306, 4
      %v1549 = vor.u32 %v1548, %v1546
      %v1550 = vrot.slane %v1549, 4
      %v1552 = vshll.u32 %v1328, 16
      %v1554 = vrot.slane %v1552, 5
      %v1555 = vsel %vm1331, %v1550, %v1554
      %v1556 = vunpack.c.l.b16 %v973
      %v1557 = vunpack.c.l.b16 %v982
      %v1558 = vunpack.c.l.b16 %v995
      %v1559 = vunpack.c.l.b16 %v1004
      %v1560 = vunpack.c.l.b16 %v1017
      %v1561 = vunpack.c.l.b16 %v1026
      %v1562 = vunpack.c.l.b16 %v1039
      %v1563 = vunpack.c.l.b16 %v1048
      %v1564 = vunpack.c.l.b16 %v1061
      %v1565 = vunpack.c.l.b16 %v1070
      %v1566 = vunpack.c.l.b16 %v1083
      %v1567 = vunpack.c.l.b16 %v1092
      %v1568 = vunpack.c.l.b16 %v1105
      %v1569 = vunpack.c.l.b16 %v1114
      %v1570 = vunpack.c.l.b16 %v1127
      %v1571 = vunpack.c.l.b16 %v1136
      %v1572 = vunpack.c.l.b16 %v1149
      %v1573 = vunpack.c.l.b16 %v1158
      %v1574 = vunpack.c.l.b16 %v1171
      %v1575 = vunpack.c.l.b16 %v1180
      %v1576 = vunpack.c.l.b16 %v1193
      %v1577 = vunpack.c.l.b16 %v1202
      %v1578 = vunpack.c.l.b16 %v1215
      %v1579 = vunpack.c.l.b16 %v1224
      %v1580 = vunpack.c.l.b16 %v1237
      %v1581 = vunpack.c.l.b16 %v1246
      %v1582 = vunpack.c.l.b16 %v1259
      %v1583 = vunpack.c.l.b16 %v1268
      %v1584 = vunpack.c.l.b16 %v1281
      %v1585 = vunpack.c.l.b16 %v1290
      %v1586 = vunpack.c.l.b16 %v1303
      %v1587 = vunpack.c.l.b16 %v1312
      %v1588 = vpack.c.b16 %v1557, %v1556
      %v1589 = vpack.c.b16 %v1559, %v1558
      %v1590 = vpack.c.b16 %v1561, %v1560
      %v1591 = vpack.c.b16 %v1563, %v1562
      %v1592 = vpack.c.b16 %v1565, %v1564
      %v1593 = vpack.c.b16 %v1567, %v1566
      %v1594 = vpack.c.b16 %v1569, %v1568
      %v1595 = vpack.c.b16 %v1571, %v1570
      %v1596 = vpack.c.b16 %v1573, %v1572
      %v1597 = vpack.c.b16 %v1575, %v1574
      %v1598 = vpack.c.b16 %v1577, %v1576
      %v1599 = vpack.c.b16 %v1579, %v1578
      %v1600 = vpack.c.b16 %v1581, %v1580
      %v1601 = vpack.c.b16 %v1583, %v1582
      %v1602 = vpack.c.b16 %v1585, %v1584
      %v1603 = vpack.c.b16 %v1587, %v1586
      %v1652 = vunpack.c.l.b16 %v912
      %v1653 = vunpack.c.l.b16 %v913
      %v1654 = vunpack.c.l.b16 %v915
      %v1655 = vunpack.c.l.b16 %v916
      %v1656 = vunpack.c.l.b16 %v918
      %v1657 = vunpack.c.l.b16 %v919
      %v1658 = vunpack.c.l.b16 %v921
      %v1659 = vunpack.c.l.b16 %v922
      %v1660 = vunpack.c.l.b16 %v924
      %v1661 = vunpack.c.l.b16 %v925
      %v1662 = vunpack.c.l.b16 %v927
      %v1663 = vunpack.c.l.b16 %v928
      %v1664 = vunpack.c.l.b16 %v930
      %v1665 = vunpack.c.l.b16 %v931
      %v1666 = vunpack.c.l.b16 %v933
      %v1667 = vunpack.c.l.b16 %v934
      %v1668 = vunpack.c.l.b16 %v936
      %v1669 = vunpack.c.l.b16 %v937
      %v1670 = vunpack.c.l.b16 %v939
      %v1671 = vunpack.c.l.b16 %v940
      %v1672 = vunpack.c.l.b16 %v942
      %v1673 = vunpack.c.l.b16 %v943
      %v1674 = vunpack.c.l.b16 %v945
      %v1675 = vunpack.c.l.b16 %v946
      %v1676 = vunpack.c.l.b16 %v948
      %v1677 = vunpack.c.l.b16 %v949
      %v1678 = vunpack.c.l.b16 %v951
      %v1679 = vunpack.c.l.b16 %v952
      %v1680 = vunpack.c.l.b16 %v954
      %v1681 = vunpack.c.l.b16 %v955
      %v1682 = vunpack.c.l.b16 %v957
      %v1683 = vunpack.c.l.b16 %v958
      %v1684 = vpack.c.b16 %v1653, %v1652
      %v1685 = vpack.c.b16 %v1655, %v1654
      %v1686 = vpack.c.b16 %v1657, %v1656
      %v1687 = vpack.c.b16 %v1659, %v1658
      %v1688 = vpack.c.b16 %v1661, %v1660
      %v1689 = vpack.c.b16 %v1663, %v1662
      %v1690 = vpack.c.b16 %v1665, %v1664
      %v1691 = vpack.c.b16 %v1667, %v1666
      %v1692 = vpack.c.b16 %v1669, %v1668
      %v1693 = vpack.c.b16 %v1671, %v1670
      %v1694 = vpack.c.b16 %v1673, %v1672
      %v1695 = vpack.c.b16 %v1675, %v1674
      %v1696 = vpack.c.b16 %v1677, %v1676
      %v1697 = vpack.c.b16 %v1679, %v1678
      %v1698 = vpack.c.b16 %v1681, %v1680
      %v1699 = vpack.c.b16 %v1683, %v1682
      %v1716 = vunpack.c.l.b16 %v1337
      %v1717 = vunpack.c.l.b16 %v1345
      %v1718 = vunpack.c.l.b16 %v1351
      %v1719 = vunpack.c.l.b16 %v1359
      %v1720 = vunpack.c.l.b16 %v1365
      %v1721 = vunpack.c.l.b16 %v1373
      %v1722 = vunpack.c.l.b16 %v1379
      %v1723 = vunpack.c.l.b16 %v1387
      %v1724 = vunpack.c.l.b16 %v1393
      %v1725 = vunpack.c.l.b16 %v1401
      %v1726 = vunpack.c.l.b16 %v1407
      %v1727 = vunpack.c.l.b16 %v1415
      %v1728 = vunpack.c.l.b16 %v1421
      %v1729 = vunpack.c.l.b16 %v1429
      %v1730 = vunpack.c.l.b16 %v1435
      %v1731 = vunpack.c.l.b16 %v1443
      %v1732 = vunpack.c.l.b16 %v1449
      %v1733 = vunpack.c.l.b16 %v1457
      %v1734 = vunpack.c.l.b16 %v1463
      %v1735 = vunpack.c.l.b16 %v1471
      %v1736 = vunpack.c.l.b16 %v1477
      %v1737 = vunpack.c.l.b16 %v1485
      %v1738 = vunpack.c.l.b16 %v1491
      %v1739 = vunpack.c.l.b16 %v1499
      %v1740 = vunpack.c.l.b16 %v1505
      %v1741 = vunpack.c.l.b16 %v1513
      %v1742 = vunpack.c.l.b16 %v1519
      %v1743 = vunpack.c.l.b16 %v1527
      %v1744 = vunpack.c.l.b16 %v1533
      %v1745 = vunpack.c.l.b16 %v1541
      %v1746 = vunpack.c.l.b16 %v1547
      %v1747 = vunpack.c.l.b16 %v1555
      %v1748 = vpack.c.b16 %v1717, %v1716
      %v1749 = vpack.c.b16 %v1719, %v1718
      %v1750 = vpack.c.b16 %v1721, %v1720
      %v1751 = vpack.c.b16 %v1723, %v1722
      %v1752 = vpack.c.b16 %v1725, %v1724
      %v1753 = vpack.c.b16 %v1727, %v1726
      %v1754 = vpack.c.b16 %v1729, %v1728
      %v1755 = vpack.c.b16 %v1731, %v1730
      %v1756 = vpack.c.b16 %v1733, %v1732
      %v1757 = vpack.c.b16 %v1735, %v1734
      %v1758 = vpack.c.b16 %v1737, %v1736
      %v1759 = vpack.c.b16 %v1739, %v1738
      %v1760 = vpack.c.b16 %v1741, %v1740
      %v1761 = vpack.c.b16 %v1743, %v1742
      %v1762 = vpack.c.b16 %v1745, %v1744
      %v1763 = vpack.c.b16 %v1747, %v1746
      %v1780 = vld [vmem:[%s3] sm:$0xf]
      %v1781 = vld [vmem:[%s3 + $0x4] sm:$0xf]
      %v1782 = vld [vmem:[%s3 + $0x8] sm:$0xf]
      %v1783 = vld [vmem:[%s3 + $0xc] sm:$0xf]
      %v1784 = vld [vmem:[%s3 + $0x10] sm:$0xf]
      %v1785 = vld [vmem:[%s3 + $0x14] sm:$0xf]
      %v1786 = vld [vmem:[%s3 + $0x18] sm:$0xf]
      %v1787 = vld [vmem:[%s3 + $0x1c] sm:$0xf]
      %v1788 = vld [vmem:[%s3 + $0x20] sm:$0xf]
      %v1789 = vld [vmem:[%s3 + $0x24] sm:$0xf]
      %v1790 = vld [vmem:[%s3 + $0x28] sm:$0xf]
      %v1791 = vld [vmem:[%s3 + $0x2c] sm:$0xf]
      %v1792 = vld [vmem:[%s3 + $0x30] sm:$0xf]
      %v1793 = vld [vmem:[%s3 + $0x34] sm:$0xf]
      %v1794 = vld [vmem:[%s3 + $0x38] sm:$0xf]
      %v1795 = vld [vmem:[%s3 + $0x3c] sm:$0xf]
      %v1796 = vld [vmem:[%s3 + $0x40] sm:$0xf]
      %v1797 = vld [vmem:[%s3 + $0x44] sm:$0xf]
      %v1798 = vld [vmem:[%s3 + $0x48] sm:$0xf]
      %v1799 = vld [vmem:[%s3 + $0x4c] sm:$0xf]
      %v1800 = vld [vmem:[%s3 + $0x50] sm:$0xf]
      %v1801 = vld [vmem:[%s3 + $0x54] sm:$0xf]
      %v1802 = vld [vmem:[%s3 + $0x58] sm:$0xf]
      %v1803 = vld [vmem:[%s3 + $0x5c] sm:$0xf]
      %v1804 = vld [vmem:[%s3 + $0x60] sm:$0xf]
      %v1805 = vld [vmem:[%s3 + $0x64] sm:$0xf]
      %v1806 = vld [vmem:[%s3 + $0x68] sm:$0xf]
      %v1807 = vld [vmem:[%s3 + $0x6c] sm:$0xf]
      %v1808 = vld [vmem:[%s3 + $0x70] sm:$0xf]
      %v1809 = vld [vmem:[%s3 + $0x74] sm:$0xf]
      %v1810 = vld [vmem:[%s3 + $0x78] sm:$0xf]
      %v1811 = vld [vmem:[%s3 + $0x7c] sm:$0xf]
      %v1812 = vld [vmem:[%s3 + $0x80] sm:$0xf]
      %v1813 = vld [vmem:[%s3 + $0x84] sm:$0xf]
      %v1814 = vld [vmem:[%s3 + $0x88] sm:$0xf]
      %v1815 = vld [vmem:[%s3 + $0x8c] sm:$0xf]
      %v1816 = vld [vmem:[%s3 + $0x90] sm:$0xf]
      %v1817 = vld [vmem:[%s3 + $0x94] sm:$0xf]
      %v1818 = vld [vmem:[%s3 + $0x98] sm:$0xf]
      %v1819 = vld [vmem:[%s3 + $0x9c] sm:$0xf]
      %v1820 = vld [vmem:[%s3 + $0xa0] sm:$0xf]
      %v1821 = vld [vmem:[%s3 + $0xa4] sm:$0xf]
      %v1822 = vld [vmem:[%s3 + $0xa8] sm:$0xf]
      %v1823 = vld [vmem:[%s3 + $0xac] sm:$0xf]
      %v1824 = vld [vmem:[%s3 + $0xb0] sm:$0xf]
      %v1825 = vld [vmem:[%s3 + $0xb4] sm:$0xf]
      %v1826 = vld [vmem:[%s3 + $0xb8] sm:$0xf]
      %v1827 = vld [vmem:[%s3 + $0xbc] sm:$0xf]
      %v1828 = vld [vmem:[%s875] sm:$0x8]
      %v1829 = vld [vmem:[%s875 + $0x4] sm:$0xf]
      %v1830 = vld [vmem:[%s875 + $0x8] sm:$0xf]
      %v1831 = vld [vmem:[%s875 + $0x10] sm:$0x8]
      %v1832 = vld [vmem:[%s875 + $0x14] sm:$0xf]
      %v1833 = vld [vmem:[%s875 + $0x18] sm:$0xf]
      %v1834 = vld [vmem:[%s875 + $0x20] sm:$0x8]
      %v1835 = vld [vmem:[%s875 + $0x24] sm:$0xf]
      %v1836 = vld [vmem:[%s875 + $0x28] sm:$0xf]
      %v1837 = vld [vmem:[%s875 + $0x30] sm:$0x8]
      %v1838 = vld [vmem:[%s875 + $0x34] sm:$0xf]
      %v1839 = vld [vmem:[%s875 + $0x38] sm:$0xf]
      %v1840 = vld [vmem:[%s875 + $0x40] sm:$0x8]
      %v1841 = vld [vmem:[%s875 + $0x44] sm:$0xf]
      %v1842 = vld [vmem:[%s875 + $0x48] sm:$0xf]
      %v1843 = vld [vmem:[%s875 + $0x50] sm:$0x8]
      %v1844 = vld [vmem:[%s875 + $0x54] sm:$0xf]
      %v1845 = vld [vmem:[%s875 + $0x58] sm:$0xf]
      %v1846 = vld [vmem:[%s875 + $0x60] sm:$0x8]
      %v1847 = vld [vmem:[%s875 + $0x64] sm:$0xf]
      %v1848 = vld [vmem:[%s875 + $0x68] sm:$0xf]
      %v1849 = vld [vmem:[%s875 + $0x70] sm:$0x8]
      %v1850 = vld [vmem:[%s875 + $0x74] sm:$0xf]
      %v1851 = vld [vmem:[%s875 + $0x78] sm:$0xf]
      %v1852 = vld [vmem:[%s875 + $0x80] sm:$0x8]
      %v1853 = vld [vmem:[%s875 + $0x84] sm:$0xf]
      %v1854 = vld [vmem:[%s875 + $0x88] sm:$0xf]
      %v1855 = vld [vmem:[%s875 + $0x90] sm:$0x8]
      %v1856 = vld [vmem:[%s875 + $0x94] sm:$0xf]
      %v1857 = vld [vmem:[%s875 + $0x98] sm:$0xf]
      %v1858 = vld [vmem:[%s875 + $0xa0] sm:$0x8]
      %v1859 = vld [vmem:[%s875 + $0xa4] sm:$0xf]
      %v1860 = vld [vmem:[%s875 + $0xa8] sm:$0xf]
      %v1861 = vld [vmem:[%s875 + $0xb0] sm:$0x8]
      %v1862 = vld [vmem:[%s875 + $0xb4] sm:$0xf]
      %v1863 = vld [vmem:[%s875 + $0xb8] sm:$0xf]
      %v1864 = vld [vmem:[%s875 + $0xc0] sm:$0x8]
      %v1865 = vld [vmem:[%s875 + $0xc4] sm:$0xf]
      %v1866 = vld [vmem:[%s875 + $0xc8] sm:$0xf]
      %v1867 = vld [vmem:[%s875 + $0xd0] sm:$0x8]
      %v1868 = vld [vmem:[%s875 + $0xd4] sm:$0xf]
      %v1869 = vld [vmem:[%s875 + $0xd8] sm:$0xf]
      %v1870 = vld [vmem:[%s875 + $0xe0] sm:$0x8]
      %v1871 = vld [vmem:[%s875 + $0xe4] sm:$0xf]
      %v1872 = vld [vmem:[%s875 + $0xe8] sm:$0xf]
      %v1873 = vld [vmem:[%s875 + $0xf0] sm:$0x8]
      %v1874 = vld [vmem:[%s875 + $0xf4] sm:$0xf]
      %v1875 = vld [vmem:[%s875 + $0xf8] sm:$0xf]
      %v1877 = vshrl.u32 %v1828, 16
      %v1879 = vrot.slane %v1877, 7
      %v1880 = vrot.slane %v1879, 4
      %v1882 = vshrl.u32 %v1829, 16
      %v1884 = vrot.slane %v1882, 7
      %v1885 = vshll.u32 %v1829, 16
      %v1887 = vor.u32 %v1884, %v1885
      %v1888 = vsel %vm960, %v1880, %v1887
      %v1889 = vrot.slane %v1884, 4
      %v1891 = vshrl.u32 %v1830, 16
      %v1893 = vrot.slane %v1891, 7
      %v1894 = vshll.u32 %v1830, 16
      %v1896 = vor.u32 %v1893, %v1894
      %v1897 = vsel %vm960, %v1889, %v1896
      %v1899 = vshrl.u32 %v1831, 16
      %v1901 = vrot.slane %v1899, 7
      %v1902 = vrot.slane %v1901, 4
      %v1904 = vshrl.u32 %v1832, 16
      %v1906 = vrot.slane %v1904, 7
      %v1907 = vshll.u32 %v1832, 16
      %v1909 = vor.u32 %v1906, %v1907
      %v1910 = vsel %vm960, %v1902, %v1909
      %v1911 = vrot.slane %v1906, 4
      %v1913 = vshrl.u32 %v1833, 16
      %v1915 = vrot.slane %v1913, 7
      %v1916 = vshll.u32 %v1833, 16
      %v1918 = vor.u32 %v1915, %v1916
      %v1919 = vsel %vm960, %v1911, %v1918
      %v1921 = vshrl.u32 %v1834, 16
      %v1923 = vrot.slane %v1921, 7
      %v1924 = vrot.slane %v1923, 4
      %v1926 = vshrl.u32 %v1835, 16
      %v1928 = vrot.slane %v1926, 7
      %v1929 = vshll.u32 %v1835, 16
      %v1931 = vor.u32 %v1928, %v1929
      %v1932 = vsel %vm960, %v1924, %v1931
      %v1933 = vrot.slane %v1928, 4
      %v1935 = vshrl.u32 %v1836, 16
      %v1937 = vrot.slane %v1935, 7
      %v1938 = vshll.u32 %v1836, 16
      %v1940 = vor.u32 %v1937, %v1938
      %v1941 = vsel %vm960, %v1933, %v1940
      %v1943 = vshrl.u32 %v1837, 16
      %v1945 = vrot.slane %v1943, 7
      %v1946 = vrot.slane %v1945, 4
      %v1948 = vshrl.u32 %v1838, 16
      %v1950 = vrot.slane %v1948, 7
      %v1951 = vshll.u32 %v1838, 16
      %v1953 = vor.u32 %v1950, %v1951
      %v1954 = vsel %vm960, %v1946, %v1953
      %v1955 = vrot.slane %v1950, 4
      %v1957 = vshrl.u32 %v1839, 16
      %v1959 = vrot.slane %v1957, 7
      %v1960 = vshll.u32 %v1839, 16
      %v1962 = vor.u32 %v1959, %v1960
      %v1963 = vsel %vm960, %v1955, %v1962
      %v1965 = vshrl.u32 %v1840, 16
      %v1967 = vrot.slane %v1965, 7
      %v1968 = vrot.slane %v1967, 4
      %v1970 = vshrl.u32 %v1841, 16
      %v1972 = vrot.slane %v1970, 7
      %v1973 = vshll.u32 %v1841, 16
      %v1975 = vor.u32 %v1972, %v1973
      %v1976 = vsel %vm960, %v1968, %v1975
      %v1977 = vrot.slane %v1972, 4
      %v1979 = vshrl.u32 %v1842, 16
      %v1981 = vrot.slane %v1979, 7
      %v1982 = vshll.u32 %v1842, 16
      %v1984 = vor.u32 %v1981, %v1982
      %v1985 = vsel %vm960, %v1977, %v1984
      %v1987 = vshrl.u32 %v1843, 16
      %v1989 = vrot.slane %v1987, 7
      %v1990 = vrot.slane %v1989, 4
      %v1992 = vshrl.u32 %v1844, 16
      %v1994 = vrot.slane %v1992, 7
      %v1995 = vshll.u32 %v1844, 16
      %v1997 = vor.u32 %v1994, %v1995
      %v1998 = vsel %vm960, %v1990, %v1997
      %v1999 = vrot.slane %v1994, 4
      %v2001 = vshrl.u32 %v1845, 16
      %v2003 = vrot.slane %v2001, 7
      %v2004 = vshll.u32 %v1845, 16
      %v2006 = vor.u32 %v2003, %v2004
      %v2007 = vsel %vm960, %v1999, %v2006
      %v2009 = vshrl.u32 %v1846, 16
      %v2011 = vrot.slane %v2009, 7
      %v2012 = vrot.slane %v2011, 4
      %v2014 = vshrl.u32 %v1847, 16
      %v2016 = vrot.slane %v2014, 7
      %v2017 = vshll.u32 %v1847, 16
      %v2019 = vor.u32 %v2016, %v2017
      %v2020 = vsel %vm960, %v2012, %v2019
      %v2021 = vrot.slane %v2016, 4
      %v2023 = vshrl.u32 %v1848, 16
      %v2025 = vrot.slane %v2023, 7
      %v2026 = vshll.u32 %v1848, 16
      %v2028 = vor.u32 %v2025, %v2026
      %v2029 = vsel %vm960, %v2021, %v2028
      %v2031 = vshrl.u32 %v1849, 16
      %v2033 = vrot.slane %v2031, 7
      %v2034 = vrot.slane %v2033, 4
      %v2036 = vshrl.u32 %v1850, 16
      %v2038 = vrot.slane %v2036, 7
      %v2039 = vshll.u32 %v1850, 16
      %v2041 = vor.u32 %v2038, %v2039
      %v2042 = vsel %vm960, %v2034, %v2041
      %v2043 = vrot.slane %v2038, 4
      %v2045 = vshrl.u32 %v1851, 16
      %v2047 = vrot.slane %v2045, 7
      %v2048 = vshll.u32 %v1851, 16
      %v2050 = vor.u32 %v2047, %v2048
      %v2051 = vsel %vm960, %v2043, %v2050
      %v2053 = vshrl.u32 %v1852, 16
      %v2055 = vrot.slane %v2053, 7
      %v2056 = vrot.slane %v2055, 4
      %v2058 = vshrl.u32 %v1853, 16
      %v2060 = vrot.slane %v2058, 7
      %v2061 = vshll.u32 %v1853, 16
      %v2063 = vor.u32 %v2060, %v2061
      %v2064 = vsel %vm960, %v2056, %v2063
      %v2065 = vrot.slane %v2060, 4
      %v2067 = vshrl.u32 %v1854, 16
      %v2069 = vrot.slane %v2067, 7
      %v2070 = vshll.u32 %v1854, 16
      %v2072 = vor.u32 %v2069, %v2070
      %v2073 = vsel %vm960, %v2065, %v2072
      %v2075 = vshrl.u32 %v1855, 16
      %v2077 = vrot.slane %v2075, 7
      %v2078 = vrot.slane %v2077, 4
      %v2080 = vshrl.u32 %v1856, 16
      %v2082 = vrot.slane %v2080, 7
      %v2083 = vshll.u32 %v1856, 16
      %v2085 = vor.u32 %v2082, %v2083
      %v2086 = vsel %vm960, %v2078, %v2085
      %v2087 = vrot.slane %v2082, 4
      %v2089 = vshrl.u32 %v1857, 16
      %v2091 = vrot.slane %v2089, 7
      %v2092 = vshll.u32 %v1857, 16
      %v2094 = vor.u32 %v2091, %v2092
      %v2095 = vsel %vm960, %v2087, %v2094
      %v2097 = vshrl.u32 %v1858, 16
      %v2099 = vrot.slane %v2097, 7
      %v2100 = vrot.slane %v2099, 4
      %v2102 = vshrl.u32 %v1859, 16
      %v2104 = vrot.slane %v2102, 7
      %v2105 = vshll.u32 %v1859, 16
      %v2107 = vor.u32 %v2104, %v2105
      %v2108 = vsel %vm960, %v2100, %v2107
      %v2109 = vrot.slane %v2104, 4
      %v2111 = vshrl.u32 %v1860, 16
      %v2113 = vrot.slane %v2111, 7
      %v2114 = vshll.u32 %v1860, 16
      %v2116 = vor.u32 %v2113, %v2114
      %v2117 = vsel %vm960, %v2109, %v2116
      %v2119 = vshrl.u32 %v1861, 16
      %v2121 = vrot.slane %v2119, 7
      %v2122 = vrot.slane %v2121, 4
      %v2124 = vshrl.u32 %v1862, 16
      %v2126 = vrot.slane %v2124, 7
      %v2127 = vshll.u32 %v1862, 16
      %v2129 = vor.u32 %v2126, %v2127
      %v2130 = vsel %vm960, %v2122, %v2129
      %v2131 = vrot.slane %v2126, 4
      %v2133 = vshrl.u32 %v1863, 16
      %v2135 = vrot.slane %v2133, 7
      %v2136 = vshll.u32 %v1863, 16
      %v2138 = vor.u32 %v2135, %v2136
      %v2139 = vsel %vm960, %v2131, %v2138
      %v2141 = vshrl.u32 %v1864, 16
      %v2143 = vrot.slane %v2141, 7
      %v2144 = vrot.slane %v2143, 4
      %v2146 = vshrl.u32 %v1865, 16
      %v2148 = vrot.slane %v2146, 7
      %v2149 = vshll.u32 %v1865, 16
      %v2151 = vor.u32 %v2148, %v2149
      %v2152 = vsel %vm960, %v2144, %v2151
      %v2153 = vrot.slane %v2148, 4
      %v2155 = vshrl.u32 %v1866, 16
      %v2157 = vrot.slane %v2155, 7
      %v2158 = vshll.u32 %v1866, 16
      %v2160 = vor.u32 %v2157, %v2158
      %v2161 = vsel %vm960, %v2153, %v2160
      %v2163 = vshrl.u32 %v1867, 16
      %v2165 = vrot.slane %v2163, 7
      %v2166 = vrot.slane %v2165, 4
      %v2168 = vshrl.u32 %v1868, 16
      %v2170 = vrot.slane %v2168, 7
      %v2171 = vshll.u32 %v1868, 16
      %v2173 = vor.u32 %v2170, %v2171
      %v2174 = vsel %vm960, %v2166, %v2173
      %v2175 = vrot.slane %v2170, 4
      %v2177 = vshrl.u32 %v1869, 16
      %v2179 = vrot.slane %v2177, 7
      %v2180 = vshll.u32 %v1869, 16
      %v2182 = vor.u32 %v2179, %v2180
      %v2183 = vsel %vm960, %v2175, %v2182
      %v2185 = vshrl.u32 %v1870, 16
      %v2187 = vrot.slane %v2185, 7
      %v2188 = vrot.slane %v2187, 4
      %v2190 = vshrl.u32 %v1871, 16
      %v2192 = vrot.slane %v2190, 7
      %v2193 = vshll.u32 %v1871, 16
      %v2195 = vor.u32 %v2192, %v2193
      %v2196 = vsel %vm960, %v2188, %v2195
      %v2197 = vrot.slane %v2192, 4
      %v2199 = vshrl.u32 %v1872, 16
      %v2201 = vrot.slane %v2199, 7
      %v2202 = vshll.u32 %v1872, 16
      %v2204 = vor.u32 %v2201, %v2202
      %v2205 = vsel %vm960, %v2197, %v2204
      %v2207 = vshrl.u32 %v1873, 16
      %v2209 = vrot.slane %v2207, 7
      %v2210 = vrot.slane %v2209, 4
      %v2212 = vshrl.u32 %v1874, 16
      %v2214 = vrot.slane %v2212, 7
      %v2215 = vshll.u32 %v1874, 16
      %v2217 = vor.u32 %v2214, %v2215
      %v2218 = vsel %vm960, %v2210, %v2217
      %v2219 = vrot.slane %v2214, 4
      %v2221 = vshrl.u32 %v1875, 16
      %v2223 = vrot.slane %v2221, 7
      %v2224 = vshll.u32 %v1875, 16
      %v2226 = vor.u32 %v2223, %v2224
      %v2227 = vsel %vm960, %v2219, %v2226
      %v2228 = vld [vmem:[%s875 + $0xc] sm:$0x1]
      %v2229 = vld [vmem:[%s875 + $0x1c] sm:$0x1]
      %v2230 = vld [vmem:[%s875 + $0x2c] sm:$0x1]
      %v2231 = vld [vmem:[%s875 + $0x3c] sm:$0x1]
      %v2232 = vld [vmem:[%s875 + $0x4c] sm:$0x1]
      %v2233 = vld [vmem:[%s875 + $0x5c] sm:$0x1]
      %v2234 = vld [vmem:[%s875 + $0x6c] sm:$0x1]
      %v2235 = vld [vmem:[%s875 + $0x7c] sm:$0x1]
      %v2236 = vld [vmem:[%s875 + $0x8c] sm:$0x1]
      %v2237 = vld [vmem:[%s875 + $0x9c] sm:$0x1]
      %v2238 = vld [vmem:[%s875 + $0xac] sm:$0x1]
      %v2239 = vld [vmem:[%s875 + $0xbc] sm:$0x1]
      %v2240 = vld [vmem:[%s875 + $0xcc] sm:$0x1]
      %v2241 = vld [vmem:[%s875 + $0xdc] sm:$0x1]
      %v2242 = vld [vmem:[%s875 + $0xec] sm:$0x1]
      %v2243 = vld [vmem:[%s875 + $0xfc] sm:$0x1]
      %v2244 = vrot.slane %v1882, 4
      %v2245 = vrot.slane %v1885, 5
      %v2246 = vor.u32 %v2244, %v2245
      %v2247 = vrot.slane %v2246, 4
      %v2248 = vrot.slane %v1894, 5
      %v2249 = vsel %vm1331, %v2247, %v2248
      %v2250 = vrot.slane %v1891, 4
      %v2251 = vor.u32 %v2250, %v2248
      %v2252 = vrot.slane %v2251, 4
      %v2254 = vshll.u32 %v2228, 16
      %v2256 = vrot.slane %v2254, 5
      %v2257 = vsel %vm1331, %v2252, %v2256
      %v2258 = vrot.slane %v1904, 4
      %v2259 = vrot.slane %v1907, 5
      %v2260 = vor.u32 %v2258, %v2259
      %v2261 = vrot.slane %v2260, 4
      %v2262 = vrot.slane %v1916, 5
      %v2263 = vsel %vm1331, %v2261, %v2262
      %v2264 = vrot.slane %v1913, 4
      %v2265 = vor.u32 %v2264, %v2262
      %v2266 = vrot.slane %v2265, 4
      %v2268 = vshll.u32 %v2229, 16
      %v2270 = vrot.slane %v2268, 5
      %v2271 = vsel %vm1331, %v2266, %v2270
      %v2272 = vrot.slane %v1926, 4
      %v2273 = vrot.slane %v1929, 5
      %v2274 = vor.u32 %v2272, %v2273
      %v2275 = vrot.slane %v2274, 4
      %v2276 = vrot.slane %v1938, 5
      %v2277 = vsel %vm1331, %v2275, %v2276
      %v2278 = vrot.slane %v1935, 4
      %v2279 = vor.u32 %v2278, %v2276
      %v2280 = vrot.slane %v2279, 4
      %v2282 = vshll.u32 %v2230, 16
      %v2284 = vrot.slane %v2282, 5
      %v2285 = vsel %vm1331, %v2280, %v2284
      %v2286 = vrot.slane %v1948, 4
      %v2287 = vrot.slane %v1951, 5
      %v2288 = vor.u32 %v2286, %v2287
      %v2289 = vrot.slane %v2288, 4
      %v2290 = vrot.slane %v1960, 5
      %v2291 = vsel %vm1331, %v2289, %v2290
      %v2292 = vrot.slane %v1957, 4
      %v2293 = vor.u32 %v2292, %v2290
      %v2294 = vrot.slane %v2293, 4
      %v2296 = vshll.u32 %v2231, 16
      %v2298 = vrot.slane %v2296, 5
      %v2299 = vsel %vm1331, %v2294, %v2298
      %v2300 = vrot.slane %v1970, 4
      %v2301 = vrot.slane %v1973, 5
      %v2302 = vor.u32 %v2300, %v2301
      %v2303 = vrot.slane %v2302, 4
      %v2304 = vrot.slane %v1982, 5
      %v2305 = vsel %vm1331, %v2303, %v2304
      %v2306 = vrot.slane %v1979, 4
      %v2307 = vor.u32 %v2306, %v2304
      %v2308 = vrot.slane %v2307, 4
      %v2310 = vshll.u32 %v2232, 16
      %v2312 = vrot.slane %v2310, 5
      %v2313 = vsel %vm1331, %v2308, %v2312
      %v2314 = vrot.slane %v1992, 4
      %v2315 = vrot.slane %v1995, 5
      %v2316 = vor.u32 %v2314, %v2315
      %v2317 = vrot.slane %v2316, 4
      %v2318 = vrot.slane %v2004, 5
      %v2319 = vsel %vm1331, %v2317, %v2318
      %v2320 = vrot.slane %v2001, 4
      %v2321 = vor.u32 %v2320, %v2318
      %v2322 = vrot.slane %v2321, 4
      %v2324 = vshll.u32 %v2233, 16
      %v2326 = vrot.slane %v2324, 5
      %v2327 = vsel %vm1331, %v2322, %v2326
      %v2328 = vrot.slane %v2014, 4
      %v2329 = vrot.slane %v2017, 5
      %v2330 = vor.u32 %v2328, %v2329
      %v2331 = vrot.slane %v2330, 4
      %v2332 = vrot.slane %v2026, 5
      %v2333 = vsel %vm1331, %v2331, %v2332
      %v2334 = vrot.slane %v2023, 4
      %v2335 = vor.u32 %v2334, %v2332
      %v2336 = vrot.slane %v2335, 4
      %v2338 = vshll.u32 %v2234, 16
      %v2340 = vrot.slane %v2338, 5
      %v2341 = vsel %vm1331, %v2336, %v2340
      %v2342 = vrot.slane %v2036, 4
      %v2343 = vrot.slane %v2039, 5
      %v2344 = vor.u32 %v2342, %v2343
      %v2345 = vrot.slane %v2344, 4
      %v2346 = vrot.slane %v2048, 5
      %v2347 = vsel %vm1331, %v2345, %v2346
      %v2348 = vrot.slane %v2045, 4
      %v2349 = vor.u32 %v2348, %v2346
      %v2350 = vrot.slane %v2349, 4
      %v2352 = vshll.u32 %v2235, 16
      %v2354 = vrot.slane %v2352, 5
      %v2355 = vsel %vm1331, %v2350, %v2354
      %v2356 = vrot.slane %v2058, 4
      %v2357 = vrot.slane %v2061, 5
      %v2358 = vor.u32 %v2356, %v2357
      %v2359 = vrot.slane %v2358, 4
      %v2360 = vrot.slane %v2070, 5
      %v2361 = vsel %vm1331, %v2359, %v2360
      %v2362 = vrot.slane %v2067, 4
      %v2363 = vor.u32 %v2362, %v2360
      %v2364 = vrot.slane %v2363, 4
      %v2366 = vshll.u32 %v2236, 16
      %v2368 = vrot.slane %v2366, 5
      %v2369 = vsel %vm1331, %v2364, %v2368
      %v2370 = vrot.slane %v2080, 4
      %v2371 = vrot.slane %v2083, 5
      %v2372 = vor.u32 %v2370, %v2371
      %v2373 = vrot.slane %v2372, 4
      %v2374 = vrot.slane %v2092, 5
      %v2375 = vsel %vm1331, %v2373, %v2374
      %v2376 = vrot.slane %v2089, 4
      %v2377 = vor.u32 %v2376, %v2374
      %v2378 = vrot.slane %v2377, 4
      %v2380 = vshll.u32 %v2237, 16
      %v2382 = vrot.slane %v2380, 5
      %v2383 = vsel %vm1331, %v2378, %v2382
      %v2384 = vrot.slane %v2102, 4
      %v2385 = vrot.slane %v2105, 5
      %v2386 = vor.u32 %v2384, %v2385
      %v2387 = vrot.slane %v2386, 4
      %v2388 = vrot.slane %v2114, 5
      %v2389 = vsel %vm1331, %v2387, %v2388
      %v2390 = vrot.slane %v2111, 4
      %v2391 = vor.u32 %v2390, %v2388
      %v2392 = vrot.slane %v2391, 4
      %v2394 = vshll.u32 %v2238, 16
      %v2396 = vrot.slane %v2394, 5
      %v2397 = vsel %vm1331, %v2392, %v2396
      %v2398 = vrot.slane %v2124, 4
      %v2399 = vrot.slane %v2127, 5
      %v2400 = vor.u32 %v2398, %v2399
      %v2401 = vrot.slane %v2400, 4
      %v2402 = vrot.slane %v2136, 5
      %v2403 = vsel %vm1331, %v2401, %v2402
      %v2404 = vrot.slane %v2133, 4
      %v2405 = vor.u32 %v2404, %v2402
      %v2406 = vrot.slane %v2405, 4
      %v2408 = vshll.u32 %v2239, 16
      %v2410 = vrot.slane %v2408, 5
      %v2411 = vsel %vm1331, %v2406, %v2410
      %v2412 = vrot.slane %v2146, 4
      %v2413 = vrot.slane %v2149, 5
      %v2414 = vor.u32 %v2412, %v2413
      %v2415 = vrot.slane %v2414, 4
      %v2416 = vrot.slane %v2158, 5
      %v2417 = vsel %vm1331, %v2415, %v2416
      %v2418 = vrot.slane %v2155, 4
      %v2419 = vor.u32 %v2418, %v2416
      %v2420 = vrot.slane %v2419, 4
      %v2422 = vshll.u32 %v2240, 16
      %v2424 = vrot.slane %v2422, 5
      %v2425 = vsel %vm1331, %v2420, %v2424
      %v2426 = vrot.slane %v2168, 4
      %v2427 = vrot.slane %v2171, 5
      %v2428 = vor.u32 %v2426, %v2427
      %v2429 = vrot.slane %v2428, 4
      %v2430 = vrot.slane %v2180, 5
      %v2431 = vsel %vm1331, %v2429, %v2430
      %v2432 = vrot.slane %v2177, 4
      %v2433 = vor.u32 %v2432, %v2430
      %v2434 = vrot.slane %v2433, 4
      %v2436 = vshll.u32 %v2241, 16
      %v2438 = vrot.slane %v2436, 5
      %v2439 = vsel %vm1331, %v2434, %v2438
      %v2440 = vrot.slane %v2190, 4
      %v2441 = vrot.slane %v2193, 5
      %v2442 = vor.u32 %v2440, %v2441
      %v2443 = vrot.slane %v2442, 4
      %v2444 = vrot.slane %v2202, 5
      %v2445 = vsel %vm1331, %v2443, %v2444
      %v2446 = vrot.slane %v2199, 4
      %v2447 = vor.u32 %v2446, %v2444
      %v2448 = vrot.slane %v2447, 4
      %v2450 = vshll.u32 %v2242, 16
      %v2452 = vrot.slane %v2450, 5
      %v2453 = vsel %vm1331, %v2448, %v2452
      %v2454 = vrot.slane %v2212, 4
      %v2455 = vrot.slane %v2215, 5
      %v2456 = vor.u32 %v2454, %v2455
      %v2457 = vrot.slane %v2456, 4
      %v2458 = vrot.slane %v2224, 5
      %v2459 = vsel %vm1331, %v2457, %v2458
      %v2460 = vrot.slane %v2221, 4
      %v2461 = vor.u32 %v2460, %v2458
      %v2462 = vrot.slane %v2461, 4
      %v2464 = vshll.u32 %v2243, 16
      %v2466 = vrot.slane %v2464, 5
      %v2467 = vsel %vm1331, %v2462, %v2466
      %v2468 = vunpack.c.l.b16 %v1888
      %v2469 = vunpack.c.l.b16 %v1897
      %v2470 = vunpack.c.l.b16 %v1910
      %v2471 = vunpack.c.l.b16 %v1919
      %v2472 = vunpack.c.l.b16 %v1932
      %v2473 = vunpack.c.l.b16 %v1941
      %v2474 = vunpack.c.l.b16 %v1954
      %v2475 = vunpack.c.l.b16 %v1963
      %v2476 = vunpack.c.l.b16 %v1976
      %v2477 = vunpack.c.l.b16 %v1985
      %v2478 = vunpack.c.l.b16 %v1998
      %v2479 = vunpack.c.l.b16 %v2007
      %v2480 = vunpack.c.l.b16 %v2020
      %v2481 = vunpack.c.l.b16 %v2029
      %v2482 = vunpack.c.l.b16 %v2042
      %v2483 = vunpack.c.l.b16 %v2051
      %v2484 = vunpack.c.l.b16 %v2064
      %v2485 = vunpack.c.l.b16 %v2073
      %v2486 = vunpack.c.l.b16 %v2086
      %v2487 = vunpack.c.l.b16 %v2095
      %v2488 = vunpack.c.l.b16 %v2108
      %v2489 = vunpack.c.l.b16 %v2117
      %v2490 = vunpack.c.l.b16 %v2130
      %v2491 = vunpack.c.l.b16 %v2139
      %v2492 = vunpack.c.l.b16 %v2152
      %v2493 = vunpack.c.l.b16 %v2161
      %v2494 = vunpack.c.l.b16 %v2174
      %v2495 = vunpack.c.l.b16 %v2183
      %v2496 = vunpack.c.l.b16 %v2196
      %v2497 = vunpack.c.l.b16 %v2205
      %v2498 = vunpack.c.l.b16 %v2218
      %v2499 = vunpack.c.l.b16 %v2227
      %v2500 = vpack.c.b16 %v2469, %v2468
      %v2501 = vpack.c.b16 %v2471, %v2470
      %v2502 = vpack.c.b16 %v2473, %v2472
      %v2503 = vpack.c.b16 %v2475, %v2474
      %v2504 = vpack.c.b16 %v2477, %v2476
      %v2505 = vpack.c.b16 %v2479, %v2478
      %v2506 = vpack.c.b16 %v2481, %v2480
      %v2507 = vpack.c.b16 %v2483, %v2482
      %v2508 = vpack.c.b16 %v2485, %v2484
      %v2509 = vpack.c.b16 %v2487, %v2486
      %v2510 = vpack.c.b16 %v2489, %v2488
      %v2511 = vpack.c.b16 %v2491, %v2490
      %v2512 = vpack.c.b16 %v2493, %v2492
      %v2513 = vpack.c.b16 %v2495, %v2494
      %v2514 = vpack.c.b16 %v2497, %v2496
      %v2515 = vpack.c.b16 %v2499, %v2498
      %v2564 = vunpack.c.l.b16 %v1829
      %v2565 = vunpack.c.l.b16 %v1830
      %v2566 = vunpack.c.l.b16 %v1832
      %v2567 = vunpack.c.l.b16 %v1833
      %v2568 = vunpack.c.l.b16 %v1835
      %v2569 = vunpack.c.l.b16 %v1836
      %v2570 = vunpack.c.l.b16 %v1838
      %v2571 = vunpack.c.l.b16 %v1839
      %v2572 = vunpack.c.l.b16 %v1841
      %v2573 = vunpack.c.l.b16 %v1842
      %v2574 = vunpack.c.l.b16 %v1844
      %v2575 = vunpack.c.l.b16 %v1845
      %v2576 = vunpack.c.l.b16 %v1847
      %v2577 = vunpack.c.l.b16 %v1848
      %v2578 = vunpack.c.l.b16 %v1850
      %v2579 = vunpack.c.l.b16 %v1851
      %v2580 = vunpack.c.l.b16 %v1853
      %v2581 = vunpack.c.l.b16 %v1854
      %v2582 = vunpack.c.l.b16 %v1856
      %v2583 = vunpack.c.l.b16 %v1857
      %v2584 = vunpack.c.l.b16 %v1859
      %v2585 = vunpack.c.l.b16 %v1860
      %v2586 = vunpack.c.l.b16 %v1862
      %v2587 = vunpack.c.l.b16 %v1863
      %v2588 = vunpack.c.l.b16 %v1865
      %v2589 = vunpack.c.l.b16 %v1866
      %v2590 = vunpack.c.l.b16 %v1868
      %v2591 = vunpack.c.l.b16 %v1869
      %v2592 = vunpack.c.l.b16 %v1871
      %v2593 = vunpack.c.l.b16 %v1872
      %v2594 = vunpack.c.l.b16 %v1874
      %v2595 = vunpack.c.l.b16 %v1875
      %v2596 = vpack.c.b16 %v2565, %v2564
      %v2597 = vpack.c.b16 %v2567, %v2566
      %v2598 = vpack.c.b16 %v2569, %v2568
      %v2599 = vpack.c.b16 %v2571, %v2570
      %v2600 = vpack.c.b16 %v2573, %v2572
      %v2601 = vpack.c.b16 %v2575, %v2574
      %v2602 = vpack.c.b16 %v2577, %v2576
      %v2603 = vpack.c.b16 %v2579, %v2578
      %v2604 = vpack.c.b16 %v2581, %v2580
      %v2605 = vpack.c.b16 %v2583, %v2582
      %v2606 = vpack.c.b16 %v2585, %v2584
      %v2607 = vpack.c.b16 %v2587, %v2586
      %v2608 = vpack.c.b16 %v2589, %v2588
      %v2609 = vpack.c.b16 %v2591, %v2590
      %v2610 = vpack.c.b16 %v2593, %v2592
      %v2611 = vpack.c.b16 %v2595, %v2594
      %v2628 = vunpack.c.l.b16 %v2249
      %v2629 = vunpack.c.l.b16 %v2257
      %v2630 = vunpack.c.l.b16 %v2263
      %v2631 = vunpack.c.l.b16 %v2271
      %v2632 = vunpack.c.l.b16 %v2277
      %v2633 = vunpack.c.l.b16 %v2285
      %v2634 = vunpack.c.l.b16 %v2291
      %v2635 = vunpack.c.l.b16 %v2299
      %v2636 = vunpack.c.l.b16 %v2305
      %v2637 = vunpack.c.l.b16 %v2313
      %v2638 = vunpack.c.l.b16 %v2319
      %v2639 = vunpack.c.l.b16 %v2327
      %v2640 = vunpack.c.l.b16 %v2333
      %v2641 = vunpack.c.l.b16 %v2341
      %v2642 = vunpack.c.l.b16 %v2347
      %v2643 = vunpack.c.l.b16 %v2355
      %v2644 = vunpack.c.l.b16 %v2361
      %v2645 = vunpack.c.l.b16 %v2369
      %v2646 = vunpack.c.l.b16 %v2375
      %v2647 = vunpack.c.l.b16 %v2383
      %v2648 = vunpack.c.l.b16 %v2389
      %v2649 = vunpack.c.l.b16 %v2397
      %v2650 = vunpack.c.l.b16 %v2403
      %v2651 = vunpack.c.l.b16 %v2411
      %v2652 = vunpack.c.l.b16 %v2417
      %v2653 = vunpack.c.l.b16 %v2425
      %v2654 = vunpack.c.l.b16 %v2431
      %v2655 = vunpack.c.l.b16 %v2439
      %v2656 = vunpack.c.l.b16 %v2445
      %v2657 = vunpack.c.l.b16 %v2453
      %v2658 = vunpack.c.l.b16 %v2459
      %v2659 = vunpack.c.l.b16 %v2467
      %v2660 = vpack.c.b16 %v2629, %v2628
      %v2661 = vpack.c.b16 %v2631, %v2630
      %v2662 = vpack.c.b16 %v2633, %v2632
      %v2663 = vpack.c.b16 %v2635, %v2634
      %v2664 = vpack.c.b16 %v2637, %v2636
      %v2665 = vpack.c.b16 %v2639, %v2638
      %v2666 = vpack.c.b16 %v2641, %v2640
      %v2667 = vpack.c.b16 %v2643, %v2642
      %v2668 = vpack.c.b16 %v2645, %v2644
      %v2669 = vpack.c.b16 %v2647, %v2646
      %v2670 = vpack.c.b16 %v2649, %v2648
      %v2671 = vpack.c.b16 %v2651, %v2650
      %v2672 = vpack.c.b16 %v2653, %v2652
      %v2673 = vpack.c.b16 %v2655, %v2654
      %v2674 = vpack.c.b16 %v2657, %v2656
      %v2675 = vpack.c.b16 %v2659, %v2658
      %s2692 = scalar_lea.vmem %s3, 192
      %v2693 = vld [vmem:[%s2692] sm:$0xf]
      %v2694 = vld [vmem:[%s2692 + $0x4] sm:$0xf]
      %v2695 = vld [vmem:[%s2692 + $0x8] sm:$0xf]
      %v2696 = vld [vmem:[%s2692 + $0xc] sm:$0xf]
      %v2697 = vld [vmem:[%s2692 + $0x10] sm:$0xf]
      %v2698 = vld [vmem:[%s2692 + $0x14] sm:$0xf]
      %v2699 = vld [vmem:[%s2692 + $0x18] sm:$0xf]
      %v2700 = vld [vmem:[%s2692 + $0x1c] sm:$0xf]
      %v2701 = vld [vmem:[%s2692 + $0x20] sm:$0xf]
      %v2702 = vld [vmem:[%s2692 + $0x24] sm:$0xf]
      %v2703 = vld [vmem:[%s2692 + $0x28] sm:$0xf]
      %v2704 = vld [vmem:[%s2692 + $0x2c] sm:$0xf]
      %v2705 = vld [vmem:[%s2692 + $0x30] sm:$0xf]
      %v2706 = vld [vmem:[%s2692 + $0x34] sm:$0xf]
      %v2707 = vld [vmem:[%s2692 + $0x38] sm:$0xf]
      %v2708 = vld [vmem:[%s2692 + $0x3c] sm:$0xf]
      %v2709 = vld [vmem:[%s2692 + $0x40] sm:$0xf]
      %v2710 = vld [vmem:[%s2692 + $0x44] sm:$0xf]
      %v2711 = vld [vmem:[%s2692 + $0x48] sm:$0xf]
      %v2712 = vld [vmem:[%s2692 + $0x4c] sm:$0xf]
      %v2713 = vld [vmem:[%s2692 + $0x50] sm:$0xf]
      %v2714 = vld [vmem:[%s2692 + $0x54] sm:$0xf]
      %v2715 = vld [vmem:[%s2692 + $0x58] sm:$0xf]
      %v2716 = vld [vmem:[%s2692 + $0x5c] sm:$0xf]
      %v2717 = vld [vmem:[%s2692 + $0x60] sm:$0xf]
      %v2718 = vld [vmem:[%s2692 + $0x64] sm:$0xf]
      %v2719 = vld [vmem:[%s2692 + $0x68] sm:$0xf]
      %v2720 = vld [vmem:[%s2692 + $0x6c] sm:$0xf]
      %v2721 = vld [vmem:[%s2692 + $0x70] sm:$0xf]
      %v2722 = vld [vmem:[%s2692 + $0x74] sm:$0xf]
      %v2723 = vld [vmem:[%s2692 + $0x78] sm:$0xf]
      %v2724 = vld [vmem:[%s2692 + $0x7c] sm:$0xf]
      %v2725 = vld [vmem:[%s2692 + $0x80] sm:$0xf]
      %v2726 = vld [vmem:[%s2692 + $0x84] sm:$0xf]
      %v2727 = vld [vmem:[%s2692 + $0x88] sm:$0xf]
      %v2728 = vld [vmem:[%s2692 + $0x8c] sm:$0xf]
      %v2729 = vld [vmem:[%s2692 + $0x90] sm:$0xf]
      %v2730 = vld [vmem:[%s2692 + $0x94] sm:$0xf]
      %v2731 = vld [vmem:[%s2692 + $0x98] sm:$0xf]
      %v2732 = vld [vmem:[%s2692 + $0x9c] sm:$0xf]
      %v2733 = vld [vmem:[%s2692 + $0xa0] sm:$0xf]
      %v2734 = vld [vmem:[%s2692 + $0xa4] sm:$0xf]
      %v2735 = vld [vmem:[%s2692 + $0xa8] sm:$0xf]
      %v2736 = vld [vmem:[%s2692 + $0xac] sm:$0xf]
      %v2737 = vld [vmem:[%s2692 + $0xb0] sm:$0xf]
      %v2738 = vld [vmem:[%s2692 + $0xb4] sm:$0xf]
      %v2739 = vld [vmem:[%s2692 + $0xb8] sm:$0xf]
      %v2740 = vld [vmem:[%s2692 + $0xbc] sm:$0xf]
      %v2789 = vunpack.c.l.b16 %v2693
      %v2790 = vunpack.c.l.b16 %v2694
      %v2791 = vunpack.c.l.b16 %v2695
      %v2792 = vunpack.c.l.b16 %v2696
      %v2793 = vunpack.c.l.b16 %v2697
      %v2794 = vunpack.c.l.b16 %v2698
      %v2795 = vunpack.c.l.b16 %v2699
      %v2796 = vunpack.c.l.b16 %v2700
      %v2797 = vunpack.c.l.b16 %v2701
      %v2798 = vunpack.c.l.b16 %v2702
      %v2799 = vunpack.c.l.b16 %v2703
      %v2800 = vunpack.c.l.b16 %v2704
      %v2801 = vunpack.c.l.b16 %v2705
      %v2802 = vunpack.c.l.b16 %v2706
      %v2803 = vunpack.c.l.b16 %v2707
      %v2804 = vunpack.c.l.b16 %v2708
      %v2805 = vunpack.c.l.b16 %v2709
      %v2806 = vunpack.c.l.b16 %v2710
      %v2807 = vunpack.c.l.b16 %v2711
      %v2808 = vunpack.c.l.b16 %v2712
      %v2809 = vunpack.c.l.b16 %v2713
      %v2810 = vunpack.c.l.b16 %v2714
      %v2811 = vunpack.c.l.b16 %v2715
      %v2812 = vunpack.c.l.b16 %v2716
      %v2813 = vunpack.c.l.b16 %v2717
      %v2814 = vunpack.c.l.b16 %v2718
      %v2815 = vunpack.c.l.b16 %v2719
      %v2816 = vunpack.c.l.b16 %v2720
      %v2817 = vunpack.c.l.b16 %v2721
      %v2818 = vunpack.c.l.b16 %v2722
      %v2819 = vunpack.c.l.b16 %v2723
      %v2820 = vunpack.c.l.b16 %v2724
      %v2821 = vunpack.c.l.b16 %v2725
      %v2822 = vunpack.c.l.b16 %v2726
      %v2823 = vunpack.c.l.b16 %v2727
      %v2824 = vunpack.c.l.b16 %v2728
      %v2825 = vunpack.c.l.b16 %v2729
      %v2826 = vunpack.c.l.b16 %v2730
      %v2827 = vunpack.c.l.b16 %v2731
      %v2828 = vunpack.c.l.b16 %v2732
      %v2829 = vunpack.c.l.b16 %v2733
      %v2830 = vunpack.c.l.b16 %v2734
      %v2831 = vunpack.c.l.b16 %v2735
      %v2832 = vunpack.c.l.b16 %v2736
      %v2833 = vunpack.c.l.b16 %v2737
      %v2834 = vunpack.c.l.b16 %v2738
      %v2835 = vunpack.c.l.b16 %v2739
      %v2836 = vunpack.c.l.b16 %v2740
      %v2837 = vpack.c.b16 %v2790, %v2789
      %v2838 = vpack.c.b16 %v2792, %v2791
      %v2839 = vpack.c.b16 %v2794, %v2793
      %v2840 = vpack.c.b16 %v2796, %v2795
      %v2841 = vpack.c.b16 %v2798, %v2797
      %v2842 = vpack.c.b16 %v2800, %v2799
      %v2843 = vpack.c.b16 %v2802, %v2801
      %v2844 = vpack.c.b16 %v2804, %v2803
      %v2845 = vpack.c.b16 %v2806, %v2805
      %v2846 = vpack.c.b16 %v2808, %v2807
      %v2847 = vpack.c.b16 %v2810, %v2809
      %v2848 = vpack.c.b16 %v2812, %v2811
      %v2849 = vpack.c.b16 %v2814, %v2813
      %v2850 = vpack.c.b16 %v2816, %v2815
      %v2851 = vpack.c.b16 %v2818, %v2817
      %v2852 = vpack.c.b16 %v2820, %v2819
      %v2853 = vpack.c.b16 %v2822, %v2821
      %v2854 = vpack.c.b16 %v2824, %v2823
      %v2855 = vpack.c.b16 %v2826, %v2825
      %v2856 = vpack.c.b16 %v2828, %v2827
      %v2857 = vpack.c.b16 %v2830, %v2829
      %v2858 = vpack.c.b16 %v2832, %v2831
      %v2859 = vpack.c.b16 %v2834, %v2833
      %v2860 = vpack.c.b16 %v2836, %v2835
      %2885 = vmatprep.subr.bf16.mxu0 0
      %2886 = vmatpush1.bf16.msra.mxu0 %v2844
      %2887 = vmatprep.subr.bf16.mxu0 0
      %2888 = vmatpush1.bf16.msra.mxu0 %v2843
      %2889 = vmatprep.subr.bf16.mxu0 0
      %2890 = vmatpush1.bf16.msra.mxu0 %v2842
      %2891 = vmatprep.subr.bf16.mxu0 0
      %2892 = vmatpush1.bf16.msra.mxu0 %v2841
      %2893 = vmatprep.subr.bf16.mxu0 0
      %2894 = vmatpush1.bf16.msra.mxu0 %v2840
      %2895 = vmatprep.subr.bf16.mxu0 0
      %2896 = vmatpush1.bf16.msra.mxu0 %v2839
      %2897 = vmatprep.subr.bf16.mxu0 0
      %2898 = vmatpush1.bf16.msra.mxu0 %v2838
      %2899 = vmatprep.subr.bf16.mxu0 0
      %2900 = vmatpush1.bf16.msra.mxu0 %v2837
      %2901 = vmatprep.subr.bf16.mxu0 0
      %2902 = vmatpush2.bf16.msra.mxu0 %v2852
      %2903 = vmatprep.subr.bf16.mxu0 0
      %2904 = vmatpush2.bf16.msra.mxu0 %v2851
      %2905 = vmatprep.subr.bf16.mxu0 0
      %2906 = vmatpush2.bf16.msra.mxu0 %v2850
      %2907 = vmatprep.subr.bf16.mxu0 0
      %2908 = vmatpush2.bf16.msra.mxu0 %v2849
      %2909 = vmatprep.subr.bf16.mxu0 0
      %2910 = vmatpush2.bf16.msra.mxu0 %v2848
      %2911 = vmatprep.subr.bf16.mxu0 0
      %2912 = vmatpush2.bf16.msra.mxu0 %v2847
      %2913 = vmatprep.subr.bf16.mxu0 0
      %2914 = vmatpush2.bf16.msra.mxu0 %v2846
      %2915 = vmatprep.subr.bf16.mxu0 0
      %2916 = vmatpush2.bf16.msra.mxu0 %v2845
      %2917 = vmatprep.mubr.bf16.mxu0 %v2596
      %2918 = vmatmul.mubr.bf16.gmra.mxu0 %v2500
      %v2919 = vpop.f32.mrf.mxu0
      %v2920 = vadd.f32 0.0, %v2919
      %v2921 = vpop.f32.mrf.mxu0
      %v2922 = vpop.f32.mrf.mxu0
      %v2923 = vadd.f32 0.0, %v2922
      %v2924 = vpop.f32.mrf.mxu0
      %2925 = vmatprep.mubr.bf16.mxu0 %v2597
      %2926 = vmatmul.mubr.bf16.gmra.mxu0 %v2501
      %v2927 = vpop.f32.mrf.mxu0
      %v2928 = vadd.f32 0.0, %v2927
      %v2929 = vpop.f32.mrf.mxu0
      %v2930 = vpop.f32.mrf.mxu0
      %v2931 = vadd.f32 0.0, %v2930
      %v2932 = vpop.f32.mrf.mxu0
      %2933 = vmatprep.mubr.bf16.mxu0 %v2598
      %2934 = vmatmul.mubr.bf16.gmra.mxu0 %v2502
      %v2935 = vpop.f32.mrf.mxu0
      %v2936 = vadd.f32 0.0, %v2935
      %v2937 = vpop.f32.mrf.mxu0
      %v2938 = vpop.f32.mrf.mxu0
      %v2939 = vadd.f32 0.0, %v2938
      %v2940 = vpop.f32.mrf.mxu0
      %2941 = vmatprep.mubr.bf16.mxu0 %v2599
      %2942 = vmatmul.mubr.bf16.gmra.mxu0 %v2503
      %v2943 = vpop.f32.mrf.mxu0
      %v2944 = vadd.f32 0.0, %v2943
      %v2945 = vpop.f32.mrf.mxu0
      %v2946 = vpop.f32.mrf.mxu0
      %v2947 = vadd.f32 0.0, %v2946
      %v2948 = vpop.f32.mrf.mxu0
      %2949 = vmatprep.mubr.bf16.mxu0 %v2600
      %2950 = vmatmul.mubr.bf16.gmra.mxu0 %v2504
      %v2951 = vpop.f32.mrf.mxu0
      %v2952 = vadd.f32 0.0, %v2951
      %v2953 = vpop.f32.mrf.mxu0
      %v2954 = vpop.f32.mrf.mxu0
      %v2955 = vadd.f32 0.0, %v2954
      %v2956 = vpop.f32.mrf.mxu0
      %2957 = vmatprep.mubr.bf16.mxu0 %v2601
      %2958 = vmatmul.mubr.bf16.gmra.mxu0 %v2505
      %v2959 = vpop.f32.mrf.mxu0
      %v2960 = vadd.f32 0.0, %v2959
      %v2961 = vpop.f32.mrf.mxu0
      %v2962 = vpop.f32.mrf.mxu0
      %v2963 = vadd.f32 0.0, %v2962
      %v2964 = vpop.f32.mrf.mxu0
      %2965 = vmatprep.mubr.bf16.mxu0 %v2602
      %2966 = vmatmul.mubr.bf16.gmra.mxu0 %v2506
      %v2967 = vpop.f32.mrf.mxu0
      %v2968 = vadd.f32 0.0, %v2967
      %v2969 = vpop.f32.mrf.mxu0
      %v2970 = vpop.f32.mrf.mxu0
      %v2971 = vadd.f32 0.0, %v2970
      %v2972 = vpop.f32.mrf.mxu0
      %2973 = vmatprep.mubr.bf16.mxu0 %v2603
      %2974 = vmatmul.mubr.bf16.gmra.mxu0 %v2507
      %v2975 = vpop.f32.mrf.mxu0
      %v2976 = vadd.f32 0.0, %v2975
      %v2977 = vpop.f32.mrf.mxu0
      %v2978 = vpop.f32.mrf.mxu0
      %v2979 = vadd.f32 0.0, %v2978
      %v2980 = vpop.f32.mrf.mxu0
      %2981 = vmatprep.mubr.bf16.mxu0 %v2604
      %2982 = vmatmul.mubr.bf16.gmra.mxu0 %v2508
      %v2983 = vpop.f32.mrf.mxu0
      %v2984 = vadd.f32 0.0, %v2983
      %v2985 = vpop.f32.mrf.mxu0
      %v2986 = vpop.f32.mrf.mxu0
      %v2987 = vadd.f32 0.0, %v2986
      %v2988 = vpop.f32.mrf.mxu0
      %2989 = vmatprep.mubr.bf16.mxu0 %v2605
      %2990 = vmatmul.mubr.bf16.gmra.mxu0 %v2509
      %v2991 = vpop.f32.mrf.mxu0
      %v2992 = vadd.f32 0.0, %v2991
      %v2993 = vpop.f32.mrf.mxu0
      %v2994 = vpop.f32.mrf.mxu0
      %v2995 = vadd.f32 0.0, %v2994
      %v2996 = vpop.f32.mrf.mxu0
      %2997 = vmatprep.mubr.bf16.mxu0 %v2606
      %2998 = vmatmul.mubr.bf16.gmra.mxu0 %v2510
      %v2999 = vpop.f32.mrf.mxu0
      %v3000 = vadd.f32 0.0, %v2999
      %v3001 = vpop.f32.mrf.mxu0
      %v3002 = vpop.f32.mrf.mxu0
      %v3003 = vadd.f32 0.0, %v3002
      %v3004 = vpop.f32.mrf.mxu0
      %3005 = vmatprep.mubr.bf16.mxu0 %v2607
      %3006 = vmatmul.mubr.bf16.gmra.mxu0 %v2511
      %v3007 = vpop.f32.mrf.mxu0
      %v3008 = vadd.f32 0.0, %v3007
      %v3009 = vpop.f32.mrf.mxu0
      %v3010 = vpop.f32.mrf.mxu0
      %v3011 = vadd.f32 0.0, %v3010
      %v3012 = vpop.f32.mrf.mxu0
      %3013 = vmatprep.mubr.bf16.mxu0 %v2608
      %3014 = vmatmul.mubr.bf16.gmra.mxu0 %v2512
      %v3015 = vpop.f32.mrf.mxu0
      %v3016 = vadd.f32 0.0, %v3015
      %v3017 = vpop.f32.mrf.mxu0
      %v3018 = vpop.f32.mrf.mxu0
      %v3019 = vadd.f32 0.0, %v3018
      %v3020 = vpop.f32.mrf.mxu0
      %3021 = vmatprep.mubr.bf16.mxu0 %v2609
      %3022 = vmatmul.mubr.bf16.gmra.mxu0 %v2513
      %v3023 = vpop.f32.mrf.mxu0
      %v3024 = vadd.f32 0.0, %v3023
      %v3025 = vpop.f32.mrf.mxu0
      %v3026 = vpop.f32.mrf.mxu0
      %v3027 = vadd.f32 0.0, %v3026
      %v3028 = vpop.f32.mrf.mxu0
      %3029 = vmatprep.mubr.bf16.mxu0 %v2610
      %3030 = vmatmul.mubr.bf16.gmra.mxu0 %v2514
      %v3031 = vpop.f32.mrf.mxu0
      %v3032 = vadd.f32 0.0, %v3031
      %v3033 = vpop.f32.mrf.mxu0
      %v3034 = vpop.f32.mrf.mxu0
      %v3035 = vadd.f32 0.0, %v3034
      %v3036 = vpop.f32.mrf.mxu0
      %3037 = vmatprep.mubr.bf16.mxu0 %v2611
      %3038 = vmatmul.mubr.bf16.gmra.mxu0 %v2515
      %v3039 = vpop.f32.mrf.mxu0
      %v3040 = vadd.f32 0.0, %v3039
      %v3041 = vpop.f32.mrf.mxu0
      %v3042 = vpop.f32.mrf.mxu0
      %v3043 = vadd.f32 0.0, %v3042
      %v3044 = vpop.f32.mrf.mxu0
      %3045 = vdwg.mxu0
      %3046 = vmatprep.subr.bf16.mxu0 0
      %3047 = vmatpush1.bf16.msra.mxu0 %v2860
      %3048 = vmatprep.subr.bf16.mxu0 0
      %3049 = vmatpush1.bf16.msra.mxu0 %v2859
      %3050 = vmatprep.subr.bf16.mxu0 0
      %3051 = vmatpush1.bf16.msra.mxu0 %v2858
      %3052 = vmatprep.subr.bf16.mxu0 0
      %3053 = vmatpush1.bf16.msra.mxu0 %v2857
      %3054 = vmatprep.subr.bf16.mxu0 0
      %3055 = vmatpush1.bf16.msra.mxu0 %v2856
      %3056 = vmatprep.subr.bf16.mxu0 0
      %3057 = vmatpush1.bf16.msra.mxu0 %v2855
      %3058 = vmatprep.subr.bf16.mxu0 0
      %3059 = vmatpush1.bf16.msra.mxu0 %v2854
      %3060 = vmatprep.subr.bf16.mxu0 0
      %3061 = vmatpush1.bf16.msra.mxu0 %v2853
      %3062 = vmatprep.subr.bf16.mxu0 0
      %3063 = vmatpush2.bf16.msra.mxu0 0
      %3064 = vmatprep.subr.bf16.mxu0 0
      %3065 = vmatpush2.bf16.msra.mxu0 0
      %3066 = vmatprep.subr.bf16.mxu0 0
      %3067 = vmatpush2.bf16.msra.mxu0 0
      %3068 = vmatprep.subr.bf16.mxu0 0
      %3069 = vmatpush2.bf16.msra.mxu0 0
      %3070 = vmatprep.subr.bf16.mxu0 0
      %3071 = vmatpush2.bf16.msra.mxu0 0
      %3072 = vmatprep.subr.bf16.mxu0 0
      %3073 = vmatpush2.bf16.msra.mxu0 0
      %3074 = vmatprep.subr.bf16.mxu0 0
      %3075 = vmatpush2.bf16.msra.mxu0 0
      %3076 = vmatprep.subr.bf16.mxu0 0
      %3077 = vmatpush2.bf16.msra.mxu0 0
      %3078 = vmatprep.mubr.bf16.mxu0 0
      %3079 = vmatmul.mubr.bf16.gmra.mxu0 %v2660
      %v3080 = vpop.f32.mrf.mxu0
      %v3081 = vadd.f32 %v2920, %v3080
      %v3082 = vpop.f32.mrf.mxu0
      %v3083 = vpop.f32.mrf.mxu0
      %v3084 = vadd.f32 %v2923, %v3083
      %v3085 = vpop.f32.mrf.mxu0
      %3086 = vmatprep.mubr.bf16.mxu0 0
      %3087 = vmatmul.mubr.bf16.gmra.mxu0 %v2661
      %v3088 = vpop.f32.mrf.mxu0
      %v3089 = vadd.f32 %v2928, %v3088
      %v3090 = vpop.f32.mrf.mxu0
      %v3091 = vpop.f32.mrf.mxu0
      %v3092 = vadd.f32 %v2931, %v3091
      %v3093 = vpop.f32.mrf.mxu0
      %3094 = vmatprep.mubr.bf16.mxu0 0
      %3095 = vmatmul.mubr.bf16.gmra.mxu0 %v2662
      %v3096 = vpop.f32.mrf.mxu0
      %v3097 = vadd.f32 %v2936, %v3096
      %v3098 = vpop.f32.mrf.mxu0
      %v3099 = vpop.f32.mrf.mxu0
      %v3100 = vadd.f32 %v2939, %v3099
      %v3101 = vpop.f32.mrf.mxu0
      %3102 = vmatprep.mubr.bf16.mxu0 0
      %3103 = vmatmul.mubr.bf16.gmra.mxu0 %v2663
      %v3104 = vpop.f32.mrf.mxu0
      %v3105 = vadd.f32 %v2944, %v3104
      %v3106 = vpop.f32.mrf.mxu0
      %v3107 = vpop.f32.mrf.mxu0
      %v3108 = vadd.f32 %v2947, %v3107
      %v3109 = vpop.f32.mrf.mxu0
      %3110 = vmatprep.mubr.bf16.mxu0 0
      %3111 = vmatmul.mubr.bf16.gmra.mxu0 %v2664
      %v3112 = vpop.f32.mrf.mxu0
      %v3113 = vadd.f32 %v2952, %v3112
      %v3114 = vpop.f32.mrf.mxu0
      %v3115 = vpop.f32.mrf.mxu0
      %v3116 = vadd.f32 %v2955, %v3115
      %v3117 = vpop.f32.mrf.mxu0
      %3118 = vmatprep.mubr.bf16.mxu0 0
      %3119 = vmatmul.mubr.bf16.gmra.mxu0 %v2665
      %v3120 = vpop.f32.mrf.mxu0
      %v3121 = vadd.f32 %v2960, %v3120
      %v3122 = vpop.f32.mrf.mxu0
      %v3123 = vpop.f32.mrf.mxu0
      %v3124 = vadd.f32 %v2963, %v3123
      %v3125 = vpop.f32.mrf.mxu0
      %3126 = vmatprep.mubr.bf16.mxu0 0
      %3127 = vmatmul.mubr.bf16.gmra.mxu0 %v2666
      %v3128 = vpop.f32.mrf.mxu0
      %v3129 = vadd.f32 %v2968, %v3128
      %v3130 = vpop.f32.mrf.mxu0
      %v3131 = vpop.f32.mrf.mxu0
      %v3132 = vadd.f32 %v2971, %v3131
      %v3133 = vpop.f32.mrf.mxu0
      %3134 = vmatprep.mubr.bf16.mxu0 0
      %3135 = vmatmul.mubr.bf16.gmra.mxu0 %v2667
      %v3136 = vpop.f32.mrf.mxu0
      %v3137 = vadd.f32 %v2976, %v3136
      %v3138 = vpop.f32.mrf.mxu0
      %v3139 = vpop.f32.mrf.mxu0
      %v3140 = vadd.f32 %v2979, %v3139
      %v3141 = vpop.f32.mrf.mxu0
      %3142 = vmatprep.mubr.bf16.mxu0 0
      %3143 = vmatmul.mubr.bf16.gmra.mxu0 %v2668
      %v3144 = vpop.f32.mrf.mxu0
      %v3145 = vadd.f32 %v2984, %v3144
      %v3146 = vpop.f32.mrf.mxu0
      %v3147 = vpop.f32.mrf.mxu0
      %v3148 = vadd.f32 %v2987, %v3147
      %v3149 = vpop.f32.mrf.mxu0
      %3150 = vmatprep.mubr.bf16.mxu0 0
      %3151 = vmatmul.mubr.bf16.gmra.mxu0 %v2669
      %v3152 = vpop.f32.mrf.mxu0
      %v3153 = vadd.f32 %v2992, %v3152
      %v3154 = vpop.f32.mrf.mxu0
      %v3155 = vpop.f32.mrf.mxu0
      %v3156 = vadd.f32 %v2995, %v3155
      %v3157 = vpop.f32.mrf.mxu0
      %3158 = vmatprep.mubr.bf16.mxu0 0
      %3159 = vmatmul.mubr.bf16.gmra.mxu0 %v2670
      %v3160 = vpop.f32.mrf.mxu0
      %v3161 = vadd.f32 %v3000, %v3160
      %v3162 = vpop.f32.mrf.mxu0
      %v3163 = vpop.f32.mrf.mxu0
      %v3164 = vadd.f32 %v3003, %v3163
      %v3165 = vpop.f32.mrf.mxu0
      %3166 = vmatprep.mubr.bf16.mxu0 0
      %3167 = vmatmul.mubr.bf16.gmra.mxu0 %v2671
      %v3168 = vpop.f32.mrf.mxu0
      %v3169 = vadd.f32 %v3008, %v3168
      %v3170 = vpop.f32.mrf.mxu0
      %v3171 = vpop.f32.mrf.mxu0
      %v3172 = vadd.f32 %v3011, %v3171
      %v3173 = vpop.f32.mrf.mxu0
      %3174 = vmatprep.mubr.bf16.mxu0 0
      %3175 = vmatmul.mubr.bf16.gmra.mxu0 %v2672
      %v3176 = vpop.f32.mrf.mxu0
      %v3177 = vadd.f32 %v3016, %v3176
      %v3178 = vpop.f32.mrf.mxu0
      %v3179 = vpop.f32.mrf.mxu0
      %v3180 = vadd.f32 %v3019, %v3179
      %v3181 = vpop.f32.mrf.mxu0
      %3182 = vmatprep.mubr.bf16.mxu0 0
      %3183 = vmatmul.mubr.bf16.gmra.mxu0 %v2673
      %v3184 = vpop.f32.mrf.mxu0
      %v3185 = vadd.f32 %v3024, %v3184
      %v3186 = vpop.f32.mrf.mxu0
      %v3187 = vpop.f32.mrf.mxu0
      %v3188 = vadd.f32 %v3027, %v3187
      %v3189 = vpop.f32.mrf.mxu0
      %3190 = vmatprep.mubr.bf16.mxu0 0
      %3191 = vmatmul.mubr.bf16.gmra.mxu0 %v2674
      %v3192 = vpop.f32.mrf.mxu0
      %v3193 = vadd.f32 %v3032, %v3192
      %v3194 = vpop.f32.mrf.mxu0
      %v3195 = vpop.f32.mrf.mxu0
      %v3196 = vadd.f32 %v3035, %v3195
      %v3197 = vpop.f32.mrf.mxu0
      %3198 = vmatprep.mubr.bf16.mxu0 0
      %3199 = vmatmul.mubr.bf16.gmra.mxu0 %v2675
      %v3200 = vpop.f32.mrf.mxu0
      %v3201 = vadd.f32 %v3040, %v3200
      %v3202 = vpop.f32.mrf.mxu0
      %v3203 = vpop.f32.mrf.mxu0
      %v3204 = vadd.f32 %v3043, %v3203
      %v3205 = vpop.f32.mrf.mxu0
      %3206 = vdwg.mxu0
      %v3255 = vunpack.c.l.b16 %v1780
      %v3256 = vunpack.c.l.b16 %v1781
      %v3257 = vunpack.c.l.b16 %v1782
      %v3258 = vunpack.c.l.b16 %v1783
      %v3259 = vunpack.c.l.b16 %v1784
      %v3260 = vunpack.c.l.b16 %v1785
      %v3261 = vunpack.c.l.b16 %v1786
      %v3262 = vunpack.c.l.b16 %v1787
      %v3263 = vunpack.c.l.b16 %v1788
      %v3264 = vunpack.c.l.b16 %v1789
      %v3265 = vunpack.c.l.b16 %v1790
      %v3266 = vunpack.c.l.b16 %v1791
      %v3267 = vunpack.c.l.b16 %v1792
      %v3268 = vunpack.c.l.b16 %v1793
      %v3269 = vunpack.c.l.b16 %v1794
      %v3270 = vunpack.c.l.b16 %v1795
      %v3271 = vunpack.c.l.b16 %v1796
      %v3272 = vunpack.c.l.b16 %v1797
      %v3273 = vunpack.c.l.b16 %v1798
      %v3274 = vunpack.c.l.b16 %v1799
      %v3275 = vunpack.c.l.b16 %v1800
      %v3276 = vunpack.c.l.b16 %v1801
      %v3277 = vunpack.c.l.b16 %v1802
      %v3278 = vunpack.c.l.b16 %v1803
      %v3279 = vunpack.c.l.b16 %v1804
      %v3280 = vunpack.c.l.b16 %v1805
      %v3281 = vunpack.c.l.b16 %v1806
      %v3282 = vunpack.c.l.b16 %v1807
      %v3283 = vunpack.c.l.b16 %v1808
      %v3284 = vunpack.c.l.b16 %v1809
      %v3285 = vunpack.c.l.b16 %v1810
      %v3286 = vunpack.c.l.b16 %v1811
      %v3287 = vunpack.c.l.b16 %v1812
      %v3288 = vunpack.c.l.b16 %v1813
      %v3289 = vunpack.c.l.b16 %v1814
      %v3290 = vunpack.c.l.b16 %v1815
      %v3291 = vunpack.c.l.b16 %v1816
      %v3292 = vunpack.c.l.b16 %v1817
      %v3293 = vunpack.c.l.b16 %v1818
      %v3294 = vunpack.c.l.b16 %v1819
      %v3295 = vunpack.c.l.b16 %v1820
      %v3296 = vunpack.c.l.b16 %v1821
      %v3297 = vunpack.c.l.b16 %v1822
      %v3298 = vunpack.c.l.b16 %v1823
      %v3299 = vunpack.c.l.b16 %v1824
      %v3300 = vunpack.c.l.b16 %v1825
      %v3301 = vunpack.c.l.b16 %v1826
      %v3302 = vunpack.c.l.b16 %v1827
      %v3303 = vpack.c.b16 %v3256, %v3255
      %v3304 = vpack.c.b16 %v3258, %v3257
      %v3305 = vpack.c.b16 %v3260, %v3259
      %v3306 = vpack.c.b16 %v3262, %v3261
      %v3307 = vpack.c.b16 %v3264, %v3263
      %v3308 = vpack.c.b16 %v3266, %v3265
      %v3309 = vpack.c.b16 %v3268, %v3267
      %v3310 = vpack.c.b16 %v3270, %v3269
      %v3311 = vpack.c.b16 %v3272, %v3271
      %v3312 = vpack.c.b16 %v3274, %v3273
      %v3313 = vpack.c.b16 %v3276, %v3275
      %v3314 = vpack.c.b16 %v3278, %v3277
      %v3315 = vpack.c.b16 %v3280, %v3279
      %v3316 = vpack.c.b16 %v3282, %v3281
      %v3317 = vpack.c.b16 %v3284, %v3283
      %v3318 = vpack.c.b16 %v3286, %v3285
      %v3319 = vpack.c.b16 %v3288, %v3287
      %v3320 = vpack.c.b16 %v3290, %v3289
      %v3321 = vpack.c.b16 %v3292, %v3291
      %v3322 = vpack.c.b16 %v3294, %v3293
      %v3323 = vpack.c.b16 %v3296, %v3295
      %v3324 = vpack.c.b16 %v3298, %v3297
      %v3325 = vpack.c.b16 %v3300, %v3299
      %v3326 = vpack.c.b16 %v3302, %v3301
      %3351 = vmatprep.subr.bf16.mxu0 0
      %3352 = vmatpush1.bf16.msra.mxu0 %v3310
      %3353 = vmatprep.subr.bf16.mxu0 0
      %3354 = vmatpush1.bf16.msra.mxu0 %v3309
      %3355 = vmatprep.subr.bf16.mxu0 0
      %3356 = vmatpush1.bf16.msra.mxu0 %v3308
      %3357 = vmatprep.subr.bf16.mxu0 0
      %3358 = vmatpush1.bf16.msra.mxu0 %v3307
      %3359 = vmatprep.subr.bf16.mxu0 0
      %3360 = vmatpush1.bf16.msra.mxu0 %v3306
      %3361 = vmatprep.subr.bf16.mxu0 0
      %3362 = vmatpush1.bf16.msra.mxu0 %v3305
      %3363 = vmatprep.subr.bf16.mxu0 0
      %3364 = vmatpush1.bf16.msra.mxu0 %v3304
      %3365 = vmatprep.subr.bf16.mxu0 0
      %3366 = vmatpush1.bf16.msra.mxu0 %v3303
      %3367 = vmatprep.subr.bf16.mxu0 0
      %3368 = vmatpush2.bf16.msra.mxu0 %v3318
      %3369 = vmatprep.subr.bf16.mxu0 0
      %3370 = vmatpush2.bf16.msra.mxu0 %v3317
      %3371 = vmatprep.subr.bf16.mxu0 0
      %3372 = vmatpush2.bf16.msra.mxu0 %v3316
      %3373 = vmatprep.subr.bf16.mxu0 0
      %3374 = vmatpush2.bf16.msra.mxu0 %v3315
      %3375 = vmatprep.subr.bf16.mxu0 0
      %3376 = vmatpush2.bf16.msra.mxu0 %v3314
      %3377 = vmatprep.subr.bf16.mxu0 0
      %3378 = vmatpush2.bf16.msra.mxu0 %v3313
      %3379 = vmatprep.subr.bf16.mxu0 0
      %3380 = vmatpush2.bf16.msra.mxu0 %v3312
      %3381 = vmatprep.subr.bf16.mxu0 0
      %3382 = vmatpush2.bf16.msra.mxu0 %v3311
      %3383 = vmatprep.mubr.bf16.mxu0 %v1684
      %3384 = vmatmul.mubr.bf16.gmra.mxu0 %v1588
      %v3385 = vpop.f32.mrf.mxu0
      %v3386 = vadd.f32 %v3081, %v3385
      %v3387 = vpop.f32.mrf.mxu0
      %v3388 = vpop.f32.mrf.mxu0
      %v3389 = vadd.f32 %v3084, %v3388
      %v3390 = vpop.f32.mrf.mxu0
      %3391 = vmatprep.mubr.bf16.mxu0 %v1685
      %3392 = vmatmul.mubr.bf16.gmra.mxu0 %v1589
      %v3393 = vpop.f32.mrf.mxu0
      %v3394 = vadd.f32 %v3089, %v3393
      %v3395 = vpop.f32.mrf.mxu0
      %v3396 = vpop.f32.mrf.mxu0
      %v3397 = vadd.f32 %v3092, %v3396
      %v3398 = vpop.f32.mrf.mxu0
      %3399 = vmatprep.mubr.bf16.mxu0 %v1686
      %3400 = vmatmul.mubr.bf16.gmra.mxu0 %v1590
      %v3401 = vpop.f32.mrf.mxu0
      %v3402 = vadd.f32 %v3097, %v3401
      %v3403 = vpop.f32.mrf.mxu0
      %v3404 = vpop.f32.mrf.mxu0
      %v3405 = vadd.f32 %v3100, %v3404
      %v3406 = vpop.f32.mrf.mxu0
      %3407 = vmatprep.mubr.bf16.mxu0 %v1687
      %3408 = vmatmul.mubr.bf16.gmra.mxu0 %v1591
      %v3409 = vpop.f32.mrf.mxu0
      %v3410 = vadd.f32 %v3105, %v3409
      %v3411 = vpop.f32.mrf.mxu0
      %v3412 = vpop.f32.mrf.mxu0
      %v3413 = vadd.f32 %v3108, %v3412
      %v3414 = vpop.f32.mrf.mxu0
      %3415 = vmatprep.mubr.bf16.mxu0 %v1688
      %3416 = vmatmul.mubr.bf16.gmra.mxu0 %v1592
      %v3417 = vpop.f32.mrf.mxu0
      %v3418 = vadd.f32 %v3113, %v3417
      %v3419 = vpop.f32.mrf.mxu0
      %v3420 = vpop.f32.mrf.mxu0
      %v3421 = vadd.f32 %v3116, %v3420
      %v3422 = vpop.f32.mrf.mxu0
      %3423 = vmatprep.mubr.bf16.mxu0 %v1689
      %3424 = vmatmul.mubr.bf16.gmra.mxu0 %v1593
      %v3425 = vpop.f32.mrf.mxu0
      %v3426 = vadd.f32 %v3121, %v3425
      %v3427 = vpop.f32.mrf.mxu0
      %v3428 = vpop.f32.mrf.mxu0
      %v3429 = vadd.f32 %v3124, %v3428
      %v3430 = vpop.f32.mrf.mxu0
      %3431 = vmatprep.mubr.bf16.mxu0 %v1690
      %3432 = vmatmul.mubr.bf16.gmra.mxu0 %v1594
      %v3433 = vpop.f32.mrf.mxu0
      %v3434 = vadd.f32 %v3129, %v3433
      %v3435 = vpop.f32.mrf.mxu0
      %v3436 = vpop.f32.mrf.mxu0
      %v3437 = vadd.f32 %v3132, %v3436
      %v3438 = vpop.f32.mrf.mxu0
      %3439 = vmatprep.mubr.bf16.mxu0 %v1691
      %3440 = vmatmul.mubr.bf16.gmra.mxu0 %v1595
      %v3441 = vpop.f32.mrf.mxu0
      %v3442 = vadd.f32 %v3137, %v3441
      %v3443 = vpop.f32.mrf.mxu0
      %v3444 = vpop.f32.mrf.mxu0
      %v3445 = vadd.f32 %v3140, %v3444
      %v3446 = vpop.f32.mrf.mxu0
      %3447 = vmatprep.mubr.bf16.mxu0 %v1692
      %3448 = vmatmul.mubr.bf16.gmra.mxu0 %v1596
      %v3449 = vpop.f32.mrf.mxu0
      %v3450 = vadd.f32 %v3145, %v3449
      %v3451 = vpop.f32.mrf.mxu0
      %v3452 = vpop.f32.mrf.mxu0
      %v3453 = vadd.f32 %v3148, %v3452
      %v3454 = vpop.f32.mrf.mxu0
      %3455 = vmatprep.mubr.bf16.mxu0 %v1693
      %3456 = vmatmul.mubr.bf16.gmra.mxu0 %v1597
      %v3457 = vpop.f32.mrf.mxu0
      %v3458 = vadd.f32 %v3153, %v3457
      %v3459 = vpop.f32.mrf.mxu0
      %v3460 = vpop.f32.mrf.mxu0
      %v3461 = vadd.f32 %v3156, %v3460
      %v3462 = vpop.f32.mrf.mxu0
      %3463 = vmatprep.mubr.bf16.mxu0 %v1694
      %3464 = vmatmul.mubr.bf16.gmra.mxu0 %v1598
      %v3465 = vpop.f32.mrf.mxu0
      %v3466 = vadd.f32 %v3161, %v3465
      %v3467 = vpop.f32.mrf.mxu0
      %v3468 = vpop.f32.mrf.mxu0
      %v3469 = vadd.f32 %v3164, %v3468
      %v3470 = vpop.f32.mrf.mxu0
      %3471 = vmatprep.mubr.bf16.mxu0 %v1695
      %3472 = vmatmul.mubr.bf16.gmra.mxu0 %v1599
      %v3473 = vpop.f32.mrf.mxu0
      %v3474 = vadd.f32 %v3169, %v3473
      %v3475 = vpop.f32.mrf.mxu0
      %v3476 = vpop.f32.mrf.mxu0
      %v3477 = vadd.f32 %v3172, %v3476
      %v3478 = vpop.f32.mrf.mxu0
      %3479 = vmatprep.mubr.bf16.mxu0 %v1696
      %3480 = vmatmul.mubr.bf16.gmra.mxu0 %v1600
      %v3481 = vpop.f32.mrf.mxu0
      %v3482 = vadd.f32 %v3177, %v3481
      %v3483 = vpop.f32.mrf.mxu0
      %v3484 = vpop.f32.mrf.mxu0
      %v3485 = vadd.f32 %v3180, %v3484
      %v3486 = vpop.f32.mrf.mxu0
      %3487 = vmatprep.mubr.bf16.mxu0 %v1697
      %3488 = vmatmul.mubr.bf16.gmra.mxu0 %v1601
      %v3489 = vpop.f32.mrf.mxu0
      %v3490 = vadd.f32 %v3185, %v3489
      %v3491 = vpop.f32.mrf.mxu0
      %v3492 = vpop.f32.mrf.mxu0
      %v3493 = vadd.f32 %v3188, %v3492
      %v3494 = vpop.f32.mrf.mxu0
      %3495 = vmatprep.mubr.bf16.mxu0 %v1698
      %3496 = vmatmul.mubr.bf16.gmra.mxu0 %v1602
      %v3497 = vpop.f32.mrf.mxu0
      %v3498 = vadd.f32 %v3193, %v3497
      %v3499 = vpop.f32.mrf.mxu0
      %v3500 = vpop.f32.mrf.mxu0
      %v3501 = vadd.f32 %v3196, %v3500
      %v3502 = vpop.f32.mrf.mxu0
      %3503 = vmatprep.mubr.bf16.mxu0 %v1699
      %3504 = vmatmul.mubr.bf16.gmra.mxu0 %v1603
      %v3505 = vpop.f32.mrf.mxu0
      %v3506 = vadd.f32 %v3201, %v3505
      %v3507 = vpop.f32.mrf.mxu0
      %v3508 = vpop.f32.mrf.mxu0
      %v3509 = vadd.f32 %v3204, %v3508
      %v3510 = vpop.f32.mrf.mxu0
      %3511 = vdwg.mxu0
      %3512 = vmatprep.subr.bf16.mxu0 0
      %3513 = vmatpush1.bf16.msra.mxu0 %v3326
      %3514 = vmatprep.subr.bf16.mxu0 0
      %3515 = vmatpush1.bf16.msra.mxu0 %v3325
      %3516 = vmatprep.subr.bf16.mxu0 0
      %3517 = vmatpush1.bf16.msra.mxu0 %v3324
      %3518 = vmatprep.subr.bf16.mxu0 0
      %3519 = vmatpush1.bf16.msra.mxu0 %v3323
      %3520 = vmatprep.subr.bf16.mxu0 0
      %3521 = vmatpush1.bf16.msra.mxu0 %v3322
      %3522 = vmatprep.subr.bf16.mxu0 0
      %3523 = vmatpush1.bf16.msra.mxu0 %v3321
      %3524 = vmatprep.subr.bf16.mxu0 0
      %3525 = vmatpush1.bf16.msra.mxu0 %v3320
      %3526 = vmatprep.subr.bf16.mxu0 0
      %3527 = vmatpush1.bf16.msra.mxu0 %v3319
      %3528 = vmatprep.subr.bf16.mxu0 0
      %3529 = vmatpush2.bf16.msra.mxu0 0
      %3530 = vmatprep.subr.bf16.mxu0 0
      %3531 = vmatpush2.bf16.msra.mxu0 0
      %3532 = vmatprep.subr.bf16.mxu0 0
      %3533 = vmatpush2.bf16.msra.mxu0 0
      %3534 = vmatprep.subr.bf16.mxu0 0
      %3535 = vmatpush2.bf16.msra.mxu0 0
      %3536 = vmatprep.subr.bf16.mxu0 0
      %3537 = vmatpush2.bf16.msra.mxu0 0
      %3538 = vmatprep.subr.bf16.mxu0 0
      %3539 = vmatpush2.bf16.msra.mxu0 0
      %3540 = vmatprep.subr.bf16.mxu0 0
      %3541 = vmatpush2.bf16.msra.mxu0 0
      %3542 = vmatprep.subr.bf16.mxu0 0
      %3543 = vmatpush2.bf16.msra.mxu0 0
      %3544 = vmatprep.mubr.bf16.mxu0 0
      %3545 = vmatmul.mubr.bf16.gmra.mxu0 %v1748
      %v3546 = vpop.f32.mrf.mxu0
      %v3547 = vadd.f32 %v3386, %v3546
      %v3548 = vpop.f32.mrf.mxu0
      %v3549 = vpop.f32.mrf.mxu0
      %v3550 = vadd.f32 %v3389, %v3549
      %v3551 = vpop.f32.mrf.mxu0
      %3552 = vmatprep.mubr.bf16.mxu0 0
      %3553 = vmatmul.mubr.bf16.gmra.mxu0 %v1749
      %v3554 = vpop.f32.mrf.mxu0
      %v3555 = vadd.f32 %v3394, %v3554
      %v3556 = vpop.f32.mrf.mxu0
      %v3557 = vpop.f32.mrf.mxu0
      %v3558 = vadd.f32 %v3397, %v3557
      %v3559 = vpop.f32.mrf.mxu0
      %3560 = vmatprep.mubr.bf16.mxu0 0
      %3561 = vmatmul.mubr.bf16.gmra.mxu0 %v1750
      %v3562 = vpop.f32.mrf.mxu0
      %v3563 = vadd.f32 %v3402, %v3562
      %v3564 = vpop.f32.mrf.mxu0
      %v3565 = vpop.f32.mrf.mxu0
      %v3566 = vadd.f32 %v3405, %v3565
      %v3567 = vpop.f32.mrf.mxu0
      %3568 = vmatprep.mubr.bf16.mxu0 0
      %3569 = vmatmul.mubr.bf16.gmra.mxu0 %v1751
      %v3570 = vpop.f32.mrf.mxu0
      %v3571 = vadd.f32 %v3410, %v3570
      %v3572 = vpop.f32.mrf.mxu0
      %v3573 = vpop.f32.mrf.mxu0
      %v3574 = vadd.f32 %v3413, %v3573
      %v3575 = vpop.f32.mrf.mxu0
      %3576 = vmatprep.mubr.bf16.mxu0 0
      %3577 = vmatmul.mubr.bf16.gmra.mxu0 %v1752
      %v3578 = vpop.f32.mrf.mxu0
      %v3579 = vadd.f32 %v3418, %v3578
      %v3580 = vpop.f32.mrf.mxu0
      %v3581 = vpop.f32.mrf.mxu0
      %v3582 = vadd.f32 %v3421, %v3581
      %v3583 = vpop.f32.mrf.mxu0
      %3584 = vmatprep.mubr.bf16.mxu0 0
      %3585 = vmatmul.mubr.bf16.gmra.mxu0 %v1753
      %v3586 = vpop.f32.mrf.mxu0
      %v3587 = vadd.f32 %v3426, %v3586
      %v3588 = vpop.f32.mrf.mxu0
      %v3589 = vpop.f32.mrf.mxu0
      %v3590 = vadd.f32 %v3429, %v3589
      %v3591 = vpop.f32.mrf.mxu0
      %3592 = vmatprep.mubr.bf16.mxu0 0
      %3593 = vmatmul.mubr.bf16.gmra.mxu0 %v1754
      %v3594 = vpop.f32.mrf.mxu0
      %v3595 = vadd.f32 %v3434, %v3594
      %v3596 = vpop.f32.mrf.mxu0
      %v3597 = vpop.f32.mrf.mxu0
      %v3598 = vadd.f32 %v3437, %v3597
      %v3599 = vpop.f32.mrf.mxu0
      %3600 = vmatprep.mubr.bf16.mxu0 0
      %3601 = vmatmul.mubr.bf16.gmra.mxu0 %v1755
      %v3602 = vpop.f32.mrf.mxu0
      %v3603 = vadd.f32 %v3442, %v3602
      %v3604 = vpop.f32.mrf.mxu0
      %v3605 = vpop.f32.mrf.mxu0
      %v3606 = vadd.f32 %v3445, %v3605
      %v3607 = vpop.f32.mrf.mxu0
      %3608 = vmatprep.mubr.bf16.mxu0 0
      %3609 = vmatmul.mubr.bf16.gmra.mxu0 %v1756
      %v3610 = vpop.f32.mrf.mxu0
      %v3611 = vadd.f32 %v3450, %v3610
      %v3612 = vpop.f32.mrf.mxu0
      %v3613 = vpop.f32.mrf.mxu0
      %v3614 = vadd.f32 %v3453, %v3613
      %v3615 = vpop.f32.mrf.mxu0
      %3616 = vmatprep.mubr.bf16.mxu0 0
      %3617 = vmatmul.mubr.bf16.gmra.mxu0 %v1757
      %v3618 = vpop.f32.mrf.mxu0
      %v3619 = vadd.f32 %v3458, %v3618
      %v3620 = vpop.f32.mrf.mxu0
      %v3621 = vpop.f32.mrf.mxu0
      %v3622 = vadd.f32 %v3461, %v3621
      %v3623 = vpop.f32.mrf.mxu0
      %3624 = vmatprep.mubr.bf16.mxu0 0
      %3625 = vmatmul.mubr.bf16.gmra.mxu0 %v1758
      %v3626 = vpop.f32.mrf.mxu0
      %v3627 = vadd.f32 %v3466, %v3626
      %v3628 = vpop.f32.mrf.mxu0
      %v3629 = vpop.f32.mrf.mxu0
      %v3630 = vadd.f32 %v3469, %v3629
      %v3631 = vpop.f32.mrf.mxu0
      %3632 = vmatprep.mubr.bf16.mxu0 0
      %3633 = vmatmul.mubr.bf16.gmra.mxu0 %v1759
      %v3634 = vpop.f32.mrf.mxu0
      %v3635 = vadd.f32 %v3474, %v3634
      %v3636 = vpop.f32.mrf.mxu0
      %v3637 = vpop.f32.mrf.mxu0
      %v3638 = vadd.f32 %v3477, %v3637
      %v3639 = vpop.f32.mrf.mxu0
      %3640 = vmatprep.mubr.bf16.mxu0 0
      %3641 = vmatmul.mubr.bf16.gmra.mxu0 %v1760
      %v3642 = vpop.f32.mrf.mxu0
      %v3643 = vadd.f32 %v3482, %v3642
      %v3644 = vpop.f32.mrf.mxu0
      %v3645 = vpop.f32.mrf.mxu0
      %v3646 = vadd.f32 %v3485, %v3645
      %v3647 = vpop.f32.mrf.mxu0
      %3648 = vmatprep.mubr.bf16.mxu0 0
      %3649 = vmatmul.mubr.bf16.gmra.mxu0 %v1761
      %v3650 = vpop.f32.mrf.mxu0
      %v3651 = vadd.f32 %v3490, %v3650
      %v3652 = vpop.f32.mrf.mxu0
      %v3653 = vpop.f32.mrf.mxu0
      %v3654 = vadd.f32 %v3493, %v3653
      %v3655 = vpop.f32.mrf.mxu0
      %3656 = vmatprep.mubr.bf16.mxu0 0
      %3657 = vmatmul.mubr.bf16.gmra.mxu0 %v1762
      %v3658 = vpop.f32.mrf.mxu0
      %v3659 = vadd.f32 %v3498, %v3658
      %v3660 = vpop.f32.mrf.mxu0
      %v3661 = vpop.f32.mrf.mxu0
      %v3662 = vadd.f32 %v3501, %v3661
      %v3663 = vpop.f32.mrf.mxu0
      %3664 = vmatprep.mubr.bf16.mxu0 0
      %3665 = vmatmul.mubr.bf16.gmra.mxu0 %v1763
      %v3666 = vpop.f32.mrf.mxu0
      %v3667 = vadd.f32 %v3506, %v3666
      %v3668 = vpop.f32.mrf.mxu0
      %v3669 = vpop.f32.mrf.mxu0
      %v3670 = vadd.f32 %v3509, %v3669
      %v3671 = vpop.f32.mrf.mxu0
      %3672 = vdwg.mxu0
      %s3673 = sadd.s32 0, 2
      %s3674 = smul.u32 %s3673, 4
      %s3675 = smul.addr %s3674, 4
      %s3676 = scalar_lea.vmem [#allocation2], %s3675
      %v3677 = vld [vmem:[%s3676] sm:$0x8]
      %v3678 = vld [vmem:[%s3676 + $0x4] sm:$0xf]
      %v3679 = vld [vmem:[%s3676 + $0x8] sm:$0xf]
      %v3680 = vld [vmem:[%s3676 + $0x10] sm:$0x8]
      %v3681 = vld [vmem:[%s3676 + $0x14] sm:$0xf]
      %v3682 = vld [vmem:[%s3676 + $0x18] sm:$0xf]
      %v3683 = vld [vmem:[%s3676 + $0x20] sm:$0x8]
      %v3684 = vld [vmem:[%s3676 + $0x24] sm:$0xf]
      %v3685 = vld [vmem:[%s3676 + $0x28] sm:$0xf]
      %v3686 = vld [vmem:[%s3676 + $0x30] sm:$0x8]
      %v3687 = vld [vmem:[%s3676 + $0x34] sm:$0xf]
      %v3688 = vld [vmem:[%s3676 + $0x38] sm:$0xf]
      %v3689 = vld [vmem:[%s3676 + $0x40] sm:$0x8]
      %v3690 = vld [vmem:[%s3676 + $0x44] sm:$0xf]
      %v3691 = vld [vmem:[%s3676 + $0x48] sm:$0xf]
      %v3692 = vld [vmem:[%s3676 + $0x50] sm:$0x8]
      %v3693 = vld [vmem:[%s3676 + $0x54] sm:$0xf]
      %v3694 = vld [vmem:[%s3676 + $0x58] sm:$0xf]
      %v3695 = vld [vmem:[%s3676 + $0x60] sm:$0x8]
      %v3696 = vld [vmem:[%s3676 + $0x64] sm:$0xf]
      %v3697 = vld [vmem:[%s3676 + $0x68] sm:$0xf]
      %v3698 = vld [vmem:[%s3676 + $0x70] sm:$0x8]
      %v3699 = vld [vmem:[%s3676 + $0x74] sm:$0xf]
      %v3700 = vld [vmem:[%s3676 + $0x78] sm:$0xf]
      %v3701 = vld [vmem:[%s3676 + $0x80] sm:$0x8]
      %v3702 = vld [vmem:[%s3676 + $0x84] sm:$0xf]
      %v3703 = vld [vmem:[%s3676 + $0x88] sm:$0xf]
      %v3704 = vld [vmem:[%s3676 + $0x90] sm:$0x8]
      %v3705 = vld [vmem:[%s3676 + $0x94] sm:$0xf]
      %v3706 = vld [vmem:[%s3676 + $0x98] sm:$0xf]
      %v3707 = vld [vmem:[%s3676 + $0xa0] sm:$0x8]
      %v3708 = vld [vmem:[%s3676 + $0xa4] sm:$0xf]
      %v3709 = vld [vmem:[%s3676 + $0xa8] sm:$0xf]
      %v3710 = vld [vmem:[%s3676 + $0xb0] sm:$0x8]
      %v3711 = vld [vmem:[%s3676 + $0xb4] sm:$0xf]
      %v3712 = vld [vmem:[%s3676 + $0xb8] sm:$0xf]
      %v3713 = vld [vmem:[%s3676 + $0xc0] sm:$0x8]
      %v3714 = vld [vmem:[%s3676 + $0xc4] sm:$0xf]
      %v3715 = vld [vmem:[%s3676 + $0xc8] sm:$0xf]
      %v3716 = vld [vmem:[%s3676 + $0xd0] sm:$0x8]
      %v3717 = vld [vmem:[%s3676 + $0xd4] sm:$0xf]
      %v3718 = vld [vmem:[%s3676 + $0xd8] sm:$0xf]
      %v3719 = vld [vmem:[%s3676 + $0xe0] sm:$0x8]
      %v3720 = vld [vmem:[%s3676 + $0xe4] sm:$0xf]
      %v3721 = vld [vmem:[%s3676 + $0xe8] sm:$0xf]
      %v3722 = vld [vmem:[%s3676 + $0xf0] sm:$0x8]
      %v3723 = vld [vmem:[%s3676 + $0xf4] sm:$0xf]
      %v3724 = vld [vmem:[%s3676 + $0xf8] sm:$0xf]
      %v3726 = vshrl.u32 %v3677, 16
      %v3728 = vrot.slane %v3726, 7
      %v3729 = vrot.slane %v3728, 4
      %v3731 = vshrl.u32 %v3678, 16
      %v3733 = vrot.slane %v3731, 7
      %v3734 = vshll.u32 %v3678, 16
      %v3736 = vor.u32 %v3733, %v3734
      %v3737 = vsel %vm960, %v3729, %v3736
      %v3738 = vrot.slane %v3733, 4
      %v3740 = vshrl.u32 %v3679, 16
      %v3742 = vrot.slane %v3740, 7
      %v3743 = vshll.u32 %v3679, 16
      %v3745 = vor.u32 %v3742, %v3743
      %v3746 = vsel %vm960, %v3738, %v3745
      %v3748 = vshrl.u32 %v3680, 16
      %v3750 = vrot.slane %v3748, 7
      %v3751 = vrot.slane %v3750, 4
      %v3753 = vshrl.u32 %v3681, 16
      %v3755 = vrot.slane %v3753, 7
      %v3756 = vshll.u32 %v3681, 16
      %v3758 = vor.u32 %v3755, %v3756
      %v3759 = vsel %vm960, %v3751, %v3758
      %v3760 = vrot.slane %v3755, 4
      %v3762 = vshrl.u32 %v3682, 16
      %v3764 = vrot.slane %v3762, 7
      %v3765 = vshll.u32 %v3682, 16
      %v3767 = vor.u32 %v3764, %v3765
      %v3768 = vsel %vm960, %v3760, %v3767
      %v3770 = vshrl.u32 %v3683, 16
      %v3772 = vrot.slane %v3770, 7
      %v3773 = vrot.slane %v3772, 4
      %v3775 = vshrl.u32 %v3684, 16
      %v3777 = vrot.slane %v3775, 7
      %v3778 = vshll.u32 %v3684, 16
      %v3780 = vor.u32 %v3777, %v3778
      %v3781 = vsel %vm960, %v3773, %v3780
      %v3782 = vrot.slane %v3777, 4
      %v3784 = vshrl.u32 %v3685, 16
      %v3786 = vrot.slane %v3784, 7
      %v3787 = vshll.u32 %v3685, 16
      %v3789 = vor.u32 %v3786, %v3787
      %v3790 = vsel %vm960, %v3782, %v3789
      %v3792 = vshrl.u32 %v3686, 16
      %v3794 = vrot.slane %v3792, 7
      %v3795 = vrot.slane %v3794, 4
      %v3797 = vshrl.u32 %v3687, 16
      %v3799 = vrot.slane %v3797, 7
      %v3800 = vshll.u32 %v3687, 16
      %v3802 = vor.u32 %v3799, %v3800
      %v3803 = vsel %vm960, %v3795, %v3802
      %v3804 = vrot.slane %v3799, 4
      %v3806 = vshrl.u32 %v3688, 16
      %v3808 = vrot.slane %v3806, 7
      %v3809 = vshll.u32 %v3688, 16
      %v3811 = vor.u32 %v3808, %v3809
      %v3812 = vsel %vm960, %v3804, %v3811
      %v3814 = vshrl.u32 %v3689, 16
      %v3816 = vrot.slane %v3814, 7
      %v3817 = vrot.slane %v3816, 4
      %v3819 = vshrl.u32 %v3690, 16
      %v3821 = vrot.slane %v3819, 7
      %v3822 = vshll.u32 %v3690, 16
      %v3824 = vor.u32 %v3821, %v3822
      %v3825 = vsel %vm960, %v3817, %v3824
      %v3826 = vrot.slane %v3821, 4
      %v3828 = vshrl.u32 %v3691, 16
      %v3830 = vrot.slane %v3828, 7
      %v3831 = vshll.u32 %v3691, 16
      %v3833 = vor.u32 %v3830, %v3831
      %v3834 = vsel %vm960, %v3826, %v3833
      %v3836 = vshrl.u32 %v3692, 16
      %v3838 = vrot.slane %v3836, 7
      %v3839 = vrot.slane %v3838, 4
      %v3841 = vshrl.u32 %v3693, 16
      %v3843 = vrot.slane %v3841, 7
      %v3844 = vshll.u32 %v3693, 16
      %v3846 = vor.u32 %v3843, %v3844
      %v3847 = vsel %vm960, %v3839, %v3846
      %v3848 = vrot.slane %v3843, 4
      %v3850 = vshrl.u32 %v3694, 16
      %v3852 = vrot.slane %v3850, 7
      %v3853 = vshll.u32 %v3694, 16
      %v3855 = vor.u32 %v3852, %v3853
      %v3856 = vsel %vm960, %v3848, %v3855
      %v3858 = vshrl.u32 %v3695, 16
      %v3860 = vrot.slane %v3858, 7
      %v3861 = vrot.slane %v3860, 4
      %v3863 = vshrl.u32 %v3696, 16
      %v3865 = vrot.slane %v3863, 7
      %v3866 = vshll.u32 %v3696, 16
      %v3868 = vor.u32 %v3865, %v3866
      %v3869 = vsel %vm960, %v3861, %v3868
      %v3870 = vrot.slane %v3865, 4
      %v3872 = vshrl.u32 %v3697, 16
      %v3874 = vrot.slane %v3872, 7
      %v3875 = vshll.u32 %v3697, 16
      %v3877 = vor.u32 %v3874, %v3875
      %v3878 = vsel %vm960, %v3870, %v3877
      %v3880 = vshrl.u32 %v3698, 16
      %v3882 = vrot.slane %v3880, 7
      %v3883 = vrot.slane %v3882, 4
      %v3885 = vshrl.u32 %v3699, 16
      %v3887 = vrot.slane %v3885, 7
      %v3888 = vshll.u32 %v3699, 16
      %v3890 = vor.u32 %v3887, %v3888
      %v3891 = vsel %vm960, %v3883, %v3890
      %v3892 = vrot.slane %v3887, 4
      %v3894 = vshrl.u32 %v3700, 16
      %v3896 = vrot.slane %v3894, 7
      %v3897 = vshll.u32 %v3700, 16
      %v3899 = vor.u32 %v3896, %v3897
      %v3900 = vsel %vm960, %v3892, %v3899
      %v3902 = vshrl.u32 %v3701, 16
      %v3904 = vrot.slane %v3902, 7
      %v3905 = vrot.slane %v3904, 4
      %v3907 = vshrl.u32 %v3702, 16
      %v3909 = vrot.slane %v3907, 7
      %v3910 = vshll.u32 %v3702, 16
      %v3912 = vor.u32 %v3909, %v3910
      %v3913 = vsel %vm960, %v3905, %v3912
      %v3914 = vrot.slane %v3909, 4
      %v3916 = vshrl.u32 %v3703, 16
      %v3918 = vrot.slane %v3916, 7
      %v3919 = vshll.u32 %v3703, 16
      %v3921 = vor.u32 %v3918, %v3919
      %v3922 = vsel %vm960, %v3914, %v3921
      %v3924 = vshrl.u32 %v3704, 16
      %v3926 = vrot.slane %v3924, 7
      %v3927 = vrot.slane %v3926, 4
      %v3929 = vshrl.u32 %v3705, 16
      %v3931 = vrot.slane %v3929, 7
      %v3932 = vshll.u32 %v3705, 16
      %v3934 = vor.u32 %v3931, %v3932
      %v3935 = vsel %vm960, %v3927, %v3934
      %v3936 = vrot.slane %v3931, 4
      %v3938 = vshrl.u32 %v3706, 16
      %v3940 = vrot.slane %v3938, 7
      %v3941 = vshll.u32 %v3706, 16
      %v3943 = vor.u32 %v3940, %v3941
      %v3944 = vsel %vm960, %v3936, %v3943
      %v3946 = vshrl.u32 %v3707, 16
      %v3948 = vrot.slane %v3946, 7
      %v3949 = vrot.slane %v3948, 4
      %v3951 = vshrl.u32 %v3708, 16
      %v3953 = vrot.slane %v3951, 7
      %v3954 = vshll.u32 %v3708, 16
      %v3956 = vor.u32 %v3953, %v3954
      %v3957 = vsel %vm960, %v3949, %v3956
      %v3958 = vrot.slane %v3953, 4
      %v3960 = vshrl.u32 %v3709, 16
      %v3962 = vrot.slane %v3960, 7
      %v3963 = vshll.u32 %v3709, 16
      %v3965 = vor.u32 %v3962, %v3963
      %v3966 = vsel %vm960, %v3958, %v3965
      %v3968 = vshrl.u32 %v3710, 16
      %v3970 = vrot.slane %v3968, 7
      %v3971 = vrot.slane %v3970, 4
      %v3973 = vshrl.u32 %v3711, 16
      %v3975 = vrot.slane %v3973, 7
      %v3976 = vshll.u32 %v3711, 16
      %v3978 = vor.u32 %v3975, %v3976
      %v3979 = vsel %vm960, %v3971, %v3978
      %v3980 = vrot.slane %v3975, 4
      %v3982 = vshrl.u32 %v3712, 16
      %v3984 = vrot.slane %v3982, 7
      %v3985 = vshll.u32 %v3712, 16
      %v3987 = vor.u32 %v3984, %v3985
      %v3988 = vsel %vm960, %v3980, %v3987
      %v3990 = vshrl.u32 %v3713, 16
      %v3992 = vrot.slane %v3990, 7
      %v3993 = vrot.slane %v3992, 4
      %v3995 = vshrl.u32 %v3714, 16
      %v3997 = vrot.slane %v3995, 7
      %v3998 = vshll.u32 %v3714, 16
      %v4000 = vor.u32 %v3997, %v3998
      %v4001 = vsel %vm960, %v3993, %v4000
      %v4002 = vrot.slane %v3997, 4
      %v4004 = vshrl.u32 %v3715, 16
      %v4006 = vrot.slane %v4004, 7
      %v4007 = vshll.u32 %v3715, 16
      %v4009 = vor.u32 %v4006, %v4007
      %v4010 = vsel %vm960, %v4002, %v4009
      %v4012 = vshrl.u32 %v3716, 16
      %v4014 = vrot.slane %v4012, 7
      %v4015 = vrot.slane %v4014, 4
      %v4017 = vshrl.u32 %v3717, 16
      %v4019 = vrot.slane %v4017, 7
      %v4020 = vshll.u32 %v3717, 16
      %v4022 = vor.u32 %v4019, %v4020
      %v4023 = vsel %vm960, %v4015, %v4022
      %v4024 = vrot.slane %v4019, 4
      %v4026 = vshrl.u32 %v3718, 16
      %v4028 = vrot.slane %v4026, 7
      %v4029 = vshll.u32 %v3718, 16
      %v4031 = vor.u32 %v4028, %v4029
      %v4032 = vsel %vm960, %v4024, %v4031
      %v4034 = vshrl.u32 %v3719, 16
      %v4036 = vrot.slane %v4034, 7
      %v4037 = vrot.slane %v4036, 4
      %v4039 = vshrl.u32 %v3720, 16
      %v4041 = vrot.slane %v4039, 7
      %v4042 = vshll.u32 %v3720, 16
      %v4044 = vor.u32 %v4041, %v4042
      %v4045 = vsel %vm960, %v4037, %v4044
      %v4046 = vrot.slane %v4041, 4
      %v4048 = vshrl.u32 %v3721, 16
      %v4050 = vrot.slane %v4048, 7
      %v4051 = vshll.u32 %v3721, 16
      %v4053 = vor.u32 %v4050, %v4051
      %v4054 = vsel %vm960, %v4046, %v4053
      %v4056 = vshrl.u32 %v3722, 16
      %v4058 = vrot.slane %v4056, 7
      %v4059 = vrot.slane %v4058, 4
      %v4061 = vshrl.u32 %v3723, 16
      %v4063 = vrot.slane %v4061, 7
      %v4064 = vshll.u32 %v3723, 16
      %v4066 = vor.u32 %v4063, %v4064
      %v4067 = vsel %vm960, %v4059, %v4066
      %v4068 = vrot.slane %v4063, 4
      %v4070 = vshrl.u32 %v3724, 16
      %v4072 = vrot.slane %v4070, 7
      %v4073 = vshll.u32 %v3724, 16
      %v4075 = vor.u32 %v4072, %v4073
      %v4076 = vsel %vm960, %v4068, %v4075
      %v4077 = vld [vmem:[%s3676 + $0xc] sm:$0x1]
      %v4078 = vld [vmem:[%s3676 + $0x1c] sm:$0x1]
      %v4079 = vld [vmem:[%s3676 + $0x2c] sm:$0x1]
      %v4080 = vld [vmem:[%s3676 + $0x3c] sm:$0x1]
      %v4081 = vld [vmem:[%s3676 + $0x4c] sm:$0x1]
      %v4082 = vld [vmem:[%s3676 + $0x5c] sm:$0x1]
      %v4083 = vld [vmem:[%s3676 + $0x6c] sm:$0x1]
      %v4084 = vld [vmem:[%s3676 + $0x7c] sm:$0x1]
      %v4085 = vld [vmem:[%s3676 + $0x8c] sm:$0x1]
      %v4086 = vld [vmem:[%s3676 + $0x9c] sm:$0x1]
      %v4087 = vld [vmem:[%s3676 + $0xac] sm:$0x1]
      %v4088 = vld [vmem:[%s3676 + $0xbc] sm:$0x1]
      %v4089 = vld [vmem:[%s3676 + $0xcc] sm:$0x1]
      %v4090 = vld [vmem:[%s3676 + $0xdc] sm:$0x1]
      %v4091 = vld [vmem:[%s3676 + $0xec] sm:$0x1]
      %v4092 = vld [vmem:[%s3676 + $0xfc] sm:$0x1]
      %v4093 = vrot.slane %v3731, 4
      %v4094 = vrot.slane %v3734, 5
      %v4095 = vor.u32 %v4093, %v4094
      %v4096 = vrot.slane %v4095, 4
      %v4097 = vrot.slane %v3743, 5
      %v4098 = vsel %vm1331, %v4096, %v4097
      %v4099 = vrot.slane %v3740, 4
      %v4100 = vor.u32 %v4099, %v4097
      %v4101 = vrot.slane %v4100, 4
      %v4103 = vshll.u32 %v4077, 16
      %v4105 = vrot.slane %v4103, 5
      %v4106 = vsel %vm1331, %v4101, %v4105
      %v4107 = vrot.slane %v3753, 4
      %v4108 = vrot.slane %v3756, 5
      %v4109 = vor.u32 %v4107, %v4108
      %v4110 = vrot.slane %v4109, 4
      %v4111 = vrot.slane %v3765, 5
      %v4112 = vsel %vm1331, %v4110, %v4111
      %v4113 = vrot.slane %v3762, 4
      %v4114 = vor.u32 %v4113, %v4111
      %v4115 = vrot.slane %v4114, 4
      %v4117 = vshll.u32 %v4078, 16
      %v4119 = vrot.slane %v4117, 5
      %v4120 = vsel %vm1331, %v4115, %v4119
      %v4121 = vrot.slane %v3775, 4
      %v4122 = vrot.slane %v3778, 5
      %v4123 = vor.u32 %v4121, %v4122
      %v4124 = vrot.slane %v4123, 4
      %v4125 = vrot.slane %v3787, 5
      %v4126 = vsel %vm1331, %v4124, %v4125
      %v4127 = vrot.slane %v3784, 4
      %v4128 = vor.u32 %v4127, %v4125
      %v4129 = vrot.slane %v4128, 4
      %v4131 = vshll.u32 %v4079, 16
      %v4133 = vrot.slane %v4131, 5
      %v4134 = vsel %vm1331, %v4129, %v4133
      %v4135 = vrot.slane %v3797, 4
      %v4136 = vrot.slane %v3800, 5
      %v4137 = vor.u32 %v4135, %v4136
      %v4138 = vrot.slane %v4137, 4
      %v4139 = vrot.slane %v3809, 5
      %v4140 = vsel %vm1331, %v4138, %v4139
      %v4141 = vrot.slane %v3806, 4
      %v4142 = vor.u32 %v4141, %v4139
      %v4143 = vrot.slane %v4142, 4
      %v4145 = vshll.u32 %v4080, 16
      %v4147 = vrot.slane %v4145, 5
      %v4148 = vsel %vm1331, %v4143, %v4147
      %v4149 = vrot.slane %v3819, 4
      %v4150 = vrot.slane %v3822, 5
      %v4151 = vor.u32 %v4149, %v4150
      %v4152 = vrot.slane %v4151, 4
      %v4153 = vrot.slane %v3831, 5
      %v4154 = vsel %vm1331, %v4152, %v4153
      %v4155 = vrot.slane %v3828, 4
      %v4156 = vor.u32 %v4155, %v4153
      %v4157 = vrot.slane %v4156, 4
      %v4159 = vshll.u32 %v4081, 16
      %v4161 = vrot.slane %v4159, 5
      %v4162 = vsel %vm1331, %v4157, %v4161
      %v4163 = vrot.slane %v3841, 4
      %v4164 = vrot.slane %v3844, 5
      %v4165 = vor.u32 %v4163, %v4164
      %v4166 = vrot.slane %v4165, 4
      %v4167 = vrot.slane %v3853, 5
      %v4168 = vsel %vm1331, %v4166, %v4167
      %v4169 = vrot.slane %v3850, 4
      %v4170 = vor.u32 %v4169, %v4167
      %v4171 = vrot.slane %v4170, 4
      %v4173 = vshll.u32 %v4082, 16
      %v4175 = vrot.slane %v4173, 5
      %v4176 = vsel %vm1331, %v4171, %v4175
      %v4177 = vrot.slane %v3863, 4
      %v4178 = vrot.slane %v3866, 5
      %v4179 = vor.u32 %v4177, %v4178
      %v4180 = vrot.slane %v4179, 4
      %v4181 = vrot.slane %v3875, 5
      %v4182 = vsel %vm1331, %v4180, %v4181
      %v4183 = vrot.slane %v3872, 4
      %v4184 = vor.u32 %v4183, %v4181
      %v4185 = vrot.slane %v4184, 4
      %v4187 = vshll.u32 %v4083, 16
      %v4189 = vrot.slane %v4187, 5
      %v4190 = vsel %vm1331, %v4185, %v4189
      %v4191 = vrot.slane %v3885, 4
      %v4192 = vrot.slane %v3888, 5
      %v4193 = vor.u32 %v4191, %v4192
      %v4194 = vrot.slane %v4193, 4
      %v4195 = vrot.slane %v3897, 5
      %v4196 = vsel %vm1331, %v4194, %v4195
      %v4197 = vrot.slane %v3894, 4
      %v4198 = vor.u32 %v4197, %v4195
      %v4199 = vrot.slane %v4198, 4
      %v4201 = vshll.u32 %v4084, 16
      %v4203 = vrot.slane %v4201, 5
      %v4204 = vsel %vm1331, %v4199, %v4203
      %v4205 = vrot.slane %v3907, 4
      %v4206 = vrot.slane %v3910, 5
      %v4207 = vor.u32 %v4205, %v4206
      %v4208 = vrot.slane %v4207, 4
      %v4209 = vrot.slane %v3919, 5
      %v4210 = vsel %vm1331, %v4208, %v4209
      %v4211 = vrot.slane %v3916, 4
      %v4212 = vor.u32 %v4211, %v4209
      %v4213 = vrot.slane %v4212, 4
      %v4215 = vshll.u32 %v4085, 16
      %v4217 = vrot.slane %v4215, 5
      %v4218 = vsel %vm1331, %v4213, %v4217
      %v4219 = vrot.slane %v3929, 4
      %v4220 = vrot.slane %v3932, 5
      %v4221 = vor.u32 %v4219, %v4220
      %v4222 = vrot.slane %v4221, 4
      %v4223 = vrot.slane %v3941, 5
      %v4224 = vsel %vm1331, %v4222, %v4223
      %v4225 = vrot.slane %v3938, 4
      %v4226 = vor.u32 %v4225, %v4223
      %v4227 = vrot.slane %v4226, 4
      %v4229 = vshll.u32 %v4086, 16
      %v4231 = vrot.slane %v4229, 5
      %v4232 = vsel %vm1331, %v4227, %v4231
      %v4233 = vrot.slane %v3951, 4
      %v4234 = vrot.slane %v3954, 5
      %v4235 = vor.u32 %v4233, %v4234
      %v4236 = vrot.slane %v4235, 4
      %v4237 = vrot.slane %v3963, 5
      %v4238 = vsel %vm1331, %v4236, %v4237
      %v4239 = vrot.slane %v3960, 4
      %v4240 = vor.u32 %v4239, %v4237
      %v4241 = vrot.slane %v4240, 4
      %v4243 = vshll.u32 %v4087, 16
      %v4245 = vrot.slane %v4243, 5
      %v4246 = vsel %vm1331, %v4241, %v4245
      %v4247 = vrot.slane %v3973, 4
      %v4248 = vrot.slane %v3976, 5
      %v4249 = vor.u32 %v4247, %v4248
      %v4250 = vrot.slane %v4249, 4
      %v4251 = vrot.slane %v3985, 5
      %v4252 = vsel %vm1331, %v4250, %v4251
      %v4253 = vrot.slane %v3982, 4
      %v4254 = vor.u32 %v4253, %v4251
      %v4255 = vrot.slane %v4254, 4
      %v4257 = vshll.u32 %v4088, 16
      %v4259 = vrot.slane %v4257, 5
      %v4260 = vsel %vm1331, %v4255, %v4259
      %v4261 = vrot.slane %v3995, 4
      %v4262 = vrot.slane %v3998, 5
      %v4263 = vor.u32 %v4261, %v4262
      %v4264 = vrot.slane %v4263, 4
      %v4265 = vrot.slane %v4007, 5
      %v4266 = vsel %vm1331, %v4264, %v4265
      %v4267 = vrot.slane %v4004, 4
      %v4268 = vor.u32 %v4267, %v4265
      %v4269 = vrot.slane %v4268, 4
      %v4271 = vshll.u32 %v4089, 16
      %v4273 = vrot.slane %v4271, 5
      %v4274 = vsel %vm1331, %v4269, %v4273
      %v4275 = vrot.slane %v4017, 4
      %v4276 = vrot.slane %v4020, 5
      %v4277 = vor.u32 %v4275, %v4276
      %v4278 = vrot.slane %v4277, 4
      %v4279 = vrot.slane %v4029, 5
      %v4280 = vsel %vm1331, %v4278, %v4279
      %v4281 = vrot.slane %v4026, 4
      %v4282 = vor.u32 %v4281, %v4279
      %v4283 = vrot.slane %v4282, 4
      %v4285 = vshll.u32 %v4090, 16
      %v4287 = vrot.slane %v4285, 5
      %v4288 = vsel %vm1331, %v4283, %v4287
      %v4289 = vrot.slane %v4039, 4
      %v4290 = vrot.slane %v4042, 5
      %v4291 = vor.u32 %v4289, %v4290
      %v4292 = vrot.slane %v4291, 4
      %v4293 = vrot.slane %v4051, 5
      %v4294 = vsel %vm1331, %v4292, %v4293
      %v4295 = vrot.slane %v4048, 4
      %v4296 = vor.u32 %v4295, %v4293
      %v4297 = vrot.slane %v4296, 4
      %v4299 = vshll.u32 %v4091, 16
      %v4301 = vrot.slane %v4299, 5
      %v4302 = vsel %vm1331, %v4297, %v4301
      %v4303 = vrot.slane %v4061, 4
      %v4304 = vrot.slane %v4064, 5
      %v4305 = vor.u32 %v4303, %v4304
      %v4306 = vrot.slane %v4305, 4
      %v4307 = vrot.slane %v4073, 5
      %v4308 = vsel %vm1331, %v4306, %v4307
      %v4309 = vrot.slane %v4070, 4
      %v4310 = vor.u32 %v4309, %v4307
      %v4311 = vrot.slane %v4310, 4
      %v4313 = vshll.u32 %v4092, 16
      %v4315 = vrot.slane %v4313, 5
      %v4316 = vsel %vm1331, %v4311, %v4315
      %v4317 = vunpack.c.l.b16 %v3737
      %v4318 = vunpack.c.l.b16 %v3746
      %v4319 = vunpack.c.l.b16 %v3759
      %v4320 = vunpack.c.l.b16 %v3768
      %v4321 = vunpack.c.l.b16 %v3781
      %v4322 = vunpack.c.l.b16 %v3790
      %v4323 = vunpack.c.l.b16 %v3803
      %v4324 = vunpack.c.l.b16 %v3812
      %v4325 = vunpack.c.l.b16 %v3825
      %v4326 = vunpack.c.l.b16 %v3834
      %v4327 = vunpack.c.l.b16 %v3847
      %v4328 = vunpack.c.l.b16 %v3856
      %v4329 = vunpack.c.l.b16 %v3869
      %v4330 = vunpack.c.l.b16 %v3878
      %v4331 = vunpack.c.l.b16 %v3891
      %v4332 = vunpack.c.l.b16 %v3900
      %v4333 = vunpack.c.l.b16 %v3913
      %v4334 = vunpack.c.l.b16 %v3922
      %v4335 = vunpack.c.l.b16 %v3935
      %v4336 = vunpack.c.l.b16 %v3944
      %v4337 = vunpack.c.l.b16 %v3957
      %v4338 = vunpack.c.l.b16 %v3966
      %v4339 = vunpack.c.l.b16 %v3979
      %v4340 = vunpack.c.l.b16 %v3988
      %v4341 = vunpack.c.l.b16 %v4001
      %v4342 = vunpack.c.l.b16 %v4010
      %v4343 = vunpack.c.l.b16 %v4023
      %v4344 = vunpack.c.l.b16 %v4032
      %v4345 = vunpack.c.l.b16 %v4045
      %v4346 = vunpack.c.l.b16 %v4054
      %v4347 = vunpack.c.l.b16 %v4067
      %v4348 = vunpack.c.l.b16 %v4076
      %v4349 = vpack.c.b16 %v4318, %v4317
      %v4350 = vpack.c.b16 %v4320, %v4319
      %v4351 = vpack.c.b16 %v4322, %v4321
      %v4352 = vpack.c.b16 %v4324, %v4323
      %v4353 = vpack.c.b16 %v4326, %v4325
      %v4354 = vpack.c.b16 %v4328, %v4327
      %v4355 = vpack.c.b16 %v4330, %v4329
      %v4356 = vpack.c.b16 %v4332, %v4331
      %v4357 = vpack.c.b16 %v4334, %v4333
      %v4358 = vpack.c.b16 %v4336, %v4335
      %v4359 = vpack.c.b16 %v4338, %v4337
      %v4360 = vpack.c.b16 %v4340, %v4339
      %v4361 = vpack.c.b16 %v4342, %v4341
      %v4362 = vpack.c.b16 %v4344, %v4343
      %v4363 = vpack.c.b16 %v4346, %v4345
      %v4364 = vpack.c.b16 %v4348, %v4347
      %v4413 = vunpack.c.l.b16 %v3678
      %v4414 = vunpack.c.l.b16 %v3679
      %v4415 = vunpack.c.l.b16 %v3681
      %v4416 = vunpack.c.l.b16 %v3682
      %v4417 = vunpack.c.l.b16 %v3684
      %v4418 = vunpack.c.l.b16 %v3685
      %v4419 = vunpack.c.l.b16 %v3687
      %v4420 = vunpack.c.l.b16 %v3688
      %v4421 = vunpack.c.l.b16 %v3690
      %v4422 = vunpack.c.l.b16 %v3691
      %v4423 = vunpack.c.l.b16 %v3693
      %v4424 = vunpack.c.l.b16 %v3694
      %v4425 = vunpack.c.l.b16 %v3696
      %v4426 = vunpack.c.l.b16 %v3697
      %v4427 = vunpack.c.l.b16 %v3699
      %v4428 = vunpack.c.l.b16 %v3700
      %v4429 = vunpack.c.l.b16 %v3702
      %v4430 = vunpack.c.l.b16 %v3703
      %v4431 = vunpack.c.l.b16 %v3705
      %v4432 = vunpack.c.l.b16 %v3706
      %v4433 = vunpack.c.l.b16 %v3708
      %v4434 = vunpack.c.l.b16 %v3709
      %v4435 = vunpack.c.l.b16 %v3711
      %v4436 = vunpack.c.l.b16 %v3712
      %v4437 = vunpack.c.l.b16 %v3714
      %v4438 = vunpack.c.l.b16 %v3715
      %v4439 = vunpack.c.l.b16 %v3717
      %v4440 = vunpack.c.l.b16 %v3718
      %v4441 = vunpack.c.l.b16 %v3720
      %v4442 = vunpack.c.l.b16 %v3721
      %v4443 = vunpack.c.l.b16 %v3723
      %v4444 = vunpack.c.l.b16 %v3724
      %v4445 = vpack.c.b16 %v4414, %v4413
      %v4446 = vpack.c.b16 %v4416, %v4415
      %v4447 = vpack.c.b16 %v4418, %v4417
      %v4448 = vpack.c.b16 %v4420, %v4419
      %v4449 = vpack.c.b16 %v4422, %v4421
      %v4450 = vpack.c.b16 %v4424, %v4423
      %v4451 = vpack.c.b16 %v4426, %v4425
      %v4452 = vpack.c.b16 %v4428, %v4427
      %v4453 = vpack.c.b16 %v4430, %v4429
      %v4454 = vpack.c.b16 %v4432, %v4431
      %v4455 = vpack.c.b16 %v4434, %v4433
      %v4456 = vpack.c.b16 %v4436, %v4435
      %v4457 = vpack.c.b16 %v4438, %v4437
      %v4458 = vpack.c.b16 %v4440, %v4439
      %v4459 = vpack.c.b16 %v4442, %v4441
      %v4460 = vpack.c.b16 %v4444, %v4443
      %v4477 = vunpack.c.l.b16 %v4098
      %v4478 = vunpack.c.l.b16 %v4106
      %v4479 = vunpack.c.l.b16 %v4112
      %v4480 = vunpack.c.l.b16 %v4120
      %v4481 = vunpack.c.l.b16 %v4126
      %v4482 = vunpack.c.l.b16 %v4134
      %v4483 = vunpack.c.l.b16 %v4140
      %v4484 = vunpack.c.l.b16 %v4148
      %v4485 = vunpack.c.l.b16 %v4154
      %v4486 = vunpack.c.l.b16 %v4162
      %v4487 = vunpack.c.l.b16 %v4168
      %v4488 = vunpack.c.l.b16 %v4176
      %v4489 = vunpack.c.l.b16 %v4182
      %v4490 = vunpack.c.l.b16 %v4190
      %v4491 = vunpack.c.l.b16 %v4196
      %v4492 = vunpack.c.l.b16 %v4204
      %v4493 = vunpack.c.l.b16 %v4210
      %v4494 = vunpack.c.l.b16 %v4218
      %v4495 = vunpack.c.l.b16 %v4224
      %v4496 = vunpack.c.l.b16 %v4232
      %v4497 = vunpack.c.l.b16 %v4238
      %v4498 = vunpack.c.l.b16 %v4246
      %v4499 = vunpack.c.l.b16 %v4252
      %v4500 = vunpack.c.l.b16 %v4260
      %v4501 = vunpack.c.l.b16 %v4266
      %v4502 = vunpack.c.l.b16 %v4274
      %v4503 = vunpack.c.l.b16 %v4280
      %v4504 = vunpack.c.l.b16 %v4288
      %v4505 = vunpack.c.l.b16 %v4294
      %v4506 = vunpack.c.l.b16 %v4302
      %v4507 = vunpack.c.l.b16 %v4308
      %v4508 = vunpack.c.l.b16 %v4316
      %v4509 = vpack.c.b16 %v4478, %v4477
      %v4510 = vpack.c.b16 %v4480, %v4479
      %v4511 = vpack.c.b16 %v4482, %v4481
      %v4512 = vpack.c.b16 %v4484, %v4483
      %v4513 = vpack.c.b16 %v4486, %v4485
      %v4514 = vpack.c.b16 %v4488, %v4487
      %v4515 = vpack.c.b16 %v4490, %v4489
      %v4516 = vpack.c.b16 %v4492, %v4491
      %v4517 = vpack.c.b16 %v4494, %v4493
      %v4518 = vpack.c.b16 %v4496, %v4495
      %v4519 = vpack.c.b16 %v4498, %v4497
      %v4520 = vpack.c.b16 %v4500, %v4499
      %v4521 = vpack.c.b16 %v4502, %v4501
      %v4522 = vpack.c.b16 %v4504, %v4503
      %v4523 = vpack.c.b16 %v4506, %v4505
      %v4524 = vpack.c.b16 %v4508, %v4507
      %s4541 = scalar_lea.vmem %s3, 384
      %v4542 = vld [vmem:[%s4541] sm:$0xf]
      %v4543 = vld [vmem:[%s4541 + $0x4] sm:$0xf]
      %v4544 = vld [vmem:[%s4541 + $0x8] sm:$0xf]
      %v4545 = vld [vmem:[%s4541 + $0xc] sm:$0xf]
      %v4546 = vld [vmem:[%s4541 + $0x10] sm:$0xf]
      %v4547 = vld [vmem:[%s4541 + $0x14] sm:$0xf]
      %v4548 = vld [vmem:[%s4541 + $0x18] sm:$0xf]
      %v4549 = vld [vmem:[%s4541 + $0x1c] sm:$0xf]
      %v4550 = vld [vmem:[%s4541 + $0x20] sm:$0xf]
      %v4551 = vld [vmem:[%s4541 + $0x24] sm:$0xf]
      %v4552 = vld [vmem:[%s4541 + $0x28] sm:$0xf]
      %v4553 = vld [vmem:[%s4541 + $0x2c] sm:$0xf]
      %v4554 = vld [vmem:[%s4541 + $0x30] sm:$0xf]
      %v4555 = vld [vmem:[%s4541 + $0x34] sm:$0xf]
      %v4556 = vld [vmem:[%s4541 + $0x38] sm:$0xf]
      %v4557 = vld [vmem:[%s4541 + $0x3c] sm:$0xf]
      %v4558 = vld [vmem:[%s4541 + $0x40] sm:$0xf]
      %v4559 = vld [vmem:[%s4541 + $0x44] sm:$0xf]
      %v4560 = vld [vmem:[%s4541 + $0x48] sm:$0xf]
      %v4561 = vld [vmem:[%s4541 + $0x4c] sm:$0xf]
      %v4562 = vld [vmem:[%s4541 + $0x50] sm:$0xf]
      %v4563 = vld [vmem:[%s4541 + $0x54] sm:$0xf]
      %v4564 = vld [vmem:[%s4541 + $0x58] sm:$0xf]
      %v4565 = vld [vmem:[%s4541 + $0x5c] sm:$0xf]
      %v4566 = vld [vmem:[%s4541 + $0x60] sm:$0xf]
      %v4567 = vld [vmem:[%s4541 + $0x64] sm:$0xf]
      %v4568 = vld [vmem:[%s4541 + $0x68] sm:$0xf]
      %v4569 = vld [vmem:[%s4541 + $0x6c] sm:$0xf]
      %v4570 = vld [vmem:[%s4541 + $0x70] sm:$0xf]
      %v4571 = vld [vmem:[%s4541 + $0x74] sm:$0xf]
      %v4572 = vld [vmem:[%s4541 + $0x78] sm:$0xf]
      %v4573 = vld [vmem:[%s4541 + $0x7c] sm:$0xf]
      %v4574 = vld [vmem:[%s4541 + $0x80] sm:$0xf]
      %v4575 = vld [vmem:[%s4541 + $0x84] sm:$0xf]
      %v4576 = vld [vmem:[%s4541 + $0x88] sm:$0xf]
      %v4577 = vld [vmem:[%s4541 + $0x8c] sm:$0xf]
      %v4578 = vld [vmem:[%s4541 + $0x90] sm:$0xf]
      %v4579 = vld [vmem:[%s4541 + $0x94] sm:$0xf]
      %v4580 = vld [vmem:[%s4541 + $0x98] sm:$0xf]
      %v4581 = vld [vmem:[%s4541 + $0x9c] sm:$0xf]
      %v4582 = vld [vmem:[%s4541 + $0xa0] sm:$0xf]
      %v4583 = vld [vmem:[%s4541 + $0xa4] sm:$0xf]
      %v4584 = vld [vmem:[%s4541 + $0xa8] sm:$0xf]
      %v4585 = vld [vmem:[%s4541 + $0xac] sm:$0xf]
      %v4586 = vld [vmem:[%s4541 + $0xb0] sm:$0xf]
      %v4587 = vld [vmem:[%s4541 + $0xb4] sm:$0xf]
      %v4588 = vld [vmem:[%s4541 + $0xb8] sm:$0xf]
      %v4589 = vld [vmem:[%s4541 + $0xbc] sm:$0xf]
      %v4638 = vunpack.c.l.b16 %v4542
      %v4639 = vunpack.c.l.b16 %v4543
      %v4640 = vunpack.c.l.b16 %v4544
      %v4641 = vunpack.c.l.b16 %v4545
      %v4642 = vunpack.c.l.b16 %v4546
      %v4643 = vunpack.c.l.b16 %v4547
      %v4644 = vunpack.c.l.b16 %v4548
      %v4645 = vunpack.c.l.b16 %v4549
      %v4646 = vunpack.c.l.b16 %v4550
      %v4647 = vunpack.c.l.b16 %v4551
      %v4648 = vunpack.c.l.b16 %v4552
      %v4649 = vunpack.c.l.b16 %v4553
      %v4650 = vunpack.c.l.b16 %v4554
      %v4651 = vunpack.c.l.b16 %v4555
      %v4652 = vunpack.c.l.b16 %v4556
      %v4653 = vunpack.c.l.b16 %v4557
      %v4654 = vunpack.c.l.b16 %v4558
      %v4655 = vunpack.c.l.b16 %v4559
      %v4656 = vunpack.c.l.b16 %v4560
      %v4657 = vunpack.c.l.b16 %v4561
      %v4658 = vunpack.c.l.b16 %v4562
      %v4659 = vunpack.c.l.b16 %v4563
      %v4660 = vunpack.c.l.b16 %v4564
      %v4661 = vunpack.c.l.b16 %v4565
      %v4662 = vunpack.c.l.b16 %v4566
      %v4663 = vunpack.c.l.b16 %v4567
      %v4664 = vunpack.c.l.b16 %v4568
      %v4665 = vunpack.c.l.b16 %v4569
      %v4666 = vunpack.c.l.b16 %v4570
      %v4667 = vunpack.c.l.b16 %v4571
      %v4668 = vunpack.c.l.b16 %v4572
      %v4669 = vunpack.c.l.b16 %v4573
      %v4670 = vunpack.c.l.b16 %v4574
      %v4671 = vunpack.c.l.b16 %v4575
      %v4672 = vunpack.c.l.b16 %v4576
      %v4673 = vunpack.c.l.b16 %v4577
      %v4674 = vunpack.c.l.b16 %v4578
      %v4675 = vunpack.c.l.b16 %v4579
      %v4676 = vunpack.c.l.b16 %v4580
      %v4677 = vunpack.c.l.b16 %v4581
      %v4678 = vunpack.c.l.b16 %v4582
      %v4679 = vunpack.c.l.b16 %v4583
      %v4680 = vunpack.c.l.b16 %v4584
      %v4681 = vunpack.c.l.b16 %v4585
      %v4682 = vunpack.c.l.b16 %v4586
      %v4683 = vunpack.c.l.b16 %v4587
      %v4684 = vunpack.c.l.b16 %v4588
      %v4685 = vunpack.c.l.b16 %v4589
      %v4686 = vpack.c.b16 %v4639, %v4638
      %v4687 = vpack.c.b16 %v4641, %v4640
      %v4688 = vpack.c.b16 %v4643, %v4642
      %v4689 = vpack.c.b16 %v4645, %v4644
      %v4690 = vpack.c.b16 %v4647, %v4646
      %v4691 = vpack.c.b16 %v4649, %v4648
      %v4692 = vpack.c.b16 %v4651, %v4650
      %v4693 = vpack.c.b16 %v4653, %v4652
      %v4694 = vpack.c.b16 %v4655, %v4654
      %v4695 = vpack.c.b16 %v4657, %v4656
      %v4696 = vpack.c.b16 %v4659, %v4658
      %v4697 = vpack.c.b16 %v4661, %v4660
      %v4698 = vpack.c.b16 %v4663, %v4662
      %v4699 = vpack.c.b16 %v4665, %v4664
      %v4700 = vpack.c.b16 %v4667, %v4666
      %v4701 = vpack.c.b16 %v4669, %v4668
      %v4702 = vpack.c.b16 %v4671, %v4670
      %v4703 = vpack.c.b16 %v4673, %v4672
      %v4704 = vpack.c.b16 %v4675, %v4674
      %v4705 = vpack.c.b16 %v4677, %v4676
      %v4706 = vpack.c.b16 %v4679, %v4678
      %v4707 = vpack.c.b16 %v4681, %v4680
      %v4708 = vpack.c.b16 %v4683, %v4682
      %v4709 = vpack.c.b16 %v4685, %v4684
      %4734 = vmatprep.subr.bf16.mxu0 0
      %4735 = vmatpush1.bf16.msra.mxu0 %v4693
      %4736 = vmatprep.subr.bf16.mxu0 0
      %4737 = vmatpush1.bf16.msra.mxu0 %v4692
      %4738 = vmatprep.subr.bf16.mxu0 0
      %4739 = vmatpush1.bf16.msra.mxu0 %v4691
      %4740 = vmatprep.subr.bf16.mxu0 0
      %4741 = vmatpush1.bf16.msra.mxu0 %v4690
      %4742 = vmatprep.subr.bf16.mxu0 0
      %4743 = vmatpush1.bf16.msra.mxu0 %v4689
      %4744 = vmatprep.subr.bf16.mxu0 0
      %4745 = vmatpush1.bf16.msra.mxu0 %v4688
      %4746 = vmatprep.subr.bf16.mxu0 0
      %4747 = vmatpush1.bf16.msra.mxu0 %v4687
      %4748 = vmatprep.subr.bf16.mxu0 0
      %4749 = vmatpush1.bf16.msra.mxu0 %v4686
      %4750 = vmatprep.subr.bf16.mxu0 0
      %4751 = vmatpush2.bf16.msra.mxu0 %v4701
      %4752 = vmatprep.subr.bf16.mxu0 0
      %4753 = vmatpush2.bf16.msra.mxu0 %v4700
      %4754 = vmatprep.subr.bf16.mxu0 0
      %4755 = vmatpush2.bf16.msra.mxu0 %v4699
      %4756 = vmatprep.subr.bf16.mxu0 0
      %4757 = vmatpush2.bf16.msra.mxu0 %v4698
      %4758 = vmatprep.subr.bf16.mxu0 0
      %4759 = vmatpush2.bf16.msra.mxu0 %v4697
      %4760 = vmatprep.subr.bf16.mxu0 0
      %4761 = vmatpush2.bf16.msra.mxu0 %v4696
      %4762 = vmatprep.subr.bf16.mxu0 0
      %4763 = vmatpush2.bf16.msra.mxu0 %v4695
      %4764 = vmatprep.subr.bf16.mxu0 0
      %4765 = vmatpush2.bf16.msra.mxu0 %v4694
      %4766 = vmatprep.mubr.bf16.mxu0 %v4445
      %4767 = vmatmul.mubr.bf16.gmra.mxu0 %v4349
      %v4768 = vpop.f32.mrf.mxu0
      %v4769 = vadd.f32 0.0, %v4768
      %v4770 = vpop.f32.mrf.mxu0
      %v4771 = vpop.f32.mrf.mxu0
      %v4772 = vadd.f32 0.0, %v4771
      %v4773 = vpop.f32.mrf.mxu0
      %4774 = vmatprep.mubr.bf16.mxu0 %v4446
      %4775 = vmatmul.mubr.bf16.gmra.mxu0 %v4350
      %v4776 = vpop.f32.mrf.mxu0
      %v4777 = vadd.f32 0.0, %v4776
      %v4778 = vpop.f32.mrf.mxu0
      %v4779 = vpop.f32.mrf.mxu0
      %v4780 = vadd.f32 0.0, %v4779
      %v4781 = vpop.f32.mrf.mxu0
      %4782 = vmatprep.mubr.bf16.mxu0 %v4447
      %4783 = vmatmul.mubr.bf16.gmra.mxu0 %v4351
      %v4784 = vpop.f32.mrf.mxu0
      %v4785 = vadd.f32 0.0, %v4784
      %v4786 = vpop.f32.mrf.mxu0
      %v4787 = vpop.f32.mrf.mxu0
      %v4788 = vadd.f32 0.0, %v4787
      %v4789 = vpop.f32.mrf.mxu0
      %4790 = vmatprep.mubr.bf16.mxu0 %v4448
      %4791 = vmatmul.mubr.bf16.gmra.mxu0 %v4352
      %v4792 = vpop.f32.mrf.mxu0
      %v4793 = vadd.f32 0.0, %v4792
      %v4794 = vpop.f32.mrf.mxu0
      %v4795 = vpop.f32.mrf.mxu0
      %v4796 = vadd.f32 0.0, %v4795
      %v4797 = vpop.f32.mrf.mxu0
      %4798 = vmatprep.mubr.bf16.mxu0 %v4449
      %4799 = vmatmul.mubr.bf16.gmra.mxu0 %v4353
      %v4800 = vpop.f32.mrf.mxu0
      %v4801 = vadd.f32 0.0, %v4800
      %v4802 = vpop.f32.mrf.mxu0
      %v4803 = vpop.f32.mrf.mxu0
      %v4804 = vadd.f32 0.0, %v4803
      %v4805 = vpop.f32.mrf.mxu0
      %4806 = vmatprep.mubr.bf16.mxu0 %v4450
      %4807 = vmatmul.mubr.bf16.gmra.mxu0 %v4354
      %v4808 = vpop.f32.mrf.mxu0
      %v4809 = vadd.f32 0.0, %v4808
      %v4810 = vpop.f32.mrf.mxu0
      %v4811 = vpop.f32.mrf.mxu0
      %v4812 = vadd.f32 0.0, %v4811
      %v4813 = vpop.f32.mrf.mxu0
      %4814 = vmatprep.mubr.bf16.mxu0 %v4451
      %4815 = vmatmul.mubr.bf16.gmra.mxu0 %v4355
      %v4816 = vpop.f32.mrf.mxu0
      %v4817 = vadd.f32 0.0, %v4816
      %v4818 = vpop.f32.mrf.mxu0
      %v4819 = vpop.f32.mrf.mxu0
      %v4820 = vadd.f32 0.0, %v4819
      %v4821 = vpop.f32.mrf.mxu0
      %4822 = vmatprep.mubr.bf16.mxu0 %v4452
      %4823 = vmatmul.mubr.bf16.gmra.mxu0 %v4356
      %v4824 = vpop.f32.mrf.mxu0
      %v4825 = vadd.f32 0.0, %v4824
      %v4826 = vpop.f32.mrf.mxu0
      %v4827 = vpop.f32.mrf.mxu0
      %v4828 = vadd.f32 0.0, %v4827
      %v4829 = vpop.f32.mrf.mxu0
      %4830 = vmatprep.mubr.bf16.mxu0 %v4453
      %4831 = vmatmul.mubr.bf16.gmra.mxu0 %v4357
      %v4832 = vpop.f32.mrf.mxu0
      %v4833 = vadd.f32 0.0, %v4832
      %v4834 = vpop.f32.mrf.mxu0
      %v4835 = vpop.f32.mrf.mxu0
      %v4836 = vadd.f32 0.0, %v4835
      %v4837 = vpop.f32.mrf.mxu0
      %4838 = vmatprep.mubr.bf16.mxu0 %v4454
      %4839 = vmatmul.mubr.bf16.gmra.mxu0 %v4358
      %v4840 = vpop.f32.mrf.mxu0
      %v4841 = vadd.f32 0.0, %v4840
      %v4842 = vpop.f32.mrf.mxu0
      %v4843 = vpop.f32.mrf.mxu0
      %v4844 = vadd.f32 0.0, %v4843
      %v4845 = vpop.f32.mrf.mxu0
      %4846 = vmatprep.mubr.bf16.mxu0 %v4455
      %4847 = vmatmul.mubr.bf16.gmra.mxu0 %v4359
      %v4848 = vpop.f32.mrf.mxu0
      %v4849 = vadd.f32 0.0, %v4848
      %v4850 = vpop.f32.mrf.mxu0
      %v4851 = vpop.f32.mrf.mxu0
      %v4852 = vadd.f32 0.0, %v4851
      %v4853 = vpop.f32.mrf.mxu0
      %4854 = vmatprep.mubr.bf16.mxu0 %v4456
      %4855 = vmatmul.mubr.bf16.gmra.mxu0 %v4360
      %v4856 = vpop.f32.mrf.mxu0
      %v4857 = vadd.f32 0.0, %v4856
      %v4858 = vpop.f32.mrf.mxu0
      %v4859 = vpop.f32.mrf.mxu0
      %v4860 = vadd.f32 0.0, %v4859
      %v4861 = vpop.f32.mrf.mxu0
      %4862 = vmatprep.mubr.bf16.mxu0 %v4457
      %4863 = vmatmul.mubr.bf16.gmra.mxu0 %v4361
      %v4864 = vpop.f32.mrf.mxu0
      %v4865 = vadd.f32 0.0, %v4864
      %v4866 = vpop.f32.mrf.mxu0
      %v4867 = vpop.f32.mrf.mxu0
      %v4868 = vadd.f32 0.0, %v4867
      %v4869 = vpop.f32.mrf.mxu0
      %4870 = vmatprep.mubr.bf16.mxu0 %v4458
      %4871 = vmatmul.mubr.bf16.gmra.mxu0 %v4362
      %v4872 = vpop.f32.mrf.mxu0
      %v4873 = vadd.f32 0.0, %v4872
      %v4874 = vpop.f32.mrf.mxu0
      %v4875 = vpop.f32.mrf.mxu0
      %v4876 = vadd.f32 0.0, %v4875
      %v4877 = vpop.f32.mrf.mxu0
      %4878 = vmatprep.mubr.bf16.mxu0 %v4459
      %4879 = vmatmul.mubr.bf16.gmra.mxu0 %v4363
      %v4880 = vpop.f32.mrf.mxu0
      %v4881 = vadd.f32 0.0, %v4880
      %v4882 = vpop.f32.mrf.mxu0
      %v4883 = vpop.f32.mrf.mxu0
      %v4884 = vadd.f32 0.0, %v4883
      %v4885 = vpop.f32.mrf.mxu0
      %4886 = vmatprep.mubr.bf16.mxu0 %v4460
      %4887 = vmatmul.mubr.bf16.gmra.mxu0 %v4364
      %v4888 = vpop.f32.mrf.mxu0
      %v4889 = vadd.f32 0.0, %v4888
      %v4890 = vpop.f32.mrf.mxu0
      %v4891 = vpop.f32.mrf.mxu0
      %v4892 = vadd.f32 0.0, %v4891
      %v4893 = vpop.f32.mrf.mxu0
      %4894 = vdwg.mxu0
      %4895 = vmatprep.subr.bf16.mxu0 0
      %4896 = vmatpush1.bf16.msra.mxu0 %v4709
      %4897 = vmatprep.subr.bf16.mxu0 0
      %4898 = vmatpush1.bf16.msra.mxu0 %v4708
      %4899 = vmatprep.subr.bf16.mxu0 0
      %4900 = vmatpush1.bf16.msra.mxu0 %v4707
      %4901 = vmatprep.subr.bf16.mxu0 0
      %4902 = vmatpush1.bf16.msra.mxu0 %v4706
      %4903 = vmatprep.subr.bf16.mxu0 0
      %4904 = vmatpush1.bf16.msra.mxu0 %v4705
      %4905 = vmatprep.subr.bf16.mxu0 0
      %4906 = vmatpush1.bf16.msra.mxu0 %v4704
      %4907 = vmatprep.subr.bf16.mxu0 0
      %4908 = vmatpush1.bf16.msra.mxu0 %v4703
      %4909 = vmatprep.subr.bf16.mxu0 0
      %4910 = vmatpush1.bf16.msra.mxu0 %v4702
      %4911 = vmatprep.subr.bf16.mxu0 0
      %4912 = vmatpush2.bf16.msra.mxu0 0
      %4913 = vmatprep.subr.bf16.mxu0 0
      %4914 = vmatpush2.bf16.msra.mxu0 0
      %4915 = vmatprep.subr.bf16.mxu0 0
      %4916 = vmatpush2.bf16.msra.mxu0 0
      %4917 = vmatprep.subr.bf16.mxu0 0
      %4918 = vmatpush2.bf16.msra.mxu0 0
      %4919 = vmatprep.subr.bf16.mxu0 0
      %4920 = vmatpush2.bf16.msra.mxu0 0
      %4921 = vmatprep.subr.bf16.mxu0 0
      %4922 = vmatpush2.bf16.msra.mxu0 0
      %4923 = vmatprep.subr.bf16.mxu0 0
      %4924 = vmatpush2.bf16.msra.mxu0 0
      %4925 = vmatprep.subr.bf16.mxu0 0
      %4926 = vmatpush2.bf16.msra.mxu0 0
      %4927 = vmatprep.mubr.bf16.mxu0 0
      %4928 = vmatmul.mubr.bf16.gmra.mxu0 %v4509
      %v4929 = vpop.f32.mrf.mxu0
      %v4930 = vadd.f32 %v4769, %v4929
      %v4931 = vpop.f32.mrf.mxu0
      %v4932 = vpop.f32.mrf.mxu0
      %v4933 = vadd.f32 %v4772, %v4932
      %v4934 = vpop.f32.mrf.mxu0
      %4935 = vmatprep.mubr.bf16.mxu0 0
      %4936 = vmatmul.mubr.bf16.gmra.mxu0 %v4510
      %v4937 = vpop.f32.mrf.mxu0
      %v4938 = vadd.f32 %v4777, %v4937
      %v4939 = vpop.f32.mrf.mxu0
      %v4940 = vpop.f32.mrf.mxu0
      %v4941 = vadd.f32 %v4780, %v4940
      %v4942 = vpop.f32.mrf.mxu0
      %4943 = vmatprep.mubr.bf16.mxu0 0
      %4944 = vmatmul.mubr.bf16.gmra.mxu0 %v4511
      %v4945 = vpop.f32.mrf.mxu0
      %v4946 = vadd.f32 %v4785, %v4945
      %v4947 = vpop.f32.mrf.mxu0
      %v4948 = vpop.f32.mrf.mxu0
      %v4949 = vadd.f32 %v4788, %v4948
      %v4950 = vpop.f32.mrf.mxu0
      %4951 = vmatprep.mubr.bf16.mxu0 0
      %4952 = vmatmul.mubr.bf16.gmra.mxu0 %v4512
      %v4953 = vpop.f32.mrf.mxu0
      %v4954 = vadd.f32 %v4793, %v4953
      %v4955 = vpop.f32.mrf.mxu0
      %v4956 = vpop.f32.mrf.mxu0
      %v4957 = vadd.f32 %v4796, %v4956
      %v4958 = vpop.f32.mrf.mxu0
      %4959 = vmatprep.mubr.bf16.mxu0 0
      %4960 = vmatmul.mubr.bf16.gmra.mxu0 %v4513
      %v4961 = vpop.f32.mrf.mxu0
      %v4962 = vadd.f32 %v4801, %v4961
      %v4963 = vpop.f32.mrf.mxu0
      %v4964 = vpop.f32.mrf.mxu0
      %v4965 = vadd.f32 %v4804, %v4964
      %v4966 = vpop.f32.mrf.mxu0
      %4967 = vmatprep.mubr.bf16.mxu0 0
      %4968 = vmatmul.mubr.bf16.gmra.mxu0 %v4514
      %v4969 = vpop.f32.mrf.mxu0
      %v4970 = vadd.f32 %v4809, %v4969
      %v4971 = vpop.f32.mrf.mxu0
      %v4972 = vpop.f32.mrf.mxu0
      %v4973 = vadd.f32 %v4812, %v4972
      %v4974 = vpop.f32.mrf.mxu0
      %4975 = vmatprep.mubr.bf16.mxu0 0
      %4976 = vmatmul.mubr.bf16.gmra.mxu0 %v4515
      %v4977 = vpop.f32.mrf.mxu0
      %v4978 = vadd.f32 %v4817, %v4977
      %v4979 = vpop.f32.mrf.mxu0
      %v4980 = vpop.f32.mrf.mxu0
      %v4981 = vadd.f32 %v4820, %v4980
      %v4982 = vpop.f32.mrf.mxu0
      %4983 = vmatprep.mubr.bf16.mxu0 0
      %4984 = vmatmul.mubr.bf16.gmra.mxu0 %v4516
      %v4985 = vpop.f32.mrf.mxu0
      %v4986 = vadd.f32 %v4825, %v4985
      %v4987 = vpop.f32.mrf.mxu0
      %v4988 = vpop.f32.mrf.mxu0
      %v4989 = vadd.f32 %v4828, %v4988
      %v4990 = vpop.f32.mrf.mxu0
      %4991 = vmatprep.mubr.bf16.mxu0 0
      %4992 = vmatmul.mubr.bf16.gmra.mxu0 %v4517
      %v4993 = vpop.f32.mrf.mxu0
      %v4994 = vadd.f32 %v4833, %v4993
      %v4995 = vpop.f32.mrf.mxu0
      %v4996 = vpop.f32.mrf.mxu0
      %v4997 = vadd.f32 %v4836, %v4996
      %v4998 = vpop.f32.mrf.mxu0
      %4999 = vmatprep.mubr.bf16.mxu0 0
      %5000 = vmatmul.mubr.bf16.gmra.mxu0 %v4518
      %v5001 = vpop.f32.mrf.mxu0
      %v5002 = vadd.f32 %v4841, %v5001
      %v5003 = vpop.f32.mrf.mxu0
      %v5004 = vpop.f32.mrf.mxu0
      %v5005 = vadd.f32 %v4844, %v5004
      %v5006 = vpop.f32.mrf.mxu0
      %5007 = vmatprep.mubr.bf16.mxu0 0
      %5008 = vmatmul.mubr.bf16.gmra.mxu0 %v4519
      %v5009 = vpop.f32.mrf.mxu0
      %v5010 = vadd.f32 %v4849, %v5009
      %v5011 = vpop.f32.mrf.mxu0
      %v5012 = vpop.f32.mrf.mxu0
      %v5013 = vadd.f32 %v4852, %v5012
      %v5014 = vpop.f32.mrf.mxu0
      %5015 = vmatprep.mubr.bf16.mxu0 0
      %5016 = vmatmul.mubr.bf16.gmra.mxu0 %v4520
      %v5017 = vpop.f32.mrf.mxu0
      %v5018 = vadd.f32 %v4857, %v5017
      %v5019 = vpop.f32.mrf.mxu0
      %v5020 = vpop.f32.mrf.mxu0
      %v5021 = vadd.f32 %v4860, %v5020
      %v5022 = vpop.f32.mrf.mxu0
      %5023 = vmatprep.mubr.bf16.mxu0 0
      %5024 = vmatmul.mubr.bf16.gmra.mxu0 %v4521
      %v5025 = vpop.f32.mrf.mxu0
      %v5026 = vadd.f32 %v4865, %v5025
      %v5027 = vpop.f32.mrf.mxu0
      %v5028 = vpop.f32.mrf.mxu0
      %v5029 = vadd.f32 %v4868, %v5028
      %v5030 = vpop.f32.mrf.mxu0
      %5031 = vmatprep.mubr.bf16.mxu0 0
      %5032 = vmatmul.mubr.bf16.gmra.mxu0 %v4522
      %v5033 = vpop.f32.mrf.mxu0
      %v5034 = vadd.f32 %v4873, %v5033
      %v5035 = vpop.f32.mrf.mxu0
      %v5036 = vpop.f32.mrf.mxu0
      %v5037 = vadd.f32 %v4876, %v5036
      %v5038 = vpop.f32.mrf.mxu0
      %5039 = vmatprep.mubr.bf16.mxu0 0
      %5040 = vmatmul.mubr.bf16.gmra.mxu0 %v4523
      %v5041 = vpop.f32.mrf.mxu0
      %v5042 = vadd.f32 %v4881, %v5041
      %v5043 = vpop.f32.mrf.mxu0
      %v5044 = vpop.f32.mrf.mxu0
      %v5045 = vadd.f32 %v4884, %v5044
      %v5046 = vpop.f32.mrf.mxu0
      %5047 = vmatprep.mubr.bf16.mxu0 0
      %5048 = vmatmul.mubr.bf16.gmra.mxu0 %v4524
      %v5049 = vpop.f32.mrf.mxu0
      %v5050 = vadd.f32 %v4889, %v5049
      %v5051 = vpop.f32.mrf.mxu0
      %v5052 = vpop.f32.mrf.mxu0
      %v5053 = vadd.f32 %v4892, %v5052
      %v5054 = vpop.f32.mrf.mxu0
      %5055 = vdwg.mxu0
      %v5056 = vadd.f32 %v3547, %v4930
      %v5057 = vadd.f32 %v3550, %v4933
      %v5058 = vadd.f32 %v3555, %v4938
      %v5059 = vadd.f32 %v3558, %v4941
      %v5060 = vadd.f32 %v3563, %v4946
      %v5061 = vadd.f32 %v3566, %v4949
      %v5062 = vadd.f32 %v3571, %v4954
      %v5063 = vadd.f32 %v3574, %v4957
      %v5064 = vadd.f32 %v3579, %v4962
      %v5065 = vadd.f32 %v3582, %v4965
      %v5066 = vadd.f32 %v3587, %v4970
      %v5067 = vadd.f32 %v3590, %v4973
      %v5068 = vadd.f32 %v3595, %v4978
      %v5069 = vadd.f32 %v3598, %v4981
      %v5070 = vadd.f32 %v3603, %v4986
      %v5071 = vadd.f32 %v3606, %v4989
      %v5072 = vadd.f32 %v3611, %v4994
      %v5073 = vadd.f32 %v3614, %v4997
      %v5074 = vadd.f32 %v3619, %v5002
      %v5075 = vadd.f32 %v3622, %v5005
      %v5076 = vadd.f32 %v3627, %v5010
      %v5077 = vadd.f32 %v3630, %v5013
      %v5078 = vadd.f32 %v3635, %v5018
      %v5079 = vadd.f32 %v3638, %v5021
      %v5080 = vadd.f32 %v3643, %v5026
      %v5081 = vadd.f32 %v3646, %v5029
      %v5082 = vadd.f32 %v3651, %v5034
      %v5083 = vadd.f32 %v3654, %v5037
      %v5084 = vadd.f32 %v3659, %v5042
      %v5085 = vadd.f32 %v3662, %v5045
      %v5086 = vadd.f32 %v3667, %v5050
      %v5087 = vadd.f32 %v3670, %v5053
      %v5088 = vld [vmem:[%s4] sm:$0x1]
      %v5090 = vlaneseq
      %v5091 = vshrl.u32 %v5090, 7
      %v5092 = vsub.s32 0, %v5091
      %v5093 = vrot.slane %v5088, %v5092
      %v5095 = vadd.f32 %v5056, %v5093
      %v5096 = vadd.f32 %v5057, %v5093
      %v5097 = vadd.f32 %v5058, %v5093
      %v5098 = vadd.f32 %v5059, %v5093
      %v5099 = vadd.f32 %v5060, %v5093
      %v5100 = vadd.f32 %v5061, %v5093
      %v5101 = vadd.f32 %v5062, %v5093
      %v5102 = vadd.f32 %v5063, %v5093
      %v5103 = vadd.f32 %v5064, %v5093
      %v5104 = vadd.f32 %v5065, %v5093
      %v5105 = vadd.f32 %v5066, %v5093
      %v5106 = vadd.f32 %v5067, %v5093
      %v5107 = vadd.f32 %v5068, %v5093
      %v5108 = vadd.f32 %v5069, %v5093
      %v5109 = vadd.f32 %v5070, %v5093
      %v5110 = vadd.f32 %v5071, %v5093
      %v5111 = vadd.f32 %v5072, %v5093
      %v5112 = vadd.f32 %v5073, %v5093
      %v5113 = vadd.f32 %v5074, %v5093
      %v5114 = vadd.f32 %v5075, %v5093
      %v5115 = vadd.f32 %v5076, %v5093
      %v5116 = vadd.f32 %v5077, %v5093
      %v5117 = vadd.f32 %v5078, %v5093
      %v5118 = vadd.f32 %v5079, %v5093
      %v5119 = vadd.f32 %v5080, %v5093
      %v5120 = vadd.f32 %v5081, %v5093
      %v5121 = vadd.f32 %v5082, %v5093
      %v5122 = vadd.f32 %v5083, %v5093
      %v5123 = vadd.f32 %v5084, %v5093
      %v5124 = vadd.f32 %v5085, %v5093
      %v5125 = vadd.f32 %v5086, %v5093
      %v5126 = vadd.f32 %v5087, %v5093
      %v5127 = vmax.f32 %v5095, 0.0
      %v5128 = vmax.f32 %v5096, 0.0
      %v5129 = vmax.f32 %v5097, 0.0
      %v5130 = vmax.f32 %v5098, 0.0
      %v5131 = vmax.f32 %v5099, 0.0
      %v5132 = vmax.f32 %v5100, 0.0
      %v5133 = vmax.f32 %v5101, 0.0
      %v5134 = vmax.f32 %v5102, 0.0
      %v5135 = vmax.f32 %v5103, 0.0
      %v5136 = vmax.f32 %v5104, 0.0
      %v5137 = vmax.f32 %v5105, 0.0
      %v5138 = vmax.f32 %v5106, 0.0
      %v5139 = vmax.f32 %v5107, 0.0
      %v5140 = vmax.f32 %v5108, 0.0
      %v5141 = vmax.f32 %v5109, 0.0
      %v5142 = vmax.f32 %v5110, 0.0
      %v5143 = vmax.f32 %v5111, 0.0
      %v5144 = vmax.f32 %v5112, 0.0
      %v5145 = vmax.f32 %v5113, 0.0
      %v5146 = vmax.f32 %v5114, 0.0
      %v5147 = vmax.f32 %v5115, 0.0
      %v5148 = vmax.f32 %v5116, 0.0
      %v5149 = vmax.f32 %v5117, 0.0
      %v5150 = vmax.f32 %v5118, 0.0
      %v5151 = vmax.f32 %v5119, 0.0
      %v5152 = vmax.f32 %v5120, 0.0
      %v5153 = vmax.f32 %v5121, 0.0
      %v5154 = vmax.f32 %v5122, 0.0
      %v5155 = vmax.f32 %v5123, 0.0
      %v5156 = vmax.f32 %v5124, 0.0
      %v5157 = vmax.f32 %v5125, 0.0
      %v5158 = vmax.f32 %v5126, 0.0
      %v5159 = vpack.c.bf16 %v5128, %v5127
      %v5160 = vpack.c.bf16 %v5130, %v5129
      %v5161 = vpack.c.bf16 %v5132, %v5131
      %v5162 = vpack.c.bf16 %v5134, %v5133
      %v5163 = vpack.c.bf16 %v5136, %v5135
      %v5164 = vpack.c.bf16 %v5138, %v5137
      %v5165 = vpack.c.bf16 %v5140, %v5139
      %v5166 = vpack.c.bf16 %v5142, %v5141
      %v5167 = vpack.c.bf16 %v5144, %v5143
      %v5168 = vpack.c.bf16 %v5146, %v5145
      %v5169 = vpack.c.bf16 %v5148, %v5147
      %v5170 = vpack.c.bf16 %v5150, %v5149
      %v5171 = vpack.c.bf16 %v5152, %v5151
      %v5172 = vpack.c.bf16 %v5154, %v5153
      %v5173 = vpack.c.bf16 %v5156, %v5155
      %v5174 = vpack.c.bf16 %v5158, %v5157
      %v5191 = vunpack.c.l.b16 %v5159
      %v5192 = vunpack.c.h.b16 %v5159
      %v5193 = vunpack.c.l.b16 %v5160
      %v5194 = vunpack.c.h.b16 %v5160
      %v5195 = vunpack.c.l.b16 %v5161
      %v5196 = vunpack.c.h.b16 %v5161
      %v5197 = vunpack.c.l.b16 %v5162
      %v5198 = vunpack.c.h.b16 %v5162
      %v5199 = vunpack.c.l.b16 %v5163
      %v5200 = vunpack.c.h.b16 %v5163
      %v5201 = vunpack.c.l.b16 %v5164
      %v5202 = vunpack.c.h.b16 %v5164
      %v5203 = vunpack.c.l.b16 %v5165
      %v5204 = vunpack.c.h.b16 %v5165
      %v5205 = vunpack.c.l.b16 %v5166
      %v5206 = vunpack.c.h.b16 %v5166
      %v5207 = vunpack.c.l.b16 %v5167
      %v5208 = vunpack.c.h.b16 %v5167
      %v5209 = vunpack.c.l.b16 %v5168
      %v5210 = vunpack.c.h.b16 %v5168
      %v5211 = vunpack.c.l.b16 %v5169
      %v5212 = vunpack.c.h.b16 %v5169
      %v5213 = vunpack.c.l.b16 %v5170
      %v5214 = vunpack.c.h.b16 %v5170
      %v5215 = vunpack.c.l.b16 %v5171
      %v5216 = vunpack.c.h.b16 %v5171
      %v5217 = vunpack.c.l.b16 %v5172
      %v5218 = vunpack.c.h.b16 %v5172
      %v5219 = vunpack.c.l.b16 %v5173
      %v5220 = vunpack.c.h.b16 %v5173
      %v5221 = vunpack.c.l.b16 %v5174
      %v5222 = vunpack.c.h.b16 %v5174
      %v5223 = vpack.c.b16 %v5191, %v5191
      %v5224 = vpack.c.b16 %v5192, %v5192
      %v5225 = vpack.c.b16 %v5193, %v5193
      %v5226 = vpack.c.b16 %v5194, %v5194
      %v5227 = vpack.c.b16 %v5195, %v5195
      %v5228 = vpack.c.b16 %v5196, %v5196
      %v5229 = vpack.c.b16 %v5197, %v5197
      %v5230 = vpack.c.b16 %v5198, %v5198
      %v5231 = vpack.c.b16 %v5199, %v5199
      %v5232 = vpack.c.b16 %v5200, %v5200
      %v5233 = vpack.c.b16 %v5201, %v5201
      %v5234 = vpack.c.b16 %v5202, %v5202
      %v5235 = vpack.c.b16 %v5203, %v5203
      %v5236 = vpack.c.b16 %v5204, %v5204
      %v5237 = vpack.c.b16 %v5205, %v5205
      %v5238 = vpack.c.b16 %v5206, %v5206
      %v5239 = vpack.c.b16 %v5207, %v5207
      %v5240 = vpack.c.b16 %v5208, %v5208
      %v5241 = vpack.c.b16 %v5209, %v5209
      %v5242 = vpack.c.b16 %v5210, %v5210
      %v5243 = vpack.c.b16 %v5211, %v5211
      %v5244 = vpack.c.b16 %v5212, %v5212
      %v5245 = vpack.c.b16 %v5213, %v5213
      %v5246 = vpack.c.b16 %v5214, %v5214
      %v5247 = vpack.c.b16 %v5215, %v5215
      %v5248 = vpack.c.b16 %v5216, %v5216
      %v5249 = vpack.c.b16 %v5217, %v5217
      %v5250 = vpack.c.b16 %v5218, %v5218
      %v5251 = vpack.c.b16 %v5219, %v5219
      %v5252 = vpack.c.b16 %v5220, %v5220
      %v5253 = vpack.c.b16 %v5221, %v5221
      %v5254 = vpack.c.b16 %v5222, %v5222
      %s5287 = smul.addr %s349, 4
      %s5288 = scalar_lea.vmem %s224, %s5287
      %5289 = vst [vmem:[%s5288] sm:$0xf] %v5223
      %5290 = vst [vmem:[%s5288 + $0x4] sm:$0xf] %v5224
      %5291 = vst [vmem:[%s5288 + $0x8] sm:$0xf] %v5225
      %5292 = vst [vmem:[%s5288 + $0xc] sm:$0xf] %v5226
      %5293 = vst [vmem:[%s5288 + $0x10] sm:$0xf] %v5227
      %5294 = vst [vmem:[%s5288 + $0x14] sm:$0xf] %v5228
      %5295 = vst [vmem:[%s5288 + $0x18] sm:$0xf] %v5229
      %5296 = vst [vmem:[%s5288 + $0x1c] sm:$0xf] %v5230
      %5297 = vst [vmem:[%s5288 + $0x20] sm:$0xf] %v5231
      %5298 = vst [vmem:[%s5288 + $0x24] sm:$0xf] %v5232
      %5299 = vst [vmem:[%s5288 + $0x28] sm:$0xf] %v5233
      %5300 = vst [vmem:[%s5288 + $0x2c] sm:$0xf] %v5234
      %5301 = vst [vmem:[%s5288 + $0x30] sm:$0xf] %v5235
      %5302 = vst [vmem:[%s5288 + $0x34] sm:$0xf] %v5236
      %5303 = vst [vmem:[%s5288 + $0x38] sm:$0xf] %v5237
      %5304 = vst [vmem:[%s5288 + $0x3c] sm:$0xf] %v5238
      %5305 = vst [vmem:[%s5288 + $0x40] sm:$0xf] %v5239
      %5306 = vst [vmem:[%s5288 + $0x44] sm:$0xf] %v5240
      %5307 = vst [vmem:[%s5288 + $0x48] sm:$0xf] %v5241
      %5308 = vst [vmem:[%s5288 + $0x4c] sm:$0xf] %v5242
      %5309 = vst [vmem:[%s5288 + $0x50] sm:$0xf] %v5243
      %5310 = vst [vmem:[%s5288 + $0x54] sm:$0xf] %v5244
      %5311 = vst [vmem:[%s5288 + $0x58] sm:$0xf] %v5245
      %5312 = vst [vmem:[%s5288 + $0x5c] sm:$0xf] %v5246
      %5313 = vst [vmem:[%s5288 + $0x60] sm:$0xf] %v5247
      %5314 = vst [vmem:[%s5288 + $0x64] sm:$0xf] %v5248
      %5315 = vst [vmem:[%s5288 + $0x68] sm:$0xf] %v5249
      %5316 = vst [vmem:[%s5288 + $0x6c] sm:$0xf] %v5250
      %5317 = vst [vmem:[%s5288 + $0x70] sm:$0xf] %v5251
      %5318 = vst [vmem:[%s5288 + $0x74] sm:$0xf] %v5252
      %5319 = vst [vmem:[%s5288 + $0x78] sm:$0xf] %v5253
      %5320 = vst [vmem:[%s5288 + $0x7c] sm:$0xf] %v5254
      %p5321 = scmp.lt.s32.totalorder %s16, 1
      %s5322 = scalar_select %p5321, %s16, 1
      %s5323 = smul.addr %s5322, 32
      %s5324 = smul.addr %s5323, 4
      %s5325 = scalar_lea.vmem %s5, %s5324
      // Predicated region
      $region41: #{double_conv_pallas.1} parent=39 // pred_check
        %p5326 = pneg %p144
      $region42: #{double_conv_pallas.1} parent=39 // pred_check_branch
        %5328 = sbr.rel (%p5326) target = $region44
      $region43: #{double_conv_pallas.1} parent=39 // pred_region
        _
      $region44: #{double_conv_pallas.1} parent=39 // pred_fallthru
        _
    $region40: #{double_conv_pallas.1} parent=5 // pred_fallthru
      _
    %p5329 = scmp.le.s32.totalorder 2, %s11
    // Predicated region
    $region45: #{double_conv_pallas.1} parent=5 // pred_check
      %p5330 = pneg %p5329
    $region46: #{double_conv_pallas.1} parent=5 // pred_check_branch
      %5332 = sbr.rel (%p5330) target = $region48
    $region47: #{double_conv_pallas.1} parent=5 // pred_region
      %s5333 = ssub.s32 %s11, 2
      // Predicated region
      $region49: #{double_conv_pallas.1} parent=47 // pred_check
        %p5334 = pneg %p150
      $region50: #{double_conv_pallas.1} parent=47 // pred_check_branch
        %5336 = sbr.rel (%p5334) target = $region52
      $region51: #{double_conv_pallas.1} parent=47 // pred_region
        %p5337 = scmp.lt.s32.totalorder %s17, 1
        %s5338 = scalar_select %p5337, %s17, 1
        %s5339 = smul.addr %s5338, 32
        %s5340 = smul.addr %s5339, 4
        %s5341 = scalar_lea.vmem %s5, %s5340
      $region52: #{double_conv_pallas.1} parent=47 // pred_fallthru
        _
    $region48: #{double_conv_pallas.1} parent=5 // pred_fallthru
      _
  $region6: #{double_conv_pallas.1} parent=0 // loop_footer
    %s15 = sadd.s32 1, %s11
  $region7: #{double_conv_pallas.1} parent=0 // loop_footer_branch
    %10 = sbr.rel target = $region3
  $region8: #{double_conv_pallas.1} parent=0 // loop_exit
    _

</llo_original>
